<compile_context>
chip_gen: v5e
topology: v5e:2x2
jax: 0.10.0
libtpu: 0.0.40
codegen_flags: <defaults>
</compile_context>

<pallas_src>
import functools

import jax
import jax.numpy as jnp
from jax import lax
from jax.experimental import pallas as pl
from jax.experimental.pallas import tpu as pltpu


# ----------------------------- fused kernel ---------------------------------

def _prelu(x, a):
    return jnp.where(x >= 0.0, x, a * x)


def _layer_norm(x, g, b, eps):
    mu = jnp.mean(x, axis=-1, keepdims=True)
    c = x - mu
    var = jnp.mean(c * c, axis=-1, keepdims=True)
    return c * lax.rsqrt(var + eps) * g + b


def _refinenet_kernel(
    alphas_ref,                       # SMEM [4 + n_layers]: enc1,enc2,rel1,dec1,ff1_l...
    x_ref,                            # [T, d_in]           (this batch element)
    lrel_ref,                         # [T, T, d_head]      rel-pos table (shared)
    enc1_w_ref, enc1_b_ref,           # [d_in, dm], [1, dm]
    enc2_w_ref, enc2_b_ref,           # [dm, dm],  [1, dm]
    attn_ln_g_ref, attn_ln_b_ref,     # [L, 1, dm]
    wq_ref, bq_ref, wk_ref, bk_ref,   # [L, dm, dm], [L, 1, dm]
    wv_ref, bv_ref, wo_ref, bo_ref,
    ff_ln_g_ref, ff_ln_b_ref,         # [L, 1, dm]
    ff1_w_ref, ff1_b_ref,             # [L, dm, dff], [L, 1, dff]
    ff2_w_ref, ff2_b_ref,             # [L, dff, dm], [L, 1, dm]
    fin_g_ref, fin_b_ref,             # [1, dm]
    dec1_w_ref, dec1_b_ref,           # [dm, dm], [1, dm]
    dec2_w_ref, dec2_b_ref,           # [dm, d_out], [1, d_out]
    o_ref,                            # [T, d_out]
    *, n_layers, n_heads, d_head, d_motion, pre_layernorm, eps,
):
    f32 = jnp.float32
    T = x_ref.shape[0]

    # ---------------- motion encoder ----------------
    x = x_ref[...]
    x = _prelu(jnp.dot(x, enc1_w_ref[...], preferred_element_type=f32)
               + enc1_b_ref[...], alphas_ref[0])
    x = _prelu(jnp.dot(x, enc2_w_ref[...], preferred_element_type=f32)
               + enc2_b_ref[...], alphas_ref[1])

    lrel = lrel_ref[...]                       # [T, T, dh]
    scale = 1.0 / float(d_head) ** 0.5

    for l in range(n_layers):                  # static unroll (n_layers = 2)
        # ------- multi-head self-attention with relative position bias -----
        residual = x
        xa = _layer_norm(x, attn_ln_g_ref[l], attn_ln_b_ref[l], eps) \
            if pre_layernorm else x
        q = jnp.dot(xa, wq_ref[l], preferred_element_type=f32) + bq_ref[l]
        k = jnp.dot(xa, wk_ref[l], preferred_element_type=f32) + bk_ref[l]
        v = jnp.dot(xa, wv_ref[l], preferred_element_type=f32) + bv_ref[l]
        q = q * scale                          # fold dh-scale into Q once

        wol = wo_ref[l]                        # [dm, dm]
        attn = jnp.zeros((T, wol.shape[1]), f32)
        for h in range(n_heads):               # static unroll (n_heads = 4)
            lo, hi = h * d_head, (h + 1) * d_head
            qh, kh, vh = q[:, lo:hi], k[:, lo:hi], v[:, lo:hi]      # [T, dh]
            s = jnp.dot(qh, kh.T, preferred_element_type=f32)       # [T, T]
            # rel[t, s] = qh[t] . L[s - t + T - 1]   (tiny VPU/XLU reduce)
            rel = jnp.sum(qh[:, None, :] * lrel, axis=-1)           # [T, T]
            s = s + rel
            m = jnp.max(s, axis=-1, keepdims=True)
            p = jnp.exp(s - m)
            p = p / jnp.sum(p, axis=-1, keepdims=True)
            head = jnp.dot(p, vh, preferred_element_type=f32)       # [T, dh]
            # concat(heads) @ Wo  ==  sum_h head_h @ Wo[rows of head h]
            attn = attn + jnp.dot(head, wol[lo:hi, :],
                                  preferred_element_type=f32)
        x = attn + bo_ref[l] + residual
        if not pre_layernorm:
            x = _layer_norm(x, attn_ln_g_ref[l], attn_ln_b_ref[l], eps)

        # ------- position-wise feed-forward -------
        residual = x
        xf = _layer_norm(x, ff_ln_g_ref[l], ff_ln_b_ref[l], eps) \
            if pre_layernorm else x
        hdd = _prelu(jnp.dot(xf, ff1_w_ref[l], preferred_element_type=f32)
                     + ff1_b_ref[l], alphas_ref[4 + l])
        hdd = jnp.dot(hdd, ff2_w_ref[l], preferred_element_type=f32) + ff2_b_ref[l]
        x = hdd + residual
        if not pre_layernorm:
            x = _layer_norm(x, ff_ln_g_ref[l], ff_ln_b_ref[l], eps)

    if pre_layernorm:
        x = _layer_norm(x, fin_g_ref[...], fin_b_ref[...], eps)

    # ---------------- decoder + contact-sigmoid epilogue ----------------
    y = _prelu(jnp.dot(x, dec1_w_ref[...], preferred_element_type=f32)
               + dec1_b_ref[...], alphas_ref[3])
    y = jnp.dot(y, dec2_w_ref[...], preferred_element_type=f32) + dec2_b_ref[...]
    col = lax.broadcasted_iota(jnp.int32, y.shape, 1)
    y = jnp.where(col >= d_motion, jax.nn.sigmoid(y), y)   # sigmoid contact cols
    o_ref[...] = y


_WEIGHT_ORDER = (
    "enc1_w", "enc1_b", "enc2_w", "enc2_b",
    "attn_ln_g", "attn_ln_b",
    "wq", "bq", "wk", "bk", "wv", "bv", "wo", "bo",
    "ff_ln_g", "ff_ln_b",
    "ff1_w", "ff1_b", "ff2_w", "ff2_b",
    "final_ln_g", "final_ln_b",
    "dec1_w", "dec1_b", "dec2_w", "dec2_b",
)


def fused_refinenet(params, x_in, lrel, *, B, T, cfg, d_out, d_motion):
    dm = cfg.d_model
    dh = dm // cfg.n_heads
    d_in = x_in.shape[-1]

    def const_spec(arr):
        nd = arr.ndim
        return pl.BlockSpec(arr.shape, lambda b, _nd=nd: (0,) * _nd)

    weights = [params[name] for name in _WEIGHT_ORDER]

    kernel = functools.partial(
        _refinenet_kernel,
        n_layers=cfg.n_layers, n_heads=cfg.n_heads, d_head=dh,
        d_motion=d_motion, pre_layernorm=cfg.pre_layernorm, eps=1e-5)

    in_specs = (
        [pl.BlockSpec(memory_space=pltpu.MemorySpace.SMEM),       # PReLU alphas
         pl.BlockSpec((T, d_in), lambda b: (b, 0)),               # x (per batch)
         pl.BlockSpec((T, T, dh), lambda b: (0, 0, 0))]           # rel-pos table
        + [const_spec(w) for w in weights]                        # all weights
    )

    return pl.pallas_call(
        kernel,
        out_shape=jax.ShapeDtypeStruct((B * T, d_out), jnp.float32),
        grid=(B,),
        in_specs=in_specs,
        out_specs=pl.BlockSpec((T, d_out), lambda b: (b, 0)),
        compiler_params=pltpu.CompilerParams(
            dimension_semantics=("parallel",)),   # v7x: one batch elem per core
    )(params["alphas"], x_in, lrel, *weights)


# ------------------------------ model (glue) --------------------------------

class Config:
    d_model = 32
    n_layers = 2
    n_heads = 4
    d_ff = 64
    pre_layernorm = True
    dropout = 0.0
    context_frames = 4
    max_transition = 8


def init_params(key, d_motion, d_traj, d_contact, cfg):
    dm, H = cfg.d_model, cfg.n_heads
    dh, dff, nl = dm // H, cfg.d_ff, cfg.n_layers
    d_in = d_motion + d_traj + 1
    d_out = d_motion + d_contact

    def lin(k, fan_in, fan_out):
        kw, kb = jax.random.split(k)
        bound = float(fan_in) ** -0.5
        w = jax.random.uniform(kw, (fan_in, fan_out), jnp.float32, -bound, bound)
        b = jax.random.uniform(kb, (1, fan_out), jnp.float32, -bound, bound)
        return w, b

    keys = iter(jax.random.split(key, 6 + 6 * nl))
    p = {}
    p["enc1_w"], p["enc1_b"] = lin(next(keys), d_in, dm)
    p["enc2_w"], p["enc2_b"] = lin(next(keys), dm, dm)
    p["rel1_w"], p["rel1_b"] = lin(next(keys), 1, dm)
    p["rel2_w"], p["rel2_b"] = lin(next(keys), dm, dh)
    p["dec1_w"], p["dec1_b"] = lin(next(keys), dm, dm)
    p["dec2_w"], p["dec2_b"] = lin(next(keys), dm, d_out)
    p["final_ln_g"] = jnp.ones((1, dm), jnp.float32)
    p["final_ln_b"] = jnp.zeros((1, dm), jnp.float32)

    wq, bq, wk, bk, wv, bv, wo, bo = ([] for _ in range(8))
    f1w, f1b, f2w, f2b = ([] for _ in range(4))
    for _ in range(nl):
        w, b = lin(next(keys), dm, H * dh); wq.append(w); bq.append(b)
        w, b = lin(next(keys), dm, H * dh); wk.append(w); bk.append(b)
        w, b = lin(next(keys), dm, H * dh); wv.append(w); bv.append(b)
        w, b = lin(next(keys), H * dh, dm); wo.append(w); bo.append(b)
        w, b = lin(next(keys), dm, dff);    f1w.append(w); f1b.append(b)
        w, b = lin(next(keys), dff, dm);    f2w.append(w); f2b.append(b)
    p["wq"], p["bq"] = jnp.stack(wq), jnp.stack(bq)
    p["wk"], p["bk"] = jnp.stack(wk), jnp.stack(bk)
    p["wv"], p["bv"] = jnp.stack(wv), jnp.stack(bv)
    p["wo"], p["bo"] = jnp.stack(wo), jnp.stack(bo)
    p["ff1_w"], p["ff1_b"] = jnp.stack(f1w), jnp.stack(f1b)
    p["ff2_w"], p["ff2_b"] = jnp.stack(f2w), jnp.stack(f2b)
    p["attn_ln_g"] = jnp.ones((nl, 1, dm), jnp.float32)
    p["attn_ln_b"] = jnp.zeros((nl, 1, dm), jnp.float32)
    p["ff_ln_g"] = jnp.ones((nl, 1, dm), jnp.float32)
    p["ff_ln_b"] = jnp.zeros((nl, 1, dm), jnp.float32)
    # PReLU slopes (PyTorch default 0.25): [enc1, enc2, rel1, dec1, ff1_0..ff1_{L-1}]
    p["alphas"] = jnp.full((4 + nl,), 0.25, jnp.float32)
    return p


def refinenet_forward(params, interp_motion, traj, keyframes, cfg,
                      d_motion, d_contact):
    B, T, _ = interp_motion.shape
    ctx = cfg.context_frames
    dh = cfg.d_model // cfg.n_heads
    original_x = interp_motion

    # keyframe mask (tiny scatter — stays in XLA)
    mask = jnp.zeros((B, T, 1), jnp.float32)
    mask = mask.at[:, :ctx].set(1.0)
    mask = mask.at[:, -1].set(1.0)
    if keyframes is not None:
        mask = mask.at[:, jnp.asarray(keyframes)].set(1.0)
    x_in = jnp.concatenate([interp_motion, traj, mask], axis=-1).reshape(B * T, -1)

    # relative-position encoder (degenerate K=1 linear + gather — plain JAX, once)
    a_rel = params["alphas"][2]
    lut = jnp.arange(-T + 1, T, dtype=jnp.float32).reshape(2 * T - 1, 1)
    h = lut * params["rel1_w"] + params["rel1_b"]         # [2T-1, dm]
    h = jnp.where(h >= 0.0, h, a_rel * h)
    L = h @ params["rel2_w"] + params["rel2_b"]           # [2T-1, dh]
    idx = jnp.arange(T)[None, :] - jnp.arange(T)[:, None] + (T - 1)
    lrel = L[idx]                                         # [T, T, dh]

    # single fused Pallas kernel for the whole network
    y = fused_refinenet(params, x_in, lrel, B=B, T=T, cfg=cfg,
                        d_out=d_motion + d_contact, d_motion=d_motion)
    y = y.reshape(B, T, d_motion + d_contact)

    motion = y[..., :d_motion]
    contact = y[..., d_motion:]     # sigmoid already applied in the kernel
    motion = motion.at[:, :ctx].set(original_x[:, :ctx])
    motion = motion.at[:, -1].set(original_x[:, -1])
    return motion, contact


if __name__ == "__main__":
    cfg = Config()
    d_motion, d_traj, d_contact = 12, 4, 4
    B, T = 2, 16

    key = jax.random.PRNGKey(0)
    k1, k2, k3 = jax.random.split(key, 3)
    interp_motion = jax.random.normal(k1, (B, T, d_motion), jnp.float32)
    traj = jax.random.normal(k2, (B, T, d_traj), jnp.float32)
    keyframes = (cfg.context_frames - 1, 9, T - 1)

    params = init_params(k3, d_motion, d_traj, d_contact, cfg)

    @functools.partial(jax.jit, static_argnames=("keyframes",))
    def fwd(params, interp_motion, traj, keyframes):
        return refinenet_forward(params, interp_motion, traj, keyframes,
                                 cfg, d_motion, d_contact)

    motion, contact = fwd(params, interp_motion, traj, keyframes=keyframes)
    jax.block_until_ready((motion, contact))
    assert motion.shape == (B, T, d_motion)
    assert contact.shape == (B, T, d_contact)
    assert bool(jnp.all(jnp.isfinite(motion))) and bool(jnp.all(jnp.isfinite(contact)))
    print("KERNEL_OK")
</pallas_src>

<mosaic_0001>
module attributes {stable_mosaic.version = 11 : i64} {
  func.func @_refinenet_kernel(%arg0: i32, %arg1: memref<6xf32, #tpu.memory_space<smem>>, %arg2: memref<16x17xf32, #tpu.memory_space<vmem>>, %arg3: memref<16x16x8xf32, #tpu.memory_space<vmem>>, %arg4: memref<17x32xf32, #tpu.memory_space<vmem>>, %arg5: memref<1x32xf32, #tpu.memory_space<vmem>>, %arg6: memref<32x32xf32, #tpu.memory_space<vmem>>, %arg7: memref<1x32xf32, #tpu.memory_space<vmem>>, %arg8: memref<2x1x32xf32, #tpu.memory_space<vmem>>, %arg9: memref<2x1x32xf32, #tpu.memory_space<vmem>>, %arg10: memref<2x32x32xf32, #tpu.memory_space<vmem>>, %arg11: memref<2x1x32xf32, #tpu.memory_space<vmem>>, %arg12: memref<2x32x32xf32, #tpu.memory_space<vmem>>, %arg13: memref<2x1x32xf32, #tpu.memory_space<vmem>>, %arg14: memref<2x32x32xf32, #tpu.memory_space<vmem>>, %arg15: memref<2x1x32xf32, #tpu.memory_space<vmem>>, %arg16: memref<2x32x32xf32, #tpu.memory_space<vmem>>, %arg17: memref<2x1x32xf32, #tpu.memory_space<vmem>>, %arg18: memref<2x1x32xf32, #tpu.memory_space<vmem>>, %arg19: memref<2x1x32xf32, #tpu.memory_space<vmem>>, %arg20: memref<2x32x64xf32, #tpu.memory_space<vmem>>, %arg21: memref<2x1x64xf32, #tpu.memory_space<vmem>>, %arg22: memref<2x64x32xf32, #tpu.memory_space<vmem>>, %arg23: memref<2x1x32xf32, #tpu.memory_space<vmem>>, %arg24: memref<1x32xf32, #tpu.memory_space<vmem>>, %arg25: memref<1x32xf32, #tpu.memory_space<vmem>>, %arg26: memref<32x32xf32, #tpu.memory_space<vmem>>, %arg27: memref<1x32xf32, #tpu.memory_space<vmem>>, %arg28: memref<32x16xf32, #tpu.memory_space<vmem>>, %arg29: memref<1x16xf32, #tpu.memory_space<vmem>>, %arg30: memref<16x16xf32, #tpu.memory_space<vmem>>) attributes {dimension_semantics = [#tpu.dimension_semantics<parallel>], iteration_bounds = array<i64: 2>, scalar_prefetch = 0 : i64, scratch_operands = 0 : i64, tpu.core_type = #tpu.core_type<tc>, window_params = [{transform_indices = @transform_0, window_bounds = array<i64: 6>}, {transform_indices = @transform_1, window_bounds = array<i64: 16, 17>}, {pipeline_mode = #tpu.pipeline_mode<synchronous>, transform_indices = @transform_2, window_bounds = array<i64: 16, 16, 8>}, {pipeline_mode = #tpu.pipeline_mode<synchronous>, transform_indices = @transform_3, window_bounds = array<i64: 17, 32>}, {pipeline_mode = #tpu.pipeline_mode<synchronous>, transform_indices = @transform_4, window_bounds = array<i64: 1, 32>}, {pipeline_mode = #tpu.pipeline_mode<synchronous>, transform_indices = @transform_5, window_bounds = array<i64: 32, 32>}, {pipeline_mode = #tpu.pipeline_mode<synchronous>, transform_indices = @transform_6, window_bounds = array<i64: 1, 32>}, {pipeline_mode = #tpu.pipeline_mode<synchronous>, transform_indices = @transform_7, window_bounds = array<i64: 2, 1, 32>}, {pipeline_mode = #tpu.pipeline_mode<synchronous>, transform_indices = @transform_8, window_bounds = array<i64: 2, 1, 32>}, {pipeline_mode = #tpu.pipeline_mode<synchronous>, transform_indices = @transform_9, window_bounds = array<i64: 2, 32, 32>}, {pipeline_mode = #tpu.pipeline_mode<synchronous>, transform_indices = @transform_10, window_bounds = array<i64: 2, 1, 32>}, {pipeline_mode = #tpu.pipeline_mode<synchronous>, transform_indices = @transform_11, window_bounds = array<i64: 2, 32, 32>}, {pipeline_mode = #tpu.pipeline_mode<synchronous>, transform_indices = @transform_12, window_bounds = array<i64: 2, 1, 32>}, {pipeline_mode = #tpu.pipeline_mode<synchronous>, transform_indices = @transform_13, window_bounds = array<i64: 2, 32, 32>}, {pipeline_mode = #tpu.pipeline_mode<synchronous>, transform_indices = @transform_14, window_bounds = array<i64: 2, 1, 32>}, {pipeline_mode = #tpu.pipeline_mode<synchronous>, transform_indices = @transform_15, window_bounds = array<i64: 2, 32, 32>}, {pipeline_mode = #tpu.pipeline_mode<synchronous>, transform_indices = @transform_16, window_bounds = array<i64: 2, 1, 32>}, {pipeline_mode = #tpu.pipeline_mode<synchronous>, transform_indices = @transform_17, window_bounds = array<i64: 2, 1, 32>}, {pipeline_mode = #tpu.pipeline_mode<synchronous>, transform_indices = @transform_18, window_bounds = array<i64: 2, 1, 32>}, {pipeline_mode = #tpu.pipeline_mode<synchronous>, transform_indices = @transform_19, window_bounds = array<i64: 2, 32, 64>}, {pipeline_mode = #tpu.pipeline_mode<synchronous>, transform_indices = @transform_20, window_bounds = array<i64: 2, 1, 64>}, {pipeline_mode = #tpu.pipeline_mode<synchronous>, transform_indices = @transform_21, window_bounds = array<i64: 2, 64, 32>}, {pipeline_mode = #tpu.pipeline_mode<synchronous>, transform_indices = @transform_22, window_bounds = array<i64: 2, 1, 32>}, {pipeline_mode = #tpu.pipeline_mode<synchronous>, transform_indices = @transform_23, window_bounds = array<i64: 1, 32>}, {pipeline_mode = #tpu.pipeline_mode<synchronous>, transform_indices = @transform_24, window_bounds = array<i64: 1, 32>}, {pipeline_mode = #tpu.pipeline_mode<synchronous>, transform_indices = @transform_25, window_bounds = array<i64: 32, 32>}, {pipeline_mode = #tpu.pipeline_mode<synchronous>, transform_indices = @transform_26, window_bounds = array<i64: 1, 32>}, {pipeline_mode = #tpu.pipeline_mode<synchronous>, transform_indices = @transform_27, window_bounds = array<i64: 32, 16>}, {pipeline_mode = #tpu.pipeline_mode<synchronous>, transform_indices = @transform_28, window_bounds = array<i64: 1, 16>}, {transform_indices = @transform_29, window_bounds = array<i64: 16, 16>}]} {
    %c0 = arith.constant 0 : index
    %c0_0 = arith.constant 0 : index
    %0 = vector.load %arg2[%c0, %c0_0] : memref<16x17xf32, #tpu.memory_space<vmem>>, vector<16x17xf32>
    %c0_1 = arith.constant 0 : index
    %c0_2 = arith.constant 0 : index
    %1 = vector.load %arg4[%c0_1, %c0_2] : memref<17x32xf32, #tpu.memory_space<vmem>>, vector<17x32xf32>
    %cst = arith.constant dense<0.000000e+00> : vector<16x32xf32>
    %2 = tpu.matmul %0, %1, %cst {dimension_numbers = #tpu.dot_dimension_numbers<[1], [0], [0], [1], [0, 0, 1, 1], [], []>} : vector<16x17xf32>, vector<17x32xf32>, vector<16x32xf32> -> vector<16x32xf32>
    %c0_3 = arith.constant 0 : index
    %c0_4 = arith.constant 0 : index
    %3 = vector.load %arg5[%c0_3, %c0_4] : memref<1x32xf32, #tpu.memory_space<vmem>>, vector<1x32xf32>
    %4 = vector.broadcast %3 : vector<1x32xf32> to vector<16x32xf32>
    %5 = arith.addf %2, %4 : vector<16x32xf32>
    %c0_5 = arith.constant 0 : index
    %6 = memref.load %arg1[%c0_5] : memref<6xf32, #tpu.memory_space<smem>>
    %cst_6 = arith.constant 0.000000e+00 : f32
    %7 = vector.broadcast %cst_6 : f32 to vector<16x32xf32>
    %8 = arith.cmpf oge, %5, %7 : vector<16x32xf32>
    %9 = vector.broadcast %6 : f32 to vector<16x32xf32>
    %10 = arith.mulf %9, %5 : vector<16x32xf32>
    %11 = arith.select %8, %5, %10 : vector<16x32xi1>, vector<16x32xf32>
    %c0_7 = arith.constant 0 : index
    %c0_8 = arith.constant 0 : index
    %12 = vector.load %arg6[%c0_7, %c0_8] : memref<32x32xf32, #tpu.memory_space<vmem>>, vector<32x32xf32>
    %cst_9 = arith.constant dense<0.000000e+00> : vector<16x32xf32>
    %13 = tpu.matmul %11, %12, %cst_9 {dimension_numbers = #tpu.dot_dimension_numbers<[1], [0], [0], [1], [0, 0, 1, 1], [], []>} : vector<16x32xf32>, vector<32x32xf32>, vector<16x32xf32> -> vector<16x32xf32>
    %c0_10 = arith.constant 0 : index
    %c0_11 = arith.constant 0 : index
    %14 = vector.load %arg7[%c0_10, %c0_11] : memref<1x32xf32, #tpu.memory_space<vmem>>, vector<1x32xf32>
    %15 = vector.broadcast %14 : vector<1x32xf32> to vector<16x32xf32>
    %16 = arith.addf %13, %15 : vector<16x32xf32>
    %c1 = arith.constant 1 : index
    %17 = memref.load %arg1[%c1] : memref<6xf32, #tpu.memory_space<smem>>
    %cst_12 = arith.constant 0.000000e+00 : f32
    %18 = vector.broadcast %cst_12 : f32 to vector<16x32xf32>
    %19 = arith.cmpf oge, %16, %18 : vector<16x32xf32>
    %20 = vector.broadcast %17 : f32 to vector<16x32xf32>
    %21 = arith.mulf %20, %16 : vector<16x32xf32>
    %22 = arith.select %19, %16, %21 : vector<16x32xi1>, vector<16x32xf32>
    %c0_13 = arith.constant 0 : index
    %c0_14 = arith.constant 0 : index
    %c0_15 = arith.constant 0 : index
    %23 = vector.load %arg3[%c0_13, %c0_14, %c0_15] : memref<16x16x8xf32, #tpu.memory_space<vmem>>, vector<16x16x8xf32>
    %c0_16 = arith.constant 0 : index
    %c0_17 = arith.constant 0 : index
    %c0_18 = arith.constant 0 : index
    %24 = vector.load %arg8[%c0_16, %c0_17, %c0_18] : memref<2x1x32xf32, #tpu.memory_space<vmem>>, vector<1x1x32xf32>
    %25 = vector.shape_cast %24 : vector<1x1x32xf32> to vector<1x32xf32>
    %c0_19 = arith.constant 0 : index
    %c0_20 = arith.constant 0 : index
    %c0_21 = arith.constant 0 : index
    %26 = vector.load %arg9[%c0_19, %c0_20, %c0_21] : memref<2x1x32xf32, #tpu.memory_space<vmem>>, vector<1x1x32xf32>
    %27 = vector.shape_cast %26 : vector<1x1x32xf32> to vector<1x32xf32>
    %cst_22 = arith.constant dense<0.000000e+00> : vector<16xf32>
    %28 = vector.multi_reduction <add>, %22, %cst_22 [1] : vector<16x32xf32> to vector<16xf32>
    %29 = vector.shape_cast %28 : vector<16xf32> to vector<16x1xf32>
    %cst_23 = arith.constant 3.200000e+01 : f32
    %30 = vector.broadcast %cst_23 : f32 to vector<16x1xf32>
    %31 = arith.divf %29, %30 : vector<16x1xf32>
    %32 = vector.broadcast %31 : vector<16x1xf32> to vector<16x32xf32>
    %33 = arith.subf %22, %32 : vector<16x32xf32>
    %34 = arith.mulf %33, %33 : vector<16x32xf32>
    %cst_24 = arith.constant dense<0.000000e+00> : vector<16xf32>
    %35 = vector.multi_reduction <add>, %34, %cst_24 [1] : vector<16x32xf32> to vector<16xf32>
    %36 = vector.shape_cast %35 : vector<16xf32> to vector<16x1xf32>
    %cst_25 = arith.constant 3.200000e+01 : f32
    %37 = vector.broadcast %cst_25 : f32 to vector<16x1xf32>
    %38 = arith.divf %36, %37 : vector<16x1xf32>
    %cst_26 = arith.constant 9.99999974E-6 : f32
    %39 = vector.broadcast %cst_26 : f32 to vector<16x1xf32>
    %40 = arith.addf %38, %39 : vector<16x1xf32>
    %41 = math.rsqrt %40 : vector<16x1xf32>
    %42 = vector.broadcast %41 : vector<16x1xf32> to vector<16x32xf32>
    %43 = arith.mulf %33, %42 : vector<16x32xf32>
    %44 = vector.broadcast %25 : vector<1x32xf32> to vector<16x32xf32>
    %45 = arith.mulf %43, %44 : vector<16x32xf32>
    %46 = vector.broadcast %27 : vector<1x32xf32> to vector<16x32xf32>
    %47 = arith.addf %45, %46 : vector<16x32xf32>
    %c0_27 = arith.constant 0 : index
    %c0_28 = arith.constant 0 : index
    %c0_29 = arith.constant 0 : index
    %48 = vector.load %arg10[%c0_27, %c0_28, %c0_29] : memref<2x32x32xf32, #tpu.memory_space<vmem>>, vector<1x32x32xf32>
    %49 = vector.shape_cast %48 : vector<1x32x32xf32> to vector<32x32xf32>
    %cst_30 = arith.constant dense<0.000000e+00> : vector<16x32xf32>
    %50 = tpu.matmul %47, %49, %cst_30 {dimension_numbers = #tpu.dot_dimension_numbers<[1], [0], [0], [1], [0, 0, 1, 1], [], []>} : vector<16x32xf32>, vector<32x32xf32>, vector<16x32xf32> -> vector<16x32xf32>
    %c0_31 = arith.constant 0 : index
    %c0_32 = arith.constant 0 : index
    %c0_33 = arith.constant 0 : index
    %51 = vector.load %arg11[%c0_31, %c0_32, %c0_33] : memref<2x1x32xf32, #tpu.memory_space<vmem>>, vector<1x1x32xf32>
    %52 = vector.shape_cast %51 : vector<1x1x32xf32> to vector<1x32xf32>
    %53 = vector.broadcast %52 : vector<1x32xf32> to vector<16x32xf32>
    %54 = arith.addf %50, %53 : vector<16x32xf32>
    %c0_34 = arith.constant 0 : index
    %c0_35 = arith.constant 0 : index
    %c0_36 = arith.constant 0 : index
    %55 = vector.load %arg12[%c0_34, %c0_35, %c0_36] : memref<2x32x32xf32, #tpu.memory_space<vmem>>, vector<1x32x32xf32>
    %56 = vector.shape_cast %55 : vector<1x32x32xf32> to vector<32x32xf32>
    %cst_37 = arith.constant dense<0.000000e+00> : vector<16x32xf32>
    %57 = tpu.matmul %47, %56, %cst_37 {dimension_numbers = #tpu.dot_dimension_numbers<[1], [0], [0], [1], [0, 0, 1, 1], [], []>} : vector<16x32xf32>, vector<32x32xf32>, vector<16x32xf32> -> vector<16x32xf32>
    %c0_38 = arith.constant 0 : index
    %c0_39 = arith.constant 0 : index
    %c0_40 = arith.constant 0 : index
    %58 = vector.load %arg13[%c0_38, %c0_39, %c0_40] : memref<2x1x32xf32, #tpu.memory_space<vmem>>, vector<1x1x32xf32>
    %59 = vector.shape_cast %58 : vector<1x1x32xf32> to vector<1x32xf32>
    %60 = vector.broadcast %59 : vector<1x32xf32> to vector<16x32xf32>
    %61 = arith.addf %57, %60 : vector<16x32xf32>
    %c0_41 = arith.constant 0 : index
    %c0_42 = arith.constant 0 : index
    %c0_43 = arith.constant 0 : index
    %62 = vector.load %arg14[%c0_41, %c0_42, %c0_43] : memref<2x32x32xf32, #tpu.memory_space<vmem>>, vector<1x32x32xf32>
    %63 = vector.shape_cast %62 : vector<1x32x32xf32> to vector<32x32xf32>
    %cst_44 = arith.constant dense<0.000000e+00> : vector<16x32xf32>
    %64 = tpu.matmul %47, %63, %cst_44 {dimension_numbers = #tpu.dot_dimension_numbers<[1], [0], [0], [1], [0, 0, 1, 1], [], []>} : vector<16x32xf32>, vector<32x32xf32>, vector<16x32xf32> -> vector<16x32xf32>
    %c0_45 = arith.constant 0 : index
    %c0_46 = arith.constant 0 : index
    %c0_47 = arith.constant 0 : index
    %65 = vector.load %arg15[%c0_45, %c0_46, %c0_47] : memref<2x1x32xf32, #tpu.memory_space<vmem>>, vector<1x1x32xf32>
    %66 = vector.shape_cast %65 : vector<1x1x32xf32> to vector<1x32xf32>
    %67 = vector.broadcast %66 : vector<1x32xf32> to vector<16x32xf32>
    %68 = arith.addf %64, %67 : vector<16x32xf32>
    %cst_48 = arith.constant 0.353553385 : f32
    %69 = vector.broadcast %cst_48 : f32 to vector<16x32xf32>
    %70 = arith.mulf %54, %69 : vector<16x32xf32>
    %c0_49 = arith.constant 0 : index
    %c0_50 = arith.constant 0 : index
    %c0_51 = arith.constant 0 : index
    %71 = vector.load %arg16[%c0_49, %c0_50, %c0_51] : memref<2x32x32xf32, #tpu.memory_space<vmem>>, vector<1x32x32xf32>
    %72 = vector.shape_cast %71 : vector<1x32x32xf32> to vector<32x32xf32>
    %cst_52 = arith.constant 0.000000e+00 : f32
    %73 = vector.broadcast %cst_52 : f32 to vector<16x32xf32>
    %74 = vector.extract_strided_slice %70 {offsets = [0, 0], sizes = [16, 8], strides = [1, 1]} : vector<16x32xf32> to vector<16x8xf32>
    %75 = vector.extract_strided_slice %61 {offsets = [0, 0], sizes = [16, 8], strides = [1, 1]} : vector<16x32xf32> to vector<16x8xf32>
    %76 = vector.extract_strided_slice %68 {offsets = [0, 0], sizes = [16, 8], strides = [1, 1]} : vector<16x32xf32> to vector<16x8xf32>
    %77 = tpu.transpose %75, [1, 0] : vector<16x8xf32> -> vector<8x16xf32>
    %cst_53 = arith.constant dense<0.000000e+00> : vector<16x16xf32>
    %78 = tpu.matmul %74, %77, %cst_53 {dimension_numbers = #tpu.dot_dimension_numbers<[1], [0], [0], [1], [0, 0, 1, 1], [], []>} : vector<16x8xf32>, vector<8x16xf32>, vector<16x16xf32> -> vector<16x16xf32>
    %79 = vector.shape_cast %74 : vector<16x8xf32> to vector<16x1x8xf32>
    %80 = vector.broadcast %79 : vector<16x1x8xf32> to vector<16x16x8xf32>
    %81 = arith.mulf %80, %23 : vector<16x16x8xf32>
    %cst_54 = arith.constant dense<0.000000e+00> : vector<16x16xf32>
    %82 = vector.multi_reduction <add>, %81, %cst_54 [2] : vector<16x16x8xf32> to vector<16x16xf32>
    %83 = arith.addf %78, %82 : vector<16x16xf32>
    %cst_55 = arith.constant dense<0xFF800000> : vector<16xf32>
    %84 = vector.multi_reduction <maximumf>, %83, %cst_55 [1] : vector<16x16xf32> to vector<16xf32>
    %85 = vector.shape_cast %84 : vector<16xf32> to vector<16x1xf32>
    %86 = vector.broadcast %85 : vector<16x1xf32> to vector<16x16xf32>
    %87 = arith.subf %83, %86 : vector<16x16xf32>
    %88 = math.exp %87 : vector<16x16xf32>
    %cst_56 = arith.constant dense<0.000000e+00> : vector<16xf32>
    %89 = vector.multi_reduction <add>, %88, %cst_56 [1] : vector<16x16xf32> to vector<16xf32>
    %90 = vector.shape_cast %89 : vector<16xf32> to vector<16x1xf32>
    %91 = vector.broadcast %90 : vector<16x1xf32> to vector<16x16xf32>
    %92 = arith.divf %88, %91 : vector<16x16xf32>
    %cst_57 = arith.constant dense<0.000000e+00> : vector<16x8xf32>
    %93 = tpu.matmul %92, %76, %cst_57 {dimension_numbers = #tpu.dot_dimension_numbers<[1], [0], [0], [1], [0, 0, 1, 1], [], []>} : vector<16x16xf32>, vector<16x8xf32>, vector<16x8xf32> -> vector<16x8xf32>
    %94 = vector.extract_strided_slice %72 {offsets = [0, 0], sizes = [8, 32], strides = [1, 1]} : vector<32x32xf32> to vector<8x32xf32>
    %cst_58 = arith.constant dense<0.000000e+00> : vector<16x32xf32>
    %95 = tpu.matmul %93, %94, %cst_58 {dimension_numbers = #tpu.dot_dimension_numbers<[1], [0], [0], [1], [0, 0, 1, 1], [], []>} : vector<16x8xf32>, vector<8x32xf32>, vector<16x32xf32> -> vector<16x32xf32>
    %96 = arith.addf %73, %95 : vector<16x32xf32>
    %97 = vector.extract_strided_slice %70 {offsets = [0, 8], sizes = [16, 8], strides = [1, 1]} : vector<16x32xf32> to vector<16x8xf32>
    %98 = vector.extract_strided_slice %61 {offsets = [0, 8], sizes = [16, 8], strides = [1, 1]} : vector<16x32xf32> to vector<16x8xf32>
    %99 = vector.extract_strided_slice %68 {offsets = [0, 8], sizes = [16, 8], strides = [1, 1]} : vector<16x32xf32> to vector<16x8xf32>
    %100 = tpu.transpose %98, [1, 0] : vector<16x8xf32> -> vector<8x16xf32>
    %cst_59 = arith.constant dense<0.000000e+00> : vector<16x16xf32>
    %101 = tpu.matmul %97, %100, %cst_59 {dimension_numbers = #tpu.dot_dimension_numbers<[1], [0], [0], [1], [0, 0, 1, 1], [], []>} : vector<16x8xf32>, vector<8x16xf32>, vector<16x16xf32> -> vector<16x16xf32>
    %102 = vector.shape_cast %97 : vector<16x8xf32> to vector<16x1x8xf32>
    %103 = vector.broadcast %102 : vector<16x1x8xf32> to vector<16x16x8xf32>
    %104 = arith.mulf %103, %23 : vector<16x16x8xf32>
    %cst_60 = arith.constant dense<0.000000e+00> : vector<16x16xf32>
    %105 = vector.multi_reduction <add>, %104, %cst_60 [2] : vector<16x16x8xf32> to vector<16x16xf32>
    %106 = arith.addf %101, %105 : vector<16x16xf32>
    %cst_61 = arith.constant dense<0xFF800000> : vector<16xf32>
    %107 = vector.multi_reduction <maximumf>, %106, %cst_61 [1] : vector<16x16xf32> to vector<16xf32>
    %108 = vector.shape_cast %107 : vector<16xf32> to vector<16x1xf32>
    %109 = vector.broadcast %108 : vector<16x1xf32> to vector<16x16xf32>
    %110 = arith.subf %106, %109 : vector<16x16xf32>
    %111 = math.exp %110 : vector<16x16xf32>
    %cst_62 = arith.constant dense<0.000000e+00> : vector<16xf32>
    %112 = vector.multi_reduction <add>, %111, %cst_62 [1] : vector<16x16xf32> to vector<16xf32>
    %113 = vector.shape_cast %112 : vector<16xf32> to vector<16x1xf32>
    %114 = vector.broadcast %113 : vector<16x1xf32> to vector<16x16xf32>
    %115 = arith.divf %111, %114 : vector<16x16xf32>
    %cst_63 = arith.constant dense<0.000000e+00> : vector<16x8xf32>
    %116 = tpu.matmul %115, %99, %cst_63 {dimension_numbers = #tpu.dot_dimension_numbers<[1], [0], [0], [1], [0, 0, 1, 1], [], []>} : vector<16x16xf32>, vector<16x8xf32>, vector<16x8xf32> -> vector<16x8xf32>
    %117 = vector.extract_strided_slice %72 {offsets = [8, 0], sizes = [8, 32], strides = [1, 1]} : vector<32x32xf32> to vector<8x32xf32>
    %cst_64 = arith.constant dense<0.000000e+00> : vector<16x32xf32>
    %118 = tpu.matmul %116, %117, %cst_64 {dimension_numbers = #tpu.dot_dimension_numbers<[1], [0], [0], [1], [0, 0, 1, 1], [], []>} : vector<16x8xf32>, vector<8x32xf32>, vector<16x32xf32> -> vector<16x32xf32>
    %119 = arith.addf %96, %118 : vector<16x32xf32>
    %120 = vector.extract_strided_slice %70 {offsets = [0, 16], sizes = [16, 8], strides = [1, 1]} : vector<16x32xf32> to vector<16x8xf32>
    %121 = vector.extract_strided_slice %61 {offsets = [0, 16], sizes = [16, 8], strides = [1, 1]} : vector<16x32xf32> to vector<16x8xf32>
    %122 = vector.extract_strided_slice %68 {offsets = [0, 16], sizes = [16, 8], strides = [1, 1]} : vector<16x32xf32> to vector<16x8xf32>
    %123 = tpu.transpose %121, [1, 0] : vector<16x8xf32> -> vector<8x16xf32>
    %cst_65 = arith.constant dense<0.000000e+00> : vector<16x16xf32>
    %124 = tpu.matmul %120, %123, %cst_65 {dimension_numbers = #tpu.dot_dimension_numbers<[1], [0], [0], [1], [0, 0, 1, 1], [], []>} : vector<16x8xf32>, vector<8x16xf32>, vector<16x16xf32> -> vector<16x16xf32>
    %125 = vector.shape_cast %120 : vector<16x8xf32> to vector<16x1x8xf32>
    %126 = vector.broadcast %125 : vector<16x1x8xf32> to vector<16x16x8xf32>
    %127 = arith.mulf %126, %23 : vector<16x16x8xf32>
    %cst_66 = arith.constant dense<0.000000e+00> : vector<16x16xf32>
    %128 = vector.multi_reduction <add>, %127, %cst_66 [2] : vector<16x16x8xf32> to vector<16x16xf32>
    %129 = arith.addf %124, %128 : vector<16x16xf32>
    %cst_67 = arith.constant dense<0xFF800000> : vector<16xf32>
    %130 = vector.multi_reduction <maximumf>, %129, %cst_67 [1] : vector<16x16xf32> to vector<16xf32>
    %131 = vector.shape_cast %130 : vector<16xf32> to vector<16x1xf32>
    %132 = vector.broadcast %131 : vector<16x1xf32> to vector<16x16xf32>
    %133 = arith.subf %129, %132 : vector<16x16xf32>
    %134 = math.exp %133 : vector<16x16xf32>
    %cst_68 = arith.constant dense<0.000000e+00> : vector<16xf32>
    %135 = vector.multi_reduction <add>, %134, %cst_68 [1] : vector<16x16xf32> to vector<16xf32>
    %136 = vector.shape_cast %135 : vector<16xf32> to vector<16x1xf32>
    %137 = vector.broadcast %136 : vector<16x1xf32> to vector<16x16xf32>
    %138 = arith.divf %134, %137 : vector<16x16xf32>
    %cst_69 = arith.constant dense<0.000000e+00> : vector<16x8xf32>
    %139 = tpu.matmul %138, %122, %cst_69 {dimension_numbers = #tpu.dot_dimension_numbers<[1], [0], [0], [1], [0, 0, 1, 1], [], []>} : vector<16x16xf32>, vector<16x8xf32>, vector<16x8xf32> -> vector<16x8xf32>
    %140 = vector.extract_strided_slice %72 {offsets = [16, 0], sizes = [8, 32], strides = [1, 1]} : vector<32x32xf32> to vector<8x32xf32>
    %cst_70 = arith.constant dense<0.000000e+00> : vector<16x32xf32>
    %141 = tpu.matmul %139, %140, %cst_70 {dimension_numbers = #tpu.dot_dimension_numbers<[1], [0], [0], [1], [0, 0, 1, 1], [], []>} : vector<16x8xf32>, vector<8x32xf32>, vector<16x32xf32> -> vector<16x32xf32>
    %142 = arith.addf %119, %141 : vector<16x32xf32>
    %143 = vector.extract_strided_slice %70 {offsets = [0, 24], sizes = [16, 8], strides = [1, 1]} : vector<16x32xf32> to vector<16x8xf32>
    %144 = vector.extract_strided_slice %61 {offsets = [0, 24], sizes = [16, 8], strides = [1, 1]} : vector<16x32xf32> to vector<16x8xf32>
    %145 = vector.extract_strided_slice %68 {offsets = [0, 24], sizes = [16, 8], strides = [1, 1]} : vector<16x32xf32> to vector<16x8xf32>
    %146 = tpu.transpose %144, [1, 0] : vector<16x8xf32> -> vector<8x16xf32>
    %cst_71 = arith.constant dense<0.000000e+00> : vector<16x16xf32>
    %147 = tpu.matmul %143, %146, %cst_71 {dimension_numbers = #tpu.dot_dimension_numbers<[1], [0], [0], [1], [0, 0, 1, 1], [], []>} : vector<16x8xf32>, vector<8x16xf32>, vector<16x16xf32> -> vector<16x16xf32>
    %148 = vector.shape_cast %143 : vector<16x8xf32> to vector<16x1x8xf32>
    %149 = vector.broadcast %148 : vector<16x1x8xf32> to vector<16x16x8xf32>
    %150 = arith.mulf %149, %23 : vector<16x16x8xf32>
    %cst_72 = arith.constant dense<0.000000e+00> : vector<16x16xf32>
    %151 = vector.multi_reduction <add>, %150, %cst_72 [2] : vector<16x16x8xf32> to vector<16x16xf32>
    %152 = arith.addf %147, %151 : vector<16x16xf32>
    %cst_73 = arith.constant dense<0xFF800000> : vector<16xf32>
    %153 = vector.multi_reduction <maximumf>, %152, %cst_73 [1] : vector<16x16xf32> to vector<16xf32>
    %154 = vector.shape_cast %153 : vector<16xf32> to vector<16x1xf32>
    %155 = vector.broadcast %154 : vector<16x1xf32> to vector<16x16xf32>
    %156 = arith.subf %152, %155 : vector<16x16xf32>
    %157 = math.exp %156 : vector<16x16xf32>
    %cst_74 = arith.constant dense<0.000000e+00> : vector<16xf32>
    %158 = vector.multi_reduction <add>, %157, %cst_74 [1] : vector<16x16xf32> to vector<16xf32>
    %159 = vector.shape_cast %158 : vector<16xf32> to vector<16x1xf32>
    %160 = vector.broadcast %159 : vector<16x1xf32> to vector<16x16xf32>
    %161 = arith.divf %157, %160 : vector<16x16xf32>
    %cst_75 = arith.constant dense<0.000000e+00> : vector<16x8xf32>
    %162 = tpu.matmul %161, %145, %cst_75 {dimension_numbers = #tpu.dot_dimension_numbers<[1], [0], [0], [1], [0, 0, 1, 1], [], []>} : vector<16x16xf32>, vector<16x8xf32>, vector<16x8xf32> -> vector<16x8xf32>
    %163 = vector.extract_strided_slice %72 {offsets = [24, 0], sizes = [8, 32], strides = [1, 1]} : vector<32x32xf32> to vector<8x32xf32>
    %cst_76 = arith.constant dense<0.000000e+00> : vector<16x32xf32>
    %164 = tpu.matmul %162, %163, %cst_76 {dimension_numbers = #tpu.dot_dimension_numbers<[1], [0], [0], [1], [0, 0, 1, 1], [], []>} : vector<16x8xf32>, vector<8x32xf32>, vector<16x32xf32> -> vector<16x32xf32>
    %165 = arith.addf %142, %164 : vector<16x32xf32>
    %c0_77 = arith.constant 0 : index
    %c0_78 = arith.constant 0 : index
    %c0_79 = arith.constant 0 : index
    %166 = vector.load %arg17[%c0_77, %c0_78, %c0_79] : memref<2x1x32xf32, #tpu.memory_space<vmem>>, vector<1x1x32xf32>
    %167 = vector.shape_cast %166 : vector<1x1x32xf32> to vector<1x32xf32>
    %168 = vector.broadcast %167 : vector<1x32xf32> to vector<16x32xf32>
    %169 = arith.addf %165, %168 : vector<16x32xf32>
    %170 = arith.addf %169, %22 : vector<16x32xf32>
    %c0_80 = arith.constant 0 : index
    %c0_81 = arith.constant 0 : index
    %c0_82 = arith.constant 0 : index
    %171 = vector.load %arg18[%c0_80, %c0_81, %c0_82] : memref<2x1x32xf32, #tpu.memory_space<vmem>>, vector<1x1x32xf32>
    %172 = vector.shape_cast %171 : vector<1x1x32xf32> to vector<1x32xf32>
    %c0_83 = arith.constant 0 : index
    %c0_84 = arith.constant 0 : index
    %c0_85 = arith.constant 0 : index
    %173 = vector.load %arg19[%c0_83, %c0_84, %c0_85] : memref<2x1x32xf32, #tpu.memory_space<vmem>>, vector<1x1x32xf32>
    %174 = vector.shape_cast %173 : vector<1x1x32xf32> to vector<1x32xf32>
    %cst_86 = arith.constant dense<0.000000e+00> : vector<16xf32>
    %175 = vector.multi_reduction <add>, %170, %cst_86 [1] : vector<16x32xf32> to vector<16xf32>
    %176 = vector.shape_cast %175 : vector<16xf32> to vector<16x1xf32>
    %cst_87 = arith.constant 3.200000e+01 : f32
    %177 = vector.broadcast %cst_87 : f32 to vector<16x1xf32>
    %178 = arith.divf %176, %177 : vector<16x1xf32>
    %179 = vector.broadcast %178 : vector<16x1xf32> to vector<16x32xf32>
    %180 = arith.subf %170, %179 : vector<16x32xf32>
    %181 = arith.mulf %180, %180 : vector<16x32xf32>
    %cst_88 = arith.constant dense<0.000000e+00> : vector<16xf32>
    %182 = vector.multi_reduction <add>, %181, %cst_88 [1] : vector<16x32xf32> to vector<16xf32>
    %183 = vector.shape_cast %182 : vector<16xf32> to vector<16x1xf32>
    %cst_89 = arith.constant 3.200000e+01 : f32
    %184 = vector.broadcast %cst_89 : f32 to vector<16x1xf32>
    %185 = arith.divf %183, %184 : vector<16x1xf32>
    %cst_90 = arith.constant 9.99999974E-6 : f32
    %186 = vector.broadcast %cst_90 : f32 to vector<16x1xf32>
    %187 = arith.addf %185, %186 : vector<16x1xf32>
    %188 = math.rsqrt %187 : vector<16x1xf32>
    %189 = vector.broadcast %188 : vector<16x1xf32> to vector<16x32xf32>
    %190 = arith.mulf %180, %189 : vector<16x32xf32>
    %191 = vector.broadcast %172 : vector<1x32xf32> to vector<16x32xf32>
    %192 = arith.mulf %190, %191 : vector<16x32xf32>
    %193 = vector.broadcast %174 : vector<1x32xf32> to vector<16x32xf32>
    %194 = arith.addf %192, %193 : vector<16x32xf32>
    %c0_91 = arith.constant 0 : index
    %c0_92 = arith.constant 0 : index
    %c0_93 = arith.constant 0 : index
    %195 = vector.load %arg20[%c0_91, %c0_92, %c0_93] : memref<2x32x64xf32, #tpu.memory_space<vmem>>, vector<1x32x64xf32>
    %196 = vector.shape_cast %195 : vector<1x32x64xf32> to vector<32x64xf32>
    %cst_94 = arith.constant dense<0.000000e+00> : vector<16x64xf32>
    %197 = tpu.matmul %194, %196, %cst_94 {dimension_numbers = #tpu.dot_dimension_numbers<[1], [0], [0], [1], [0, 0, 1, 1], [], []>} : vector<16x32xf32>, vector<32x64xf32>, vector<16x64xf32> -> vector<16x64xf32>
    %c0_95 = arith.constant 0 : index
    %c0_96 = arith.constant 0 : index
    %c0_97 = arith.constant 0 : index
    %198 = vector.load %arg21[%c0_95, %c0_96, %c0_97] : memref<2x1x64xf32, #tpu.memory_space<vmem>>, vector<1x1x64xf32>
    %199 = vector.shape_cast %198 : vector<1x1x64xf32> to vector<1x64xf32>
    %200 = vector.broadcast %199 : vector<1x64xf32> to vector<16x64xf32>
    %201 = arith.addf %197, %200 : vector<16x64xf32>
    %c4 = arith.constant 4 : index
    %202 = memref.load %arg1[%c4] : memref<6xf32, #tpu.memory_space<smem>>
    %cst_98 = arith.constant 0.000000e+00 : f32
    %203 = vector.broadcast %cst_98 : f32 to vector<16x64xf32>
    %204 = arith.cmpf oge, %201, %203 : vector<16x64xf32>
    %205 = vector.broadcast %202 : f32 to vector<16x64xf32>
    %206 = arith.mulf %205, %201 : vector<16x64xf32>
    %207 = arith.select %204, %201, %206 : vector<16x64xi1>, vector<16x64xf32>
    %c0_99 = arith.constant 0 : index
    %c0_100 = arith.constant 0 : index
    %c0_101 = arith.constant 0 : index
    %208 = vector.load %arg22[%c0_99, %c0_100, %c0_101] : memref<2x64x32xf32, #tpu.memory_space<vmem>>, vector<1x64x32xf32>
    %209 = vector.shape_cast %208 : vector<1x64x32xf32> to vector<64x32xf32>
    %cst_102 = arith.constant dense<0.000000e+00> : vector<16x32xf32>
    %210 = tpu.matmul %207, %209, %cst_102 {dimension_numbers = #tpu.dot_dimension_numbers<[1], [0], [0], [1], [0, 0, 1, 1], [], []>} : vector<16x64xf32>, vector<64x32xf32>, vector<16x32xf32> -> vector<16x32xf32>
    %c0_103 = arith.constant 0 : index
    %c0_104 = arith.constant 0 : index
    %c0_105 = arith.constant 0 : index
    %211 = vector.load %arg23[%c0_103, %c0_104, %c0_105] : memref<2x1x32xf32, #tpu.memory_space<vmem>>, vector<1x1x32xf32>
    %212 = vector.shape_cast %211 : vector<1x1x32xf32> to vector<1x32xf32>
    %213 = vector.broadcast %212 : vector<1x32xf32> to vector<16x32xf32>
    %214 = arith.addf %210, %213 : vector<16x32xf32>
    %215 = arith.addf %214, %170 : vector<16x32xf32>
    %c1_106 = arith.constant 1 : index
    %c0_107 = arith.constant 0 : index
    %c0_108 = arith.constant 0 : index
    %216 = vector.load %arg8[%c1_106, %c0_107, %c0_108] : memref<2x1x32xf32, #tpu.memory_space<vmem>>, vector<1x1x32xf32>
    %217 = vector.shape_cast %216 : vector<1x1x32xf32> to vector<1x32xf32>
    %c1_109 = arith.constant 1 : index
    %c0_110 = arith.constant 0 : index
    %c0_111 = arith.constant 0 : index
    %218 = vector.load %arg9[%c1_109, %c0_110, %c0_111] : memref<2x1x32xf32, #tpu.memory_space<vmem>>, vector<1x1x32xf32>
    %219 = vector.shape_cast %218 : vector<1x1x32xf32> to vector<1x32xf32>
    %cst_112 = arith.constant dense<0.000000e+00> : vector<16xf32>
    %220 = vector.multi_reduction <add>, %215, %cst_112 [1] : vector<16x32xf32> to vector<16xf32>
    %221 = vector.shape_cast %220 : vector<16xf32> to vector<16x1xf32>
    %cst_113 = arith.constant 3.200000e+01 : f32
    %222 = vector.broadcast %cst_113 : f32 to vector<16x1xf32>
    %223 = arith.divf %221, %222 : vector<16x1xf32>
    %224 = vector.broadcast %223 : vector<16x1xf32> to vector<16x32xf32>
    %225 = arith.subf %215, %224 : vector<16x32xf32>
    %226 = arith.mulf %225, %225 : vector<16x32xf32>
    %cst_114 = arith.constant dense<0.000000e+00> : vector<16xf32>
    %227 = vector.multi_reduction <add>, %226, %cst_114 [1] : vector<16x32xf32> to vector<16xf32>
    %228 = vector.shape_cast %227 : vector<16xf32> to vector<16x1xf32>
    %cst_115 = arith.constant 3.200000e+01 : f32
    %229 = vector.broadcast %cst_115 : f32 to vector<16x1xf32>
    %230 = arith.divf %228, %229 : vector<16x1xf32>
    %cst_116 = arith.constant 9.99999974E-6 : f32
    %231 = vector.broadcast %cst_116 : f32 to vector<16x1xf32>
    %232 = arith.addf %230, %231 : vector<16x1xf32>
    %233 = math.rsqrt %232 : vector<16x1xf32>
    %234 = vector.broadcast %233 : vector<16x1xf32> to vector<16x32xf32>
    %235 = arith.mulf %225, %234 : vector<16x32xf32>
    %236 = vector.broadcast %217 : vector<1x32xf32> to vector<16x32xf32>
    %237 = arith.mulf %235, %236 : vector<16x32xf32>
    %238 = vector.broadcast %219 : vector<1x32xf32> to vector<16x32xf32>
    %239 = arith.addf %237, %238 : vector<16x32xf32>
    %c1_117 = arith.constant 1 : index
    %c0_118 = arith.constant 0 : index
    %c0_119 = arith.constant 0 : index
    %240 = vector.load %arg10[%c1_117, %c0_118, %c0_119] : memref<2x32x32xf32, #tpu.memory_space<vmem>>, vector<1x32x32xf32>
    %241 = vector.shape_cast %240 : vector<1x32x32xf32> to vector<32x32xf32>
    %cst_120 = arith.constant dense<0.000000e+00> : vector<16x32xf32>
    %242 = tpu.matmul %239, %241, %cst_120 {dimension_numbers = #tpu.dot_dimension_numbers<[1], [0], [0], [1], [0, 0, 1, 1], [], []>} : vector<16x32xf32>, vector<32x32xf32>, vector<16x32xf32> -> vector<16x32xf32>
    %c1_121 = arith.constant 1 : index
    %c0_122 = arith.constant 0 : index
    %c0_123 = arith.constant 0 : index
    %243 = vector.load %arg11[%c1_121, %c0_122, %c0_123] : memref<2x1x32xf32, #tpu.memory_space<vmem>>, vector<1x1x32xf32>
    %244 = vector.shape_cast %243 : vector<1x1x32xf32> to vector<1x32xf32>
    %245 = vector.broadcast %244 : vector<1x32xf32> to vector<16x32xf32>
    %246 = arith.addf %242, %245 : vector<16x32xf32>
    %c1_124 = arith.constant 1 : index
    %c0_125 = arith.constant 0 : index
    %c0_126 = arith.constant 0 : index
    %247 = vector.load %arg12[%c1_124, %c0_125, %c0_126] : memref<2x32x32xf32, #tpu.memory_space<vmem>>, vector<1x32x32xf32>
    %248 = vector.shape_cast %247 : vector<1x32x32xf32> to vector<32x32xf32>
    %cst_127 = arith.constant dense<0.000000e+00> : vector<16x32xf32>
    %249 = tpu.matmul %239, %248, %cst_127 {dimension_numbers = #tpu.dot_dimension_numbers<[1], [0], [0], [1], [0, 0, 1, 1], [], []>} : vector<16x32xf32>, vector<32x32xf32>, vector<16x32xf32> -> vector<16x32xf32>
    %c1_128 = arith.constant 1 : index
    %c0_129 = arith.constant 0 : index
    %c0_130 = arith.constant 0 : index
    %250 = vector.load %arg13[%c1_128, %c0_129, %c0_130] : memref<2x1x32xf32, #tpu.memory_space<vmem>>, vector<1x1x32xf32>
    %251 = vector.shape_cast %250 : vector<1x1x32xf32> to vector<1x32xf32>
    %252 = vector.broadcast %251 : vector<1x32xf32> to vector<16x32xf32>
    %253 = arith.addf %249, %252 : vector<16x32xf32>
    %c1_131 = arith.constant 1 : index
    %c0_132 = arith.constant 0 : index
    %c0_133 = arith.constant 0 : index
    %254 = vector.load %arg14[%c1_131, %c0_132, %c0_133] : memref<2x32x32xf32, #tpu.memory_space<vmem>>, vector<1x32x32xf32>
    %255 = vector.shape_cast %254 : vector<1x32x32xf32> to vector<32x32xf32>
    %cst_134 = arith.constant dense<0.000000e+00> : vector<16x32xf32>
    %256 = tpu.matmul %239, %255, %cst_134 {dimension_numbers = #tpu.dot_dimension_numbers<[1], [0], [0], [1], [0, 0, 1, 1], [], []>} : vector<16x32xf32>, vector<32x32xf32>, vector<16x32xf32> -> vector<16x32xf32>
    %c1_135 = arith.constant 1 : index
    %c0_136 = arith.constant 0 : index
    %c0_137 = arith.constant 0 : index
    %257 = vector.load %arg15[%c1_135, %c0_136, %c0_137] : memref<2x1x32xf32, #tpu.memory_space<vmem>>, vector<1x1x32xf32>
    %258 = vector.shape_cast %257 : vector<1x1x32xf32> to vector<1x32xf32>
    %259 = vector.broadcast %258 : vector<1x32xf32> to vector<16x32xf32>
    %260 = arith.addf %256, %259 : vector<16x32xf32>
    %cst_138 = arith.constant 0.353553385 : f32
    %261 = vector.broadcast %cst_138 : f32 to vector<16x32xf32>
    %262 = arith.mulf %246, %261 : vector<16x32xf32>
    %c1_139 = arith.constant 1 : index
    %c0_140 = arith.constant 0 : index
    %c0_141 = arith.constant 0 : index
    %263 = vector.load %arg16[%c1_139, %c0_140, %c0_141] : memref<2x32x32xf32, #tpu.memory_space<vmem>>, vector<1x32x32xf32>
    %264 = vector.shape_cast %263 : vector<1x32x32xf32> to vector<32x32xf32>
    %cst_142 = arith.constant 0.000000e+00 : f32
    %265 = vector.broadcast %cst_142 : f32 to vector<16x32xf32>
    %266 = vector.extract_strided_slice %262 {offsets = [0, 0], sizes = [16, 8], strides = [1, 1]} : vector<16x32xf32> to vector<16x8xf32>
    %267 = vector.extract_strided_slice %253 {offsets = [0, 0], sizes = [16, 8], strides = [1, 1]} : vector<16x32xf32> to vector<16x8xf32>
    %268 = vector.extract_strided_slice %260 {offsets = [0, 0], sizes = [16, 8], strides = [1, 1]} : vector<16x32xf32> to vector<16x8xf32>
    %269 = tpu.transpose %267, [1, 0] : vector<16x8xf32> -> vector<8x16xf32>
    %cst_143 = arith.constant dense<0.000000e+00> : vector<16x16xf32>
    %270 = tpu.matmul %266, %269, %cst_143 {dimension_numbers = #tpu.dot_dimension_numbers<[1], [0], [0], [1], [0, 0, 1, 1], [], []>} : vector<16x8xf32>, vector<8x16xf32>, vector<16x16xf32> -> vector<16x16xf32>
    %271 = vector.shape_cast %266 : vector<16x8xf32> to vector<16x1x8xf32>
    %272 = vector.broadcast %271 : vector<16x1x8xf32> to vector<16x16x8xf32>
    %273 = arith.mulf %272, %23 : vector<16x16x8xf32>
    %cst_144 = arith.constant dense<0.000000e+00> : vector<16x16xf32>
    %274 = vector.multi_reduction <add>, %273, %cst_144 [2] : vector<16x16x8xf32> to vector<16x16xf32>
    %275 = arith.addf %270, %274 : vector<16x16xf32>
    %cst_145 = arith.constant dense<0xFF800000> : vector<16xf32>
    %276 = vector.multi_reduction <maximumf>, %275, %cst_145 [1] : vector<16x16xf32> to vector<16xf32>
    %277 = vector.shape_cast %276 : vector<16xf32> to vector<16x1xf32>
    %278 = vector.broadcast %277 : vector<16x1xf32> to vector<16x16xf32>
    %279 = arith.subf %275, %278 : vector<16x16xf32>
    %280 = math.exp %279 : vector<16x16xf32>
    %cst_146 = arith.constant dense<0.000000e+00> : vector<16xf32>
    %281 = vector.multi_reduction <add>, %280, %cst_146 [1] : vector<16x16xf32> to vector<16xf32>
    %282 = vector.shape_cast %281 : vector<16xf32> to vector<16x1xf32>
    %283 = vector.broadcast %282 : vector<16x1xf32> to vector<16x16xf32>
    %284 = arith.divf %280, %283 : vector<16x16xf32>
    %cst_147 = arith.constant dense<0.000000e+00> : vector<16x8xf32>
    %285 = tpu.matmul %284, %268, %cst_147 {dimension_numbers = #tpu.dot_dimension_numbers<[1], [0], [0], [1], [0, 0, 1, 1], [], []>} : vector<16x16xf32>, vector<16x8xf32>, vector<16x8xf32> -> vector<16x8xf32>
    %286 = vector.extract_strided_slice %264 {offsets = [0, 0], sizes = [8, 32], strides = [1, 1]} : vector<32x32xf32> to vector<8x32xf32>
    %cst_148 = arith.constant dense<0.000000e+00> : vector<16x32xf32>
    %287 = tpu.matmul %285, %286, %cst_148 {dimension_numbers = #tpu.dot_dimension_numbers<[1], [0], [0], [1], [0, 0, 1, 1], [], []>} : vector<16x8xf32>, vector<8x32xf32>, vector<16x32xf32> -> vector<16x32xf32>
    %288 = arith.addf %265, %287 : vector<16x32xf32>
    %289 = vector.extract_strided_slice %262 {offsets = [0, 8], sizes = [16, 8], strides = [1, 1]} : vector<16x32xf32> to vector<16x8xf32>
    %290 = vector.extract_strided_slice %253 {offsets = [0, 8], sizes = [16, 8], strides = [1, 1]} : vector<16x32xf32> to vector<16x8xf32>
    %291 = vector.extract_strided_slice %260 {offsets = [0, 8], sizes = [16, 8], strides = [1, 1]} : vector<16x32xf32> to vector<16x8xf32>
    %292 = tpu.transpose %290, [1, 0] : vector<16x8xf32> -> vector<8x16xf32>
    %cst_149 = arith.constant dense<0.000000e+00> : vector<16x16xf32>
    %293 = tpu.matmul %289, %292, %cst_149 {dimension_numbers = #tpu.dot_dimension_numbers<[1], [0], [0], [1], [0, 0, 1, 1], [], []>} : vector<16x8xf32>, vector<8x16xf32>, vector<16x16xf32> -> vector<16x16xf32>
    %294 = vector.shape_cast %289 : vector<16x8xf32> to vector<16x1x8xf32>
    %295 = vector.broadcast %294 : vector<16x1x8xf32> to vector<16x16x8xf32>
    %296 = arith.mulf %295, %23 : vector<16x16x8xf32>
    %cst_150 = arith.constant dense<0.000000e+00> : vector<16x16xf32>
    %297 = vector.multi_reduction <add>, %296, %cst_150 [2] : vector<16x16x8xf32> to vector<16x16xf32>
    %298 = arith.addf %293, %297 : vector<16x16xf32>
    %cst_151 = arith.constant dense<0xFF800000> : vector<16xf32>
    %299 = vector.multi_reduction <maximumf>, %298, %cst_151 [1] : vector<16x16xf32> to vector<16xf32>
    %300 = vector.shape_cast %299 : vector<16xf32> to vector<16x1xf32>
    %301 = vector.broadcast %300 : vector<16x1xf32> to vector<16x16xf32>
    %302 = arith.subf %298, %301 : vector<16x16xf32>
    %303 = math.exp %302 : vector<16x16xf32>
    %cst_152 = arith.constant dense<0.000000e+00> : vector<16xf32>
    %304 = vector.multi_reduction <add>, %303, %cst_152 [1] : vector<16x16xf32> to vector<16xf32>
    %305 = vector.shape_cast %304 : vector<16xf32> to vector<16x1xf32>
    %306 = vector.broadcast %305 : vector<16x1xf32> to vector<16x16xf32>
    %307 = arith.divf %303, %306 : vector<16x16xf32>
    %cst_153 = arith.constant dense<0.000000e+00> : vector<16x8xf32>
    %308 = tpu.matmul %307, %291, %cst_153 {dimension_numbers = #tpu.dot_dimension_numbers<[1], [0], [0], [1], [0, 0, 1, 1], [], []>} : vector<16x16xf32>, vector<16x8xf32>, vector<16x8xf32> -> vector<16x8xf32>
    %309 = vector.extract_strided_slice %264 {offsets = [8, 0], sizes = [8, 32], strides = [1, 1]} : vector<32x32xf32> to vector<8x32xf32>
    %cst_154 = arith.constant dense<0.000000e+00> : vector<16x32xf32>
    %310 = tpu.matmul %308, %309, %cst_154 {dimension_numbers = #tpu.dot_dimension_numbers<[1], [0], [0], [1], [0, 0, 1, 1], [], []>} : vector<16x8xf32>, vector<8x32xf32>, vector<16x32xf32> -> vector<16x32xf32>
    %311 = arith.addf %288, %310 : vector<16x32xf32>
    %312 = vector.extract_strided_slice %262 {offsets = [0, 16], sizes = [16, 8], strides = [1, 1]} : vector<16x32xf32> to vector<16x8xf32>
    %313 = vector.extract_strided_slice %253 {offsets = [0, 16], sizes = [16, 8], strides = [1, 1]} : vector<16x32xf32> to vector<16x8xf32>
    %314 = vector.extract_strided_slice %260 {offsets = [0, 16], sizes = [16, 8], strides = [1, 1]} : vector<16x32xf32> to vector<16x8xf32>
    %315 = tpu.transpose %313, [1, 0] : vector<16x8xf32> -> vector<8x16xf32>
    %cst_155 = arith.constant dense<0.000000e+00> : vector<16x16xf32>
    %316 = tpu.matmul %312, %315, %cst_155 {dimension_numbers = #tpu.dot_dimension_numbers<[1], [0], [0], [1], [0, 0, 1, 1], [], []>} : vector<16x8xf32>, vector<8x16xf32>, vector<16x16xf32> -> vector<16x16xf32>
    %317 = vector.shape_cast %312 : vector<16x8xf32> to vector<16x1x8xf32>
    %318 = vector.broadcast %317 : vector<16x1x8xf32> to vector<16x16x8xf32>
    %319 = arith.mulf %318, %23 : vector<16x16x8xf32>
    %cst_156 = arith.constant dense<0.000000e+00> : vector<16x16xf32>
    %320 = vector.multi_reduction <add>, %319, %cst_156 [2] : vector<16x16x8xf32> to vector<16x16xf32>
    %321 = arith.addf %316, %320 : vector<16x16xf32>
    %cst_157 = arith.constant dense<0xFF800000> : vector<16xf32>
    %322 = vector.multi_reduction <maximumf>, %321, %cst_157 [1] : vector<16x16xf32> to vector<16xf32>
    %323 = vector.shape_cast %322 : vector<16xf32> to vector<16x1xf32>
    %324 = vector.broadcast %323 : vector<16x1xf32> to vector<16x16xf32>
    %325 = arith.subf %321, %324 : vector<16x16xf32>
    %326 = math.exp %325 : vector<16x16xf32>
    %cst_158 = arith.constant dense<0.000000e+00> : vector<16xf32>
    %327 = vector.multi_reduction <add>, %326, %cst_158 [1] : vector<16x16xf32> to vector<16xf32>
    %328 = vector.shape_cast %327 : vector<16xf32> to vector<16x1xf32>
    %329 = vector.broadcast %328 : vector<16x1xf32> to vector<16x16xf32>
    %330 = arith.divf %326, %329 : vector<16x16xf32>
    %cst_159 = arith.constant dense<0.000000e+00> : vector<16x8xf32>
    %331 = tpu.matmul %330, %314, %cst_159 {dimension_numbers = #tpu.dot_dimension_numbers<[1], [0], [0], [1], [0, 0, 1, 1], [], []>} : vector<16x16xf32>, vector<16x8xf32>, vector<16x8xf32> -> vector<16x8xf32>
    %332 = vector.extract_strided_slice %264 {offsets = [16, 0], sizes = [8, 32], strides = [1, 1]} : vector<32x32xf32> to vector<8x32xf32>
    %cst_160 = arith.constant dense<0.000000e+00> : vector<16x32xf32>
    %333 = tpu.matmul %331, %332, %cst_160 {dimension_numbers = #tpu.dot_dimension_numbers<[1], [0], [0], [1], [0, 0, 1, 1], [], []>} : vector<16x8xf32>, vector<8x32xf32>, vector<16x32xf32> -> vector<16x32xf32>
    %334 = arith.addf %311, %333 : vector<16x32xf32>
    %335 = vector.extract_strided_slice %262 {offsets = [0, 24], sizes = [16, 8], strides = [1, 1]} : vector<16x32xf32> to vector<16x8xf32>
    %336 = vector.extract_strided_slice %253 {offsets = [0, 24], sizes = [16, 8], strides = [1, 1]} : vector<16x32xf32> to vector<16x8xf32>
    %337 = vector.extract_strided_slice %260 {offsets = [0, 24], sizes = [16, 8], strides = [1, 1]} : vector<16x32xf32> to vector<16x8xf32>
    %338 = tpu.transpose %336, [1, 0] : vector<16x8xf32> -> vector<8x16xf32>
    %cst_161 = arith.constant dense<0.000000e+00> : vector<16x16xf32>
    %339 = tpu.matmul %335, %338, %cst_161 {dimension_numbers = #tpu.dot_dimension_numbers<[1], [0], [0], [1], [0, 0, 1, 1], [], []>} : vector<16x8xf32>, vector<8x16xf32>, vector<16x16xf32> -> vector<16x16xf32>
    %340 = vector.shape_cast %335 : vector<16x8xf32> to vector<16x1x8xf32>
    %341 = vector.broadcast %340 : vector<16x1x8xf32> to vector<16x16x8xf32>
    %342 = arith.mulf %341, %23 : vector<16x16x8xf32>
    %cst_162 = arith.constant dense<0.000000e+00> : vector<16x16xf32>
    %343 = vector.multi_reduction <add>, %342, %cst_162 [2] : vector<16x16x8xf32> to vector<16x16xf32>
    %344 = arith.addf %339, %343 : vector<16x16xf32>
    %cst_163 = arith.constant dense<0xFF800000> : vector<16xf32>
    %345 = vector.multi_reduction <maximumf>, %344, %cst_163 [1] : vector<16x16xf32> to vector<16xf32>
    %346 = vector.shape_cast %345 : vector<16xf32> to vector<16x1xf32>
    %347 = vector.broadcast %346 : vector<16x1xf32> to vector<16x16xf32>
    %348 = arith.subf %344, %347 : vector<16x16xf32>
    %349 = math.exp %348 : vector<16x16xf32>
    %cst_164 = arith.constant dense<0.000000e+00> : vector<16xf32>
    %350 = vector.multi_reduction <add>, %349, %cst_164 [1] : vector<16x16xf32> to vector<16xf32>
    %351 = vector.shape_cast %350 : vector<16xf32> to vector<16x1xf32>
    %352 = vector.broadcast %351 : vector<16x1xf32> to vector<16x16xf32>
    %353 = arith.divf %349, %352 : vector<16x16xf32>
    %cst_165 = arith.constant dense<0.000000e+00> : vector<16x8xf32>
    %354 = tpu.matmul %353, %337, %cst_165 {dimension_numbers = #tpu.dot_dimension_numbers<[1], [0], [0], [1], [0, 0, 1, 1], [], []>} : vector<16x16xf32>, vector<16x8xf32>, vector<16x8xf32> -> vector<16x8xf32>
    %355 = vector.extract_strided_slice %264 {offsets = [24, 0], sizes = [8, 32], strides = [1, 1]} : vector<32x32xf32> to vector<8x32xf32>
    %cst_166 = arith.constant dense<0.000000e+00> : vector<16x32xf32>
    %356 = tpu.matmul %354, %355, %cst_166 {dimension_numbers = #tpu.dot_dimension_numbers<[1], [0], [0], [1], [0, 0, 1, 1], [], []>} : vector<16x8xf32>, vector<8x32xf32>, vector<16x32xf32> -> vector<16x32xf32>
    %357 = arith.addf %334, %356 : vector<16x32xf32>
    %c1_167 = arith.constant 1 : index
    %c0_168 = arith.constant 0 : index
    %c0_169 = arith.constant 0 : index
    %358 = vector.load %arg17[%c1_167, %c0_168, %c0_169] : memref<2x1x32xf32, #tpu.memory_space<vmem>>, vector<1x1x32xf32>
    %359 = vector.shape_cast %358 : vector<1x1x32xf32> to vector<1x32xf32>
    %360 = vector.broadcast %359 : vector<1x32xf32> to vector<16x32xf32>
    %361 = arith.addf %357, %360 : vector<16x32xf32>
    %362 = arith.addf %361, %215 : vector<16x32xf32>
    %c1_170 = arith.constant 1 : index
    %c0_171 = arith.constant 0 : index
    %c0_172 = arith.constant 0 : index
    %363 = vector.load %arg18[%c1_170, %c0_171, %c0_172] : memref<2x1x32xf32, #tpu.memory_space<vmem>>, vector<1x1x32xf32>
    %364 = vector.shape_cast %363 : vector<1x1x32xf32> to vector<1x32xf32>
    %c1_173 = arith.constant 1 : index
    %c0_174 = arith.constant 0 : index
    %c0_175 = arith.constant 0 : index
    %365 = vector.load %arg19[%c1_173, %c0_174, %c0_175] : memref<2x1x32xf32, #tpu.memory_space<vmem>>, vector<1x1x32xf32>
    %366 = vector.shape_cast %365 : vector<1x1x32xf32> to vector<1x32xf32>
    %cst_176 = arith.constant dense<0.000000e+00> : vector<16xf32>
    %367 = vector.multi_reduction <add>, %362, %cst_176 [1] : vector<16x32xf32> to vector<16xf32>
    %368 = vector.shape_cast %367 : vector<16xf32> to vector<16x1xf32>
    %cst_177 = arith.constant 3.200000e+01 : f32
    %369 = vector.broadcast %cst_177 : f32 to vector<16x1xf32>
    %370 = arith.divf %368, %369 : vector<16x1xf32>
    %371 = vector.broadcast %370 : vector<16x1xf32> to vector<16x32xf32>
    %372 = arith.subf %362, %371 : vector<16x32xf32>
    %373 = arith.mulf %372, %372 : vector<16x32xf32>
    %cst_178 = arith.constant dense<0.000000e+00> : vector<16xf32>
    %374 = vector.multi_reduction <add>, %373, %cst_178 [1] : vector<16x32xf32> to vector<16xf32>
    %375 = vector.shape_cast %374 : vector<16xf32> to vector<16x1xf32>
    %cst_179 = arith.constant 3.200000e+01 : f32
    %376 = vector.broadcast %cst_179 : f32 to vector<16x1xf32>
    %377 = arith.divf %375, %376 : vector<16x1xf32>
    %cst_180 = arith.constant 9.99999974E-6 : f32
    %378 = vector.broadcast %cst_180 : f32 to vector<16x1xf32>
    %379 = arith.addf %377, %378 : vector<16x1xf32>
    %380 = math.rsqrt %379 : vector<16x1xf32>
    %381 = vector.broadcast %380 : vector<16x1xf32> to vector<16x32xf32>
    %382 = arith.mulf %372, %381 : vector<16x32xf32>
    %383 = vector.broadcast %364 : vector<1x32xf32> to vector<16x32xf32>
    %384 = arith.mulf %382, %383 : vector<16x32xf32>
    %385 = vector.broadcast %366 : vector<1x32xf32> to vector<16x32xf32>
    %386 = arith.addf %384, %385 : vector<16x32xf32>
    %c1_181 = arith.constant 1 : index
    %c0_182 = arith.constant 0 : index
    %c0_183 = arith.constant 0 : index
    %387 = vector.load %arg20[%c1_181, %c0_182, %c0_183] : memref<2x32x64xf32, #tpu.memory_space<vmem>>, vector<1x32x64xf32>
    %388 = vector.shape_cast %387 : vector<1x32x64xf32> to vector<32x64xf32>
    %cst_184 = arith.constant dense<0.000000e+00> : vector<16x64xf32>
    %389 = tpu.matmul %386, %388, %cst_184 {dimension_numbers = #tpu.dot_dimension_numbers<[1], [0], [0], [1], [0, 0, 1, 1], [], []>} : vector<16x32xf32>, vector<32x64xf32>, vector<16x64xf32> -> vector<16x64xf32>
    %c1_185 = arith.constant 1 : index
    %c0_186 = arith.constant 0 : index
    %c0_187 = arith.constant 0 : index
    %390 = vector.load %arg21[%c1_185, %c0_186, %c0_187] : memref<2x1x64xf32, #tpu.memory_space<vmem>>, vector<1x1x64xf32>
    %391 = vector.shape_cast %390 : vector<1x1x64xf32> to vector<1x64xf32>
    %392 = vector.broadcast %391 : vector<1x64xf32> to vector<16x64xf32>
    %393 = arith.addf %389, %392 : vector<16x64xf32>
    %c5 = arith.constant 5 : index
    %394 = memref.load %arg1[%c5] : memref<6xf32, #tpu.memory_space<smem>>
    %cst_188 = arith.constant 0.000000e+00 : f32
    %395 = vector.broadcast %cst_188 : f32 to vector<16x64xf32>
    %396 = arith.cmpf oge, %393, %395 : vector<16x64xf32>
    %397 = vector.broadcast %394 : f32 to vector<16x64xf32>
    %398 = arith.mulf %397, %393 : vector<16x64xf32>
    %399 = arith.select %396, %393, %398 : vector<16x64xi1>, vector<16x64xf32>
    %c1_189 = arith.constant 1 : index
    %c0_190 = arith.constant 0 : index
    %c0_191 = arith.constant 0 : index
    %400 = vector.load %arg22[%c1_189, %c0_190, %c0_191] : memref<2x64x32xf32, #tpu.memory_space<vmem>>, vector<1x64x32xf32>
    %401 = vector.shape_cast %400 : vector<1x64x32xf32> to vector<64x32xf32>
    %cst_192 = arith.constant dense<0.000000e+00> : vector<16x32xf32>
    %402 = tpu.matmul %399, %401, %cst_192 {dimension_numbers = #tpu.dot_dimension_numbers<[1], [0], [0], [1], [0, 0, 1, 1], [], []>} : vector<16x64xf32>, vector<64x32xf32>, vector<16x32xf32> -> vector<16x32xf32>
    %c1_193 = arith.constant 1 : index
    %c0_194 = arith.constant 0 : index
    %c0_195 = arith.constant 0 : index
    %403 = vector.load %arg23[%c1_193, %c0_194, %c0_195] : memref<2x1x32xf32, #tpu.memory_space<vmem>>, vector<1x1x32xf32>
    %404 = vector.shape_cast %403 : vector<1x1x32xf32> to vector<1x32xf32>
    %405 = vector.broadcast %404 : vector<1x32xf32> to vector<16x32xf32>
    %406 = arith.addf %402, %405 : vector<16x32xf32>
    %407 = arith.addf %406, %362 : vector<16x32xf32>
    %c0_196 = arith.constant 0 : index
    %c0_197 = arith.constant 0 : index
    %408 = vector.load %arg24[%c0_196, %c0_197] : memref<1x32xf32, #tpu.memory_space<vmem>>, vector<1x32xf32>
    %c0_198 = arith.constant 0 : index
    %c0_199 = arith.constant 0 : index
    %409 = vector.load %arg25[%c0_198, %c0_199] : memref<1x32xf32, #tpu.memory_space<vmem>>, vector<1x32xf32>
    %cst_200 = arith.constant dense<0.000000e+00> : vector<16xf32>
    %410 = vector.multi_reduction <add>, %407, %cst_200 [1] : vector<16x32xf32> to vector<16xf32>
    %411 = vector.shape_cast %410 : vector<16xf32> to vector<16x1xf32>
    %cst_201 = arith.constant 3.200000e+01 : f32
    %412 = vector.broadcast %cst_201 : f32 to vector<16x1xf32>
    %413 = arith.divf %411, %412 : vector<16x1xf32>
    %414 = vector.broadcast %413 : vector<16x1xf32> to vector<16x32xf32>
    %415 = arith.subf %407, %414 : vector<16x32xf32>
    %416 = arith.mulf %415, %415 : vector<16x32xf32>
    %cst_202 = arith.constant dense<0.000000e+00> : vector<16xf32>
    %417 = vector.multi_reduction <add>, %416, %cst_202 [1] : vector<16x32xf32> to vector<16xf32>
    %418 = vector.shape_cast %417 : vector<16xf32> to vector<16x1xf32>
    %cst_203 = arith.constant 3.200000e+01 : f32
    %419 = vector.broadcast %cst_203 : f32 to vector<16x1xf32>
    %420 = arith.divf %418, %419 : vector<16x1xf32>
    %cst_204 = arith.constant 9.99999974E-6 : f32
    %421 = vector.broadcast %cst_204 : f32 to vector<16x1xf32>
    %422 = arith.addf %420, %421 : vector<16x1xf32>
    %423 = math.rsqrt %422 : vector<16x1xf32>
    %424 = vector.broadcast %423 : vector<16x1xf32> to vector<16x32xf32>
    %425 = arith.mulf %415, %424 : vector<16x32xf32>
    %426 = vector.broadcast %408 : vector<1x32xf32> to vector<16x32xf32>
    %427 = arith.mulf %425, %426 : vector<16x32xf32>
    %428 = vector.broadcast %409 : vector<1x32xf32> to vector<16x32xf32>
    %429 = arith.addf %427, %428 : vector<16x32xf32>
    %c0_205 = arith.constant 0 : index
    %c0_206 = arith.constant 0 : index
    %430 = vector.load %arg26[%c0_205, %c0_206] : memref<32x32xf32, #tpu.memory_space<vmem>>, vector<32x32xf32>
    %cst_207 = arith.constant dense<0.000000e+00> : vector<16x32xf32>
    %431 = tpu.matmul %429, %430, %cst_207 {dimension_numbers = #tpu.dot_dimension_numbers<[1], [0], [0], [1], [0, 0, 1, 1], [], []>} : vector<16x32xf32>, vector<32x32xf32>, vector<16x32xf32> -> vector<16x32xf32>
    %c0_208 = arith.constant 0 : index
    %c0_209 = arith.constant 0 : index
    %432 = vector.load %arg27[%c0_208, %c0_209] : memref<1x32xf32, #tpu.memory_space<vmem>>, vector<1x32xf32>
    %433 = vector.broadcast %432 : vector<1x32xf32> to vector<16x32xf32>
    %434 = arith.addf %431, %433 : vector<16x32xf32>
    %c3 = arith.constant 3 : index
    %435 = memref.load %arg1[%c3] : memref<6xf32, #tpu.memory_space<smem>>
    %cst_210 = arith.constant 0.000000e+00 : f32
    %436 = vector.broadcast %cst_210 : f32 to vector<16x32xf32>
    %437 = arith.cmpf oge, %434, %436 : vector<16x32xf32>
    %438 = vector.broadcast %435 : f32 to vector<16x32xf32>
    %439 = arith.mulf %438, %434 : vector<16x32xf32>
    %440 = arith.select %437, %434, %439 : vector<16x32xi1>, vector<16x32xf32>
    %c0_211 = arith.constant 0 : index
    %c0_212 = arith.constant 0 : index
    %441 = vector.load %arg28[%c0_211, %c0_212] : memref<32x16xf32, #tpu.memory_space<vmem>>, vector<32x16xf32>
    %cst_213 = arith.constant dense<0.000000e+00> : vector<16x16xf32>
    %442 = tpu.matmul %440, %441, %cst_213 {dimension_numbers = #tpu.dot_dimension_numbers<[1], [0], [0], [1], [0, 0, 1, 1], [], []>} : vector<16x32xf32>, vector<32x16xf32>, vector<16x16xf32> -> vector<16x16xf32>
    %c0_214 = arith.constant 0 : index
    %c0_215 = arith.constant 0 : index
    %443 = vector.load %arg29[%c0_214, %c0_215] : memref<1x16xf32, #tpu.memory_space<vmem>>, vector<1x16xf32>
    %444 = vector.broadcast %443 : vector<1x16xf32> to vector<16x16xf32>
    %445 = arith.addf %442, %444 : vector<16x16xf32>
    %446 = tpu.iota {dimensions = array<i32: 1>} : vector<16x16xi32>
    %c12_i32 = arith.constant 12 : i32
    %447 = vector.broadcast %c12_i32 : i32 to vector<16x16xi32>
    %448 = arith.cmpi sge, %446, %447 : vector<16x16xi32>
    %449 = arith.negf %445 : vector<16x16xf32>
    %450 = math.exp %449 : vector<16x16xf32>
    %cst_216 = arith.constant 1.000000e+00 : f32
    %451 = vector.broadcast %cst_216 : f32 to vector<16x16xf32>
    %452 = arith.addf %451, %450 : vector<16x16xf32>
    %453 = arith.divf %451, %452 : vector<16x16xf32>
    %454 = arith.select %448, %453, %445 : vector<16x16xi1>, vector<16x16xf32>
    %c0_217 = arith.constant 0 : index
    %c0_218 = arith.constant 0 : index
    %455 = vector.load %arg30[%c0_217, %c0_218] : memref<16x16xf32, #tpu.memory_space<vmem>>, vector<16x16xf32>
    tpu.vector_store %arg30[%c0_217, %c0_218], %454 {strides = array<i32>} : memref<16x16xf32, #tpu.memory_space<vmem>>, vector<16x16xf32>,
    return
  }
  func.func @transform_0(%arg0: i32) -> i32 {
    %c0_i32 = arith.constant 0 : i32
    %c0_i32_0 = arith.constant 0 : i32
    return %c0_i32 : i32
  }
  func.func @transform_1(%arg0: i32) -> (i32, i32) {
    %c0_i32 = arith.constant 0 : i32
    %c0_i32_0 = arith.constant 0 : i32
    return %arg0, %c0_i32 : i32, i32
  }
  func.func @transform_2(%arg0: i32) -> (i32, i32, i32) {
    %c0_i32 = arith.constant 0 : i32
    %c0_i32_0 = arith.constant 0 : i32
    %c0_i32_1 = arith.constant 0 : i32
    %c0_i32_2 = arith.constant 0 : i32
    return %c0_i32, %c0_i32_0, %c0_i32_1 : i32, i32, i32
  }
  func.func @transform_3(%arg0: i32) -> (i32, i32) {
    %c0_i32 = arith.constant 0 : i32
    %c0_i32_0 = arith.constant 0 : i32
    %c0_i32_1 = arith.constant 0 : i32
    return %c0_i32, %c0_i32_0 : i32, i32
  }
  func.func @transform_4(%arg0: i32) -> (i32, i32) {
    %c0_i32 = arith.constant 0 : i32
    %c0_i32_0 = arith.constant 0 : i32
    %c0_i32_1 = arith.constant 0 : i32
    return %c0_i32, %c0_i32_0 : i32, i32
  }
  func.func @transform_5(%arg0: i32) -> (i32, i32) {
    %c0_i32 = arith.constant 0 : i32
    %c0_i32_0 = arith.constant 0 : i32
    %c0_i32_1 = arith.constant 0 : i32
    return %c0_i32, %c0_i32_0 : i32, i32
  }
  func.func @transform_6(%arg0: i32) -> (i32, i32) {
    %c0_i32 = arith.constant 0 : i32
    %c0_i32_0 = arith.constant 0 : i32
    %c0_i32_1 = arith.constant 0 : i32
    return %c0_i32, %c0_i32_0 : i32, i32
  }
  func.func @transform_7(%arg0: i32) -> (i32, i32, i32) {
    %c0_i32 = arith.constant 0 : i32
    %c0_i32_0 = arith.constant 0 : i32
    %c0_i32_1 = arith.constant 0 : i32
    %c0_i32_2 = arith.constant 0 : i32
    return %c0_i32, %c0_i32_0, %c0_i32_1 : i32, i32, i32
  }
  func.func @transform_8(%arg0: i32) -> (i32, i32, i32) {
    %c0_i32 = arith.constant 0 : i32
    %c0_i32_0 = arith.constant 0 : i32
    %c0_i32_1 = arith.constant 0 : i32
    %c0_i32_2 = arith.constant 0 : i32
    return %c0_i32, %c0_i32_0, %c0_i32_1 : i32, i32, i32
  }
  func.func @transform_9(%arg0: i32) -> (i32, i32, i32) {
    %c0_i32 = arith.constant 0 : i32
    %c0_i32_0 = arith.constant 0 : i32
    %c0_i32_1 = arith.constant 0 : i32
    %c0_i32_2 = arith.constant 0 : i32
    return %c0_i32, %c0_i32_0, %c0_i32_1 : i32, i32, i32
  }
  func.func @transform_10(%arg0: i32) -> (i32, i32, i32) {
    %c0_i32 = arith.constant 0 : i32
    %c0_i32_0 = arith.constant 0 : i32
    %c0_i32_1 = arith.constant 0 : i32
    %c0_i32_2 = arith.constant 0 : i32
    return %c0_i32, %c0_i32_0, %c0_i32_1 : i32, i32, i32
  }
  func.func @transform_11(%arg0: i32) -> (i32, i32, i32) {
    %c0_i32 = arith.constant 0 : i32
    %c0_i32_0 = arith.constant 0 : i32
    %c0_i32_1 = arith.constant 0 : i32
    %c0_i32_2 = arith.constant 0 : i32
    return %c0_i32, %c0_i32_0, %c0_i32_1 : i32, i32, i32
  }
  func.func @transform_12(%arg0: i32) -> (i32, i32, i32) {
    %c0_i32 = arith.constant 0 : i32
    %c0_i32_0 = arith.constant 0 : i32
    %c0_i32_1 = arith.constant 0 : i32
    %c0_i32_2 = arith.constant 0 : i32
    return %c0_i32, %c0_i32_0, %c0_i32_1 : i32, i32, i32
  }
  func.func @transform_13(%arg0: i32) -> (i32, i32, i32) {
    %c0_i32 = arith.constant 0 : i32
    %c0_i32_0 = arith.constant 0 : i32
    %c0_i32_1 = arith.constant 0 : i32
    %c0_i32_2 = arith.constant 0 : i32
    return %c0_i32, %c0_i32_0, %c0_i32_1 : i32, i32, i32
  }
  func.func @transform_14(%arg0: i32) -> (i32, i32, i32) {
    %c0_i32 = arith.constant 0 : i32
    %c0_i32_0 = arith.constant 0 : i32
    %c0_i32_1 = arith.constant 0 : i32
    %c0_i32_2 = arith.constant 0 : i32
    return %c0_i32, %c0_i32_0, %c0_i32_1 : i32, i32, i32
  }
  func.func @transform_15(%arg0: i32) -> (i32, i32, i32) {
    %c0_i32 = arith.constant 0 : i32
    %c0_i32_0 = arith.constant 0 : i32
    %c0_i32_1 = arith.constant 0 : i32
    %c0_i32_2 = arith.constant 0 : i32
    return %c0_i32, %c0_i32_0, %c0_i32_1 : i32, i32, i32
  }
  func.func @transform_16(%arg0: i32) -> (i32, i32, i32) {
    %c0_i32 = arith.constant 0 : i32
    %c0_i32_0 = arith.constant 0 : i32
    %c0_i32_1 = arith.constant 0 : i32
    %c0_i32_2 = arith.constant 0 : i32
    return %c0_i32, %c0_i32_0, %c0_i32_1 : i32, i32, i32
  }
  func.func @transform_17(%arg0: i32) -> (i32, i32, i32) {
    %c0_i32 = arith.constant 0 : i32
    %c0_i32_0 = arith.constant 0 : i32
    %c0_i32_1 = arith.constant 0 : i32
    %c0_i32_2 = arith.constant 0 : i32
    return %c0_i32, %c0_i32_0, %c0_i32_1 : i32, i32, i32
  }
  func.func @transform_18(%arg0: i32) -> (i32, i32, i32) {
    %c0_i32 = arith.constant 0 : i32
    %c0_i32_0 = arith.constant 0 : i32
    %c0_i32_1 = arith.constant 0 : i32
    %c0_i32_2 = arith.constant 0 : i32
    return %c0_i32, %c0_i32_0, %c0_i32_1 : i32, i32, i32
  }
  func.func @transform_19(%arg0: i32) -> (i32, i32, i32) {
    %c0_i32 = arith.constant 0 : i32
    %c0_i32_0 = arith.constant 0 : i32
    %c0_i32_1 = arith.constant 0 : i32
    %c0_i32_2 = arith.constant 0 : i32
    return %c0_i32, %c0_i32_0, %c0_i32_1 : i32, i32, i32
  }
  func.func @transform_20(%arg0: i32) -> (i32, i32, i32) {
    %c0_i32 = arith.constant 0 : i32
    %c0_i32_0 = arith.constant 0 : i32
    %c0_i32_1 = arith.constant 0 : i32
    %c0_i32_2 = arith.constant 0 : i32
    return %c0_i32, %c0_i32_0, %c0_i32_1 : i32, i32, i32
  }
  func.func @transform_21(%arg0: i32) -> (i32, i32, i32) {
    %c0_i32 = arith.constant 0 : i32
    %c0_i32_0 = arith.constant 0 : i32
    %c0_i32_1 = arith.constant 0 : i32
    %c0_i32_2 = arith.constant 0 : i32
    return %c0_i32, %c0_i32_0, %c0_i32_1 : i32, i32, i32
  }
  func.func @transform_22(%arg0: i32) -> (i32, i32, i32) {
    %c0_i32 = arith.constant 0 : i32
    %c0_i32_0 = arith.constant 0 : i32
    %c0_i32_1 = arith.constant 0 : i32
    %c0_i32_2 = arith.constant 0 : i32
    return %c0_i32, %c0_i32_0, %c0_i32_1 : i32, i32, i32
  }
  func.func @transform_23(%arg0: i32) -> (i32, i32) {
    %c0_i32 = arith.constant 0 : i32
    %c0_i32_0 = arith.constant 0 : i32
    %c0_i32_1 = arith.constant 0 : i32
    return %c0_i32, %c0_i32_0 : i32, i32
  }
  func.func @transform_24(%arg0: i32) -> (i32, i32) {
    %c0_i32 = arith.constant 0 : i32
    %c0_i32_0 = arith.constant 0 : i32
    %c0_i32_1 = arith.constant 0 : i32
    return %c0_i32, %c0_i32_0 : i32, i32
  }
  func.func @transform_25(%arg0: i32) -> (i32, i32) {
    %c0_i32 = arith.constant 0 : i32
    %c0_i32_0 = arith.constant 0 : i32
    %c0_i32_1 = arith.constant 0 : i32
    return %c0_i32, %c0_i32_0 : i32, i32
  }
  func.func @transform_26(%arg0: i32) -> (i32, i32) {
    %c0_i32 = arith.constant 0 : i32
    %c0_i32_0 = arith.constant 0 : i32
    %c0_i32_1 = arith.constant 0 : i32
    return %c0_i32, %c0_i32_0 : i32, i32
  }
  func.func @transform_27(%arg0: i32) -> (i32, i32) {
    %c0_i32 = arith.constant 0 : i32
    %c0_i32_0 = arith.constant 0 : i32
    %c0_i32_1 = arith.constant 0 : i32
    return %c0_i32, %c0_i32_0 : i32, i32
  }
  func.func @transform_28(%arg0: i32) -> (i32, i32) {
    %c0_i32 = arith.constant 0 : i32
    %c0_i32_0 = arith.constant 0 : i32
    %c0_i32_1 = arith.constant 0 : i32
    return %c0_i32, %c0_i32_0 : i32, i32
  }
  func.func @transform_29(%arg0: i32) -> (i32, i32) {
    %c0_i32 = arith.constant 0 : i32
    %c0_i32_0 = arith.constant 0 : i32
    return %arg0, %c0_i32 : i32, i32
  }
}

</mosaic_0001>

<llo_original>
// kernel: fwd.1
$region0: #{fwd.1}
  #allocation0 [shape = 'u32[]', space=smem, size = 0x4, offset = 0x4, fixed_abs, tag = 'smem constant byte address 0x4 - core index']
  #allocation1 [shape = 'u32[72,128]{1,0:T(1,128)}', space=vmem, size = 0x9000, scoped, tag = 'internal scratch']
  %s0 = inlined_call_operand.smem [shape: u32[30], index: -1, kind: input, shape index: {}]
  %s1 = sld [smem:[%s0]]
  %s2 = scalar_lea.smem %s0, 1
  %s3 = sld [smem:[%s2]]
  %s4 = scalar_lea.smem %s0, 2
  %s5 = sld [smem:[%s4]]
  %s6 = scalar_lea.smem %s0, 3
  %s7 = sld [smem:[%s6]]
  %s8 = scalar_lea.smem %s0, 4
  %s9 = sld [smem:[%s8]]
  %s10 = scalar_lea.smem %s0, 5
  %s11 = sld [smem:[%s10]]
  %s12 = scalar_lea.smem %s0, 6
  %s13 = sld [smem:[%s12]]
  %s14 = scalar_lea.smem %s0, 7
  %s15 = sld [smem:[%s14]]
  %s16 = scalar_lea.smem %s0, 8
  %s17 = sld [smem:[%s16]]
  %s18 = scalar_lea.smem %s0, 9
  %s19 = sld [smem:[%s18]]
  %s20 = scalar_lea.smem %s0, 10
  %s21 = sld [smem:[%s20]]
  %s22 = scalar_lea.smem %s0, 11
  %s23 = sld [smem:[%s22]]
  %s24 = scalar_lea.smem %s0, 12
  %s25 = sld [smem:[%s24]]
  %s26 = scalar_lea.smem %s0, 13
  %s27 = sld [smem:[%s26]]
  %s28 = scalar_lea.smem %s0, 14
  %s29 = sld [smem:[%s28]]
  %s30 = scalar_lea.smem %s0, 15
  %s31 = sld [smem:[%s30]]
  %s32 = scalar_lea.smem %s0, 16
  %s33 = sld [smem:[%s32]]
  %s34 = scalar_lea.smem %s0, 17
  %s35 = sld [smem:[%s34]]
  %s36 = scalar_lea.smem %s0, 18
  %s37 = sld [smem:[%s36]]
  %s38 = scalar_lea.smem %s0, 19
  %s39 = sld [smem:[%s38]]
  %s40 = scalar_lea.smem %s0, 20
  %s41 = sld [smem:[%s40]]
  %s42 = scalar_lea.smem %s0, 21
  %s43 = sld [smem:[%s42]]
  %s44 = scalar_lea.smem %s0, 22
  %s45 = sld [smem:[%s44]]
  %s46 = scalar_lea.smem %s0, 23
  %s47 = sld [smem:[%s46]]
  %s48 = scalar_lea.smem %s0, 24
  %s49 = sld [smem:[%s48]]
  %s50 = scalar_lea.smem %s0, 25
  %s51 = sld [smem:[%s50]]
  %s52 = scalar_lea.smem %s0, 26
  %s53 = sld [smem:[%s52]]
  %s54 = scalar_lea.smem %s0, 27
  %s55 = sld [smem:[%s54]]
  %s56 = scalar_lea.smem %s0, 28
  %s57 = sld [smem:[%s56]]
  %s58 = scalar_lea.smem %s0, 29
  %s59 = sld [smem:[%s58]]
  %s60 = sld [smem:[#allocation0]]
  $region153: #{fwd.1} parent=0
    _
  %s62 = ssub.s32 1, %s60
  %s63 = scalar_select 0, %s62, %s60
  $region1: #{fwd.1} parent=0
    #allocation2 [shape = 'u8[512]{0}', space=smem, size = 0x200, scoped, tag = 'input window, operand 0, single buffered']
    #allocation3 [shape = 's32[2]{0}', space=sflag, size = 0x8, scoped, tag = 'scoped memory for fwd.1']
    %64 = vsyncpa [#allocation3], 0
    loop: start=0, step=1, limit=4
    $region2: #{fwd.1} parent=1 // loop_pre_header
      _
    $region3: #{fwd.1} parent=1 // loop_header
      %s66 = sphi 0, %s70
      %p67 = scmp.ge.s32.totalorder %s66, 4
      %s74 = sphi 0, %s74
      %s76 = sphi 0, %s74
      %s77 = sphi 0, %s76
      %s91 = sphi 0, %s77
      %s97 = sphi 0, %s99
      %s100 = sphi 0, %s97
      %s101 = sphi 0, %s100
      %s117 = sphi 0, %s101
      %s121 = sphi 0, %s121
      %s123 = sphi 0, %s121
      %s124 = sphi 0, %s123
      %s138 = sphi 0, %s124
      %s142 = sphi 0, %s142
      %s144 = sphi 0, %s142
      %s145 = sphi 0, %s144
      %s159 = sphi 0, %s145
      %s163 = sphi 0, %s163
      %s165 = sphi 0, %s163
      %s166 = sphi 0, %s165
      %s180 = sphi 0, %s166
      %s184 = sphi 0, %s184
      %s186 = sphi 0, %s184
      %s187 = sphi 0, %s186
      %s201 = sphi 0, %s187
      %s205 = sphi 0, %s205
      %s207 = sphi 0, %s205
      %s208 = sphi 0, %s207
      %s222 = sphi 0, %s208
      %s226 = sphi 0, %s226
      %s228 = sphi 0, %s226
      %s229 = sphi 0, %s228
      %s243 = sphi 0, %s229
      %s247 = sphi 0, %s247
      %s249 = sphi 0, %s247
      %s250 = sphi 0, %s249
      %s264 = sphi 0, %s250
      %s268 = sphi 0, %s268
      %s270 = sphi 0, %s268
      %s271 = sphi 0, %s270
      %s285 = sphi 0, %s271
      %s289 = sphi 0, %s289
      %s291 = sphi 0, %s289
      %s292 = sphi 0, %s291
      %s306 = sphi 0, %s292
      %s310 = sphi 0, %s310
      %s312 = sphi 0, %s310
      %s313 = sphi 0, %s312
      %s327 = sphi 0, %s313
      %s331 = sphi 0, %s331
      %s333 = sphi 0, %s331
      %s334 = sphi 0, %s333
      %s348 = sphi 0, %s334
      %s352 = sphi 0, %s352
      %s354 = sphi 0, %s352
      %s355 = sphi 0, %s354
      %s369 = sphi 0, %s355
      %s373 = sphi 0, %s373
      %s375 = sphi 0, %s373
      %s376 = sphi 0, %s375
      %s390 = sphi 0, %s376
      %s394 = sphi 0, %s394
      %s396 = sphi 0, %s394
      %s397 = sphi 0, %s396
      %s411 = sphi 0, %s397
      %s415 = sphi 0, %s415
      %s417 = sphi 0, %s415
      %s418 = sphi 0, %s417
      %s432 = sphi 0, %s418
      %s436 = sphi 0, %s436
      %s438 = sphi 0, %s436
      %s439 = sphi 0, %s438
      %s453 = sphi 0, %s439
      %s457 = sphi 0, %s457
      %s459 = sphi 0, %s457
      %s460 = sphi 0, %s459
      %s474 = sphi 0, %s460
      %s478 = sphi 0, %s478
      %s480 = sphi 0, %s478
      %s481 = sphi 0, %s480
      %s495 = sphi 0, %s481
      %s499 = sphi 0, %s499
      %s501 = sphi 0, %s499
      %s502 = sphi 0, %s501
      %s516 = sphi 0, %s502
      %s520 = sphi 0, %s520
      %s522 = sphi 0, %s520
      %s523 = sphi 0, %s522
      %s537 = sphi 0, %s523
      %s541 = sphi 0, %s541
      %s543 = sphi 0, %s541
      %s544 = sphi 0, %s543
      %s558 = sphi 0, %s544
      %s562 = sphi 0, %s562
      %s564 = sphi 0, %s562
      %s565 = sphi 0, %s564
      %s579 = sphi 0, %s565
      %s583 = sphi 0, %s583
      %s585 = sphi 0, %s583
      %s586 = sphi 0, %s585
      %s600 = sphi 0, %s586
      %s604 = sphi 0, %s604
      %s606 = sphi 0, %s604
      %s607 = sphi 0, %s606
      %s621 = sphi 0, %s607
      %s625 = sphi 0, %s625
      %s627 = sphi 0, %s625
      %s628 = sphi 0, %s627
      %s642 = sphi 0, %s628
      %s646 = sphi 0, %s646
      %s648 = sphi 0, %s646
      %s649 = sphi 0, %s648
      %s663 = sphi 0, %s649
      %s667 = sphi 0, %s667
      %s669 = sphi 0, %s667
      %s670 = sphi 0, %s669
      %s684 = sphi 0, %s670
      %s690 = sphi 0, %s692
      %s693 = sphi 0, %s690
      %s694 = sphi 0, %s693
      %s710 = sphi 0, %s694
    $region4: #{fwd.1} parent=1 // loop_header_branch
      %69 = sbr.rel (%p67) target = $region8
    $region5: #{fwd.1} parent=1 // loop_body
      %s71 = ssub.s32 %s66, 1
      %s72 = ssub.s32 %s66, 2
      %s73 = sadd.s32 %s66, 1
      %s75 = sadd.s32 %s74, 1
      %p78 = scmp.eq.s32.totalorder %s66, 1
      %p79 = scmp.ne.s32.totalorder %s74, %s76
      %p80 = scmp.eq.s32.totalorder %s66, 0
      %p81 = por %p79, %p80
      %p82 = scmp.ne.s32.totalorder %s74, %s76
      %p83 = scmp.eq.s32.totalorder %s71, 1
      %p84 = por %p82, %p83
      %p85 = scmp.ne.s32.totalorder %s76, %s77
      %p86 = scmp.eq.s32.totalorder %s71, 0
      %p87 = por %p85, %p86
      %p88 = scmp.ne.s32.totalorder %s76, %s77
      %p89 = scmp.eq.s32.totalorder %s72, 1
      %p90 = por %p88, %p89
      %p92 = scmp.ne.s32.totalorder %s77, %s91
      %p93 = scmp.eq.s32.totalorder %s72, 0
      %p94 = por %p92, %p93
      %s95 = ssub.s32 %s66, %s73
      %p96 = scmp.eq.s32.totalorder %s95, 0
      %s98 = sadd.s32 %s97, 1
      %s99 = scalar_select %p96, %s97, %s98
      %p102 = pneg %p96
      %p103 = scmp.eq.s32.totalorder %s66, 1
      %p104 = por %p102, %p103
      %p105 = scmp.ne.s32.totalorder %s97, %s100
      %p106 = scmp.eq.s32.totalorder %s66, 0
      %p107 = por %p105, %p106
      %p108 = scmp.ne.s32.totalorder %s97, %s100
      %p109 = scmp.eq.s32.totalorder %s71, 1
      %p110 = por %p108, %p109
      %p111 = scmp.ne.s32.totalorder %s100, %s101
      %p112 = scmp.eq.s32.totalorder %s71, 0
      %p113 = por %p111, %p112
      %p114 = scmp.ne.s32.totalorder %s100, %s101
      %p115 = scmp.eq.s32.totalorder %s72, 1
      %p116 = por %p114, %p115
      %p118 = scmp.ne.s32.totalorder %s101, %s117
      %p119 = scmp.eq.s32.totalorder %s72, 0
      %p120 = por %p118, %p119
      %s122 = sadd.s32 %s121, 1
      %p125 = scmp.eq.s32.totalorder %s66, 1
      %p126 = scmp.ne.s32.totalorder %s121, %s123
      %p127 = scmp.eq.s32.totalorder %s66, 0
      %p128 = por %p126, %p127
      %p129 = scmp.ne.s32.totalorder %s121, %s123
      %p130 = scmp.eq.s32.totalorder %s71, 1
      %p131 = por %p129, %p130
      %p132 = scmp.ne.s32.totalorder %s123, %s124
      %p133 = scmp.eq.s32.totalorder %s71, 0
      %p134 = por %p132, %p133
      %p135 = scmp.ne.s32.totalorder %s123, %s124
      %p136 = scmp.eq.s32.totalorder %s72, 1
      %p137 = por %p135, %p136
      %p139 = scmp.ne.s32.totalorder %s124, %s138
      %p140 = scmp.eq.s32.totalorder %s72, 0
      %p141 = por %p139, %p140
      %s143 = sadd.s32 %s142, 1
      %p146 = scmp.eq.s32.totalorder %s66, 1
      %p147 = scmp.ne.s32.totalorder %s142, %s144
      %p148 = scmp.eq.s32.totalorder %s66, 0
      %p149 = por %p147, %p148
      %p150 = scmp.ne.s32.totalorder %s142, %s144
      %p151 = scmp.eq.s32.totalorder %s71, 1
      %p152 = por %p150, %p151
      %p153 = scmp.ne.s32.totalorder %s144, %s145
      %p154 = scmp.eq.s32.totalorder %s71, 0
      %p155 = por %p153, %p154
      %p156 = scmp.ne.s32.totalorder %s144, %s145
      %p157 = scmp.eq.s32.totalorder %s72, 1
      %p158 = por %p156, %p157
      %p160 = scmp.ne.s32.totalorder %s145, %s159
      %p161 = scmp.eq.s32.totalorder %s72, 0
      %p162 = por %p160, %p161
      %s164 = sadd.s32 %s163, 1
      %p167 = scmp.eq.s32.totalorder %s66, 1
      %p168 = scmp.ne.s32.totalorder %s163, %s165
      %p169 = scmp.eq.s32.totalorder %s66, 0
      %p170 = por %p168, %p169
      %p171 = scmp.ne.s32.totalorder %s163, %s165
      %p172 = scmp.eq.s32.totalorder %s71, 1
      %p173 = por %p171, %p172
      %p174 = scmp.ne.s32.totalorder %s165, %s166
      %p175 = scmp.eq.s32.totalorder %s71, 0
      %p176 = por %p174, %p175
      %p177 = scmp.ne.s32.totalorder %s165, %s166
      %p178 = scmp.eq.s32.totalorder %s72, 1
      %p179 = por %p177, %p178
      %p181 = scmp.ne.s32.totalorder %s166, %s180
      %p182 = scmp.eq.s32.totalorder %s72, 0
      %p183 = por %p181, %p182
      %s185 = sadd.s32 %s184, 1
      %p188 = scmp.eq.s32.totalorder %s66, 1
      %p189 = scmp.ne.s32.totalorder %s184, %s186
      %p190 = scmp.eq.s32.totalorder %s66, 0
      %p191 = por %p189, %p190
      %p192 = scmp.ne.s32.totalorder %s184, %s186
      %p193 = scmp.eq.s32.totalorder %s71, 1
      %p194 = por %p192, %p193
      %p195 = scmp.ne.s32.totalorder %s186, %s187
      %p196 = scmp.eq.s32.totalorder %s71, 0
      %p197 = por %p195, %p196
      %p198 = scmp.ne.s32.totalorder %s186, %s187
      %p199 = scmp.eq.s32.totalorder %s72, 1
      %p200 = por %p198, %p199
      %p202 = scmp.ne.s32.totalorder %s187, %s201
      %p203 = scmp.eq.s32.totalorder %s72, 0
      %p204 = por %p202, %p203
      %s206 = sadd.s32 %s205, 1
      %p209 = scmp.eq.s32.totalorder %s66, 1
      %p210 = scmp.ne.s32.totalorder %s205, %s207
      %p211 = scmp.eq.s32.totalorder %s66, 0
      %p212 = por %p210, %p211
      %p213 = scmp.ne.s32.totalorder %s205, %s207
      %p214 = scmp.eq.s32.totalorder %s71, 1
      %p215 = por %p213, %p214
      %p216 = scmp.ne.s32.totalorder %s207, %s208
      %p217 = scmp.eq.s32.totalorder %s71, 0
      %p218 = por %p216, %p217
      %p219 = scmp.ne.s32.totalorder %s207, %s208
      %p220 = scmp.eq.s32.totalorder %s72, 1
      %p221 = por %p219, %p220
      %p223 = scmp.ne.s32.totalorder %s208, %s222
      %p224 = scmp.eq.s32.totalorder %s72, 0
      %p225 = por %p223, %p224
      %s227 = sadd.s32 %s226, 1
      %p230 = scmp.eq.s32.totalorder %s66, 1
      %p231 = scmp.ne.s32.totalorder %s226, %s228
      %p232 = scmp.eq.s32.totalorder %s66, 0
      %p233 = por %p231, %p232
      %p234 = scmp.ne.s32.totalorder %s226, %s228
      %p235 = scmp.eq.s32.totalorder %s71, 1
      %p236 = por %p234, %p235
      %p237 = scmp.ne.s32.totalorder %s228, %s229
      %p238 = scmp.eq.s32.totalorder %s71, 0
      %p239 = por %p237, %p238
      %p240 = scmp.ne.s32.totalorder %s228, %s229
      %p241 = scmp.eq.s32.totalorder %s72, 1
      %p242 = por %p240, %p241
      %p244 = scmp.ne.s32.totalorder %s229, %s243
      %p245 = scmp.eq.s32.totalorder %s72, 0
      %p246 = por %p244, %p245
      %s248 = sadd.s32 %s247, 1
      %p251 = scmp.eq.s32.totalorder %s66, 1
      %p252 = scmp.ne.s32.totalorder %s247, %s249
      %p253 = scmp.eq.s32.totalorder %s66, 0
      %p254 = por %p252, %p253
      %p255 = scmp.ne.s32.totalorder %s247, %s249
      %p256 = scmp.eq.s32.totalorder %s71, 1
      %p257 = por %p255, %p256
      %p258 = scmp.ne.s32.totalorder %s249, %s250
      %p259 = scmp.eq.s32.totalorder %s71, 0
      %p260 = por %p258, %p259
      %p261 = scmp.ne.s32.totalorder %s249, %s250
      %p262 = scmp.eq.s32.totalorder %s72, 1
      %p263 = por %p261, %p262
      %p265 = scmp.ne.s32.totalorder %s250, %s264
      %p266 = scmp.eq.s32.totalorder %s72, 0
      %p267 = por %p265, %p266
      %s269 = sadd.s32 %s268, 1
      %p272 = scmp.eq.s32.totalorder %s66, 1
      %p273 = scmp.ne.s32.totalorder %s268, %s270
      %p274 = scmp.eq.s32.totalorder %s66, 0
      %p275 = por %p273, %p274
      %p276 = scmp.ne.s32.totalorder %s268, %s270
      %p277 = scmp.eq.s32.totalorder %s71, 1
      %p278 = por %p276, %p277
      %p279 = scmp.ne.s32.totalorder %s270, %s271
      %p280 = scmp.eq.s32.totalorder %s71, 0
      %p281 = por %p279, %p280
      %p282 = scmp.ne.s32.totalorder %s270, %s271
      %p283 = scmp.eq.s32.totalorder %s72, 1
      %p284 = por %p282, %p283
      %p286 = scmp.ne.s32.totalorder %s271, %s285
      %p287 = scmp.eq.s32.totalorder %s72, 0
      %p288 = por %p286, %p287
      %s290 = sadd.s32 %s289, 1
      %p293 = scmp.eq.s32.totalorder %s66, 1
      %p294 = scmp.ne.s32.totalorder %s289, %s291
      %p295 = scmp.eq.s32.totalorder %s66, 0
      %p296 = por %p294, %p295
      %p297 = scmp.ne.s32.totalorder %s289, %s291
      %p298 = scmp.eq.s32.totalorder %s71, 1
      %p299 = por %p297, %p298
      %p300 = scmp.ne.s32.totalorder %s291, %s292
      %p301 = scmp.eq.s32.totalorder %s71, 0
      %p302 = por %p300, %p301
      %p303 = scmp.ne.s32.totalorder %s291, %s292
      %p304 = scmp.eq.s32.totalorder %s72, 1
      %p305 = por %p303, %p304
      %p307 = scmp.ne.s32.totalorder %s292, %s306
      %p308 = scmp.eq.s32.totalorder %s72, 0
      %p309 = por %p307, %p308
      %s311 = sadd.s32 %s310, 1
      %p314 = scmp.eq.s32.totalorder %s66, 1
      %p315 = scmp.ne.s32.totalorder %s310, %s312
      %p316 = scmp.eq.s32.totalorder %s66, 0
      %p317 = por %p315, %p316
      %p318 = scmp.ne.s32.totalorder %s310, %s312
      %p319 = scmp.eq.s32.totalorder %s71, 1
      %p320 = por %p318, %p319
      %p321 = scmp.ne.s32.totalorder %s312, %s313
      %p322 = scmp.eq.s32.totalorder %s71, 0
      %p323 = por %p321, %p322
      %p324 = scmp.ne.s32.totalorder %s312, %s313
      %p325 = scmp.eq.s32.totalorder %s72, 1
      %p326 = por %p324, %p325
      %p328 = scmp.ne.s32.totalorder %s313, %s327
      %p329 = scmp.eq.s32.totalorder %s72, 0
      %p330 = por %p328, %p329
      %s332 = sadd.s32 %s331, 1
      %p335 = scmp.eq.s32.totalorder %s66, 1
      %p336 = scmp.ne.s32.totalorder %s331, %s333
      %p337 = scmp.eq.s32.totalorder %s66, 0
      %p338 = por %p336, %p337
      %p339 = scmp.ne.s32.totalorder %s331, %s333
      %p340 = scmp.eq.s32.totalorder %s71, 1
      %p341 = por %p339, %p340
      %p342 = scmp.ne.s32.totalorder %s333, %s334
      %p343 = scmp.eq.s32.totalorder %s71, 0
      %p344 = por %p342, %p343
      %p345 = scmp.ne.s32.totalorder %s333, %s334
      %p346 = scmp.eq.s32.totalorder %s72, 1
      %p347 = por %p345, %p346
      %p349 = scmp.ne.s32.totalorder %s334, %s348
      %p350 = scmp.eq.s32.totalorder %s72, 0
      %p351 = por %p349, %p350
      %s353 = sadd.s32 %s352, 1
      %p356 = scmp.eq.s32.totalorder %s66, 1
      %p357 = scmp.ne.s32.totalorder %s352, %s354
      %p358 = scmp.eq.s32.totalorder %s66, 0
      %p359 = por %p357, %p358
      %p360 = scmp.ne.s32.totalorder %s352, %s354
      %p361 = scmp.eq.s32.totalorder %s71, 1
      %p362 = por %p360, %p361
      %p363 = scmp.ne.s32.totalorder %s354, %s355
      %p364 = scmp.eq.s32.totalorder %s71, 0
      %p365 = por %p363, %p364
      %p366 = scmp.ne.s32.totalorder %s354, %s355
      %p367 = scmp.eq.s32.totalorder %s72, 1
      %p368 = por %p366, %p367
      %p370 = scmp.ne.s32.totalorder %s355, %s369
      %p371 = scmp.eq.s32.totalorder %s72, 0
      %p372 = por %p370, %p371
      %s374 = sadd.s32 %s373, 1
      %p377 = scmp.eq.s32.totalorder %s66, 1
      %p378 = scmp.ne.s32.totalorder %s373, %s375
      %p379 = scmp.eq.s32.totalorder %s66, 0
      %p380 = por %p378, %p379
      %p381 = scmp.ne.s32.totalorder %s373, %s375
      %p382 = scmp.eq.s32.totalorder %s71, 1
      %p383 = por %p381, %p382
      %p384 = scmp.ne.s32.totalorder %s375, %s376
      %p385 = scmp.eq.s32.totalorder %s71, 0
      %p386 = por %p384, %p385
      %p387 = scmp.ne.s32.totalorder %s375, %s376
      %p388 = scmp.eq.s32.totalorder %s72, 1
      %p389 = por %p387, %p388
      %p391 = scmp.ne.s32.totalorder %s376, %s390
      %p392 = scmp.eq.s32.totalorder %s72, 0
      %p393 = por %p391, %p392
      %s395 = sadd.s32 %s394, 1
      %p398 = scmp.eq.s32.totalorder %s66, 1
      %p399 = scmp.ne.s32.totalorder %s394, %s396
      %p400 = scmp.eq.s32.totalorder %s66, 0
      %p401 = por %p399, %p400
      %p402 = scmp.ne.s32.totalorder %s394, %s396
      %p403 = scmp.eq.s32.totalorder %s71, 1
      %p404 = por %p402, %p403
      %p405 = scmp.ne.s32.totalorder %s396, %s397
      %p406 = scmp.eq.s32.totalorder %s71, 0
      %p407 = por %p405, %p406
      %p408 = scmp.ne.s32.totalorder %s396, %s397
      %p409 = scmp.eq.s32.totalorder %s72, 1
      %p410 = por %p408, %p409
      %p412 = scmp.ne.s32.totalorder %s397, %s411
      %p413 = scmp.eq.s32.totalorder %s72, 0
      %p414 = por %p412, %p413
      %s416 = sadd.s32 %s415, 1
      %p419 = scmp.eq.s32.totalorder %s66, 1
      %p420 = scmp.ne.s32.totalorder %s415, %s417
      %p421 = scmp.eq.s32.totalorder %s66, 0
      %p422 = por %p420, %p421
      %p423 = scmp.ne.s32.totalorder %s415, %s417
      %p424 = scmp.eq.s32.totalorder %s71, 1
      %p425 = por %p423, %p424
      %p426 = scmp.ne.s32.totalorder %s417, %s418
      %p427 = scmp.eq.s32.totalorder %s71, 0
      %p428 = por %p426, %p427
      %p429 = scmp.ne.s32.totalorder %s417, %s418
      %p430 = scmp.eq.s32.totalorder %s72, 1
      %p431 = por %p429, %p430
      %p433 = scmp.ne.s32.totalorder %s418, %s432
      %p434 = scmp.eq.s32.totalorder %s72, 0
      %p435 = por %p433, %p434
      %s437 = sadd.s32 %s436, 1
      %p440 = scmp.eq.s32.totalorder %s66, 1
      %p441 = scmp.ne.s32.totalorder %s436, %s438
      %p442 = scmp.eq.s32.totalorder %s66, 0
      %p443 = por %p441, %p442
      %p444 = scmp.ne.s32.totalorder %s436, %s438
      %p445 = scmp.eq.s32.totalorder %s71, 1
      %p446 = por %p444, %p445
      %p447 = scmp.ne.s32.totalorder %s438, %s439
      %p448 = scmp.eq.s32.totalorder %s71, 0
      %p449 = por %p447, %p448
      %p450 = scmp.ne.s32.totalorder %s438, %s439
      %p451 = scmp.eq.s32.totalorder %s72, 1
      %p452 = por %p450, %p451
      %p454 = scmp.ne.s32.totalorder %s439, %s453
      %p455 = scmp.eq.s32.totalorder %s72, 0
      %p456 = por %p454, %p455
      %s458 = sadd.s32 %s457, 1
      %p461 = scmp.eq.s32.totalorder %s66, 1
      %p462 = scmp.ne.s32.totalorder %s457, %s459
      %p463 = scmp.eq.s32.totalorder %s66, 0
      %p464 = por %p462, %p463
      %p465 = scmp.ne.s32.totalorder %s457, %s459
      %p466 = scmp.eq.s32.totalorder %s71, 1
      %p467 = por %p465, %p466
      %p468 = scmp.ne.s32.totalorder %s459, %s460
      %p469 = scmp.eq.s32.totalorder %s71, 0
      %p470 = por %p468, %p469
      %p471 = scmp.ne.s32.totalorder %s459, %s460
      %p472 = scmp.eq.s32.totalorder %s72, 1
      %p473 = por %p471, %p472
      %p475 = scmp.ne.s32.totalorder %s460, %s474
      %p476 = scmp.eq.s32.totalorder %s72, 0
      %p477 = por %p475, %p476
      %s479 = sadd.s32 %s478, 1
      %p482 = scmp.eq.s32.totalorder %s66, 1
      %p483 = scmp.ne.s32.totalorder %s478, %s480
      %p484 = scmp.eq.s32.totalorder %s66, 0
      %p485 = por %p483, %p484
      %p486 = scmp.ne.s32.totalorder %s478, %s480
      %p487 = scmp.eq.s32.totalorder %s71, 1
      %p488 = por %p486, %p487
      %p489 = scmp.ne.s32.totalorder %s480, %s481
      %p490 = scmp.eq.s32.totalorder %s71, 0
      %p491 = por %p489, %p490
      %p492 = scmp.ne.s32.totalorder %s480, %s481
      %p493 = scmp.eq.s32.totalorder %s72, 1
      %p494 = por %p492, %p493
      %p496 = scmp.ne.s32.totalorder %s481, %s495
      %p497 = scmp.eq.s32.totalorder %s72, 0
      %p498 = por %p496, %p497
      %s500 = sadd.s32 %s499, 1
      %p503 = scmp.eq.s32.totalorder %s66, 1
      %p504 = scmp.ne.s32.totalorder %s499, %s501
      %p505 = scmp.eq.s32.totalorder %s66, 0
      %p506 = por %p504, %p505
      %p507 = scmp.ne.s32.totalorder %s499, %s501
      %p508 = scmp.eq.s32.totalorder %s71, 1
      %p509 = por %p507, %p508
      %p510 = scmp.ne.s32.totalorder %s501, %s502
      %p511 = scmp.eq.s32.totalorder %s71, 0
      %p512 = por %p510, %p511
      %p513 = scmp.ne.s32.totalorder %s501, %s502
      %p514 = scmp.eq.s32.totalorder %s72, 1
      %p515 = por %p513, %p514
      %p517 = scmp.ne.s32.totalorder %s502, %s516
      %p518 = scmp.eq.s32.totalorder %s72, 0
      %p519 = por %p517, %p518
      %s521 = sadd.s32 %s520, 1
      %p524 = scmp.eq.s32.totalorder %s66, 1
      %p525 = scmp.ne.s32.totalorder %s520, %s522
      %p526 = scmp.eq.s32.totalorder %s66, 0
      %p527 = por %p525, %p526
      %p528 = scmp.ne.s32.totalorder %s520, %s522
      %p529 = scmp.eq.s32.totalorder %s71, 1
      %p530 = por %p528, %p529
      %p531 = scmp.ne.s32.totalorder %s522, %s523
      %p532 = scmp.eq.s32.totalorder %s71, 0
      %p533 = por %p531, %p532
      %p534 = scmp.ne.s32.totalorder %s522, %s523
      %p535 = scmp.eq.s32.totalorder %s72, 1
      %p536 = por %p534, %p535
      %p538 = scmp.ne.s32.totalorder %s523, %s537
      %p539 = scmp.eq.s32.totalorder %s72, 0
      %p540 = por %p538, %p539
      %s542 = sadd.s32 %s541, 1
      %p545 = scmp.eq.s32.totalorder %s66, 1
      %p546 = scmp.ne.s32.totalorder %s541, %s543
      %p547 = scmp.eq.s32.totalorder %s66, 0
      %p548 = por %p546, %p547
      %p549 = scmp.ne.s32.totalorder %s541, %s543
      %p550 = scmp.eq.s32.totalorder %s71, 1
      %p551 = por %p549, %p550
      %p552 = scmp.ne.s32.totalorder %s543, %s544
      %p553 = scmp.eq.s32.totalorder %s71, 0
      %p554 = por %p552, %p553
      %p555 = scmp.ne.s32.totalorder %s543, %s544
      %p556 = scmp.eq.s32.totalorder %s72, 1
      %p557 = por %p555, %p556
      %p559 = scmp.ne.s32.totalorder %s544, %s558
      %p560 = scmp.eq.s32.totalorder %s72, 0
      %p561 = por %p559, %p560
      %s563 = sadd.s32 %s562, 1
      %p566 = scmp.eq.s32.totalorder %s66, 1
      %p567 = scmp.ne.s32.totalorder %s562, %s564
      %p568 = scmp.eq.s32.totalorder %s66, 0
      %p569 = por %p567, %p568
      %p570 = scmp.ne.s32.totalorder %s562, %s564
      %p571 = scmp.eq.s32.totalorder %s71, 1
      %p572 = por %p570, %p571
      %p573 = scmp.ne.s32.totalorder %s564, %s565
      %p574 = scmp.eq.s32.totalorder %s71, 0
      %p575 = por %p573, %p574
      %p576 = scmp.ne.s32.totalorder %s564, %s565
      %p577 = scmp.eq.s32.totalorder %s72, 1
      %p578 = por %p576, %p577
      %p580 = scmp.ne.s32.totalorder %s565, %s579
      %p581 = scmp.eq.s32.totalorder %s72, 0
      %p582 = por %p580, %p581
      %s584 = sadd.s32 %s583, 1
      %p587 = scmp.eq.s32.totalorder %s66, 1
      %p588 = scmp.ne.s32.totalorder %s583, %s585
      %p589 = scmp.eq.s32.totalorder %s66, 0
      %p590 = por %p588, %p589
      %p591 = scmp.ne.s32.totalorder %s583, %s585
      %p592 = scmp.eq.s32.totalorder %s71, 1
      %p593 = por %p591, %p592
      %p594 = scmp.ne.s32.totalorder %s585, %s586
      %p595 = scmp.eq.s32.totalorder %s71, 0
      %p596 = por %p594, %p595
      %p597 = scmp.ne.s32.totalorder %s585, %s586
      %p598 = scmp.eq.s32.totalorder %s72, 1
      %p599 = por %p597, %p598
      %p601 = scmp.ne.s32.totalorder %s586, %s600
      %p602 = scmp.eq.s32.totalorder %s72, 0
      %p603 = por %p601, %p602
      %s605 = sadd.s32 %s604, 1
      %p608 = scmp.eq.s32.totalorder %s66, 1
      %p609 = scmp.ne.s32.totalorder %s604, %s606
      %p610 = scmp.eq.s32.totalorder %s66, 0
      %p611 = por %p609, %p610
      %p612 = scmp.ne.s32.totalorder %s604, %s606
      %p613 = scmp.eq.s32.totalorder %s71, 1
      %p614 = por %p612, %p613
      %p615 = scmp.ne.s32.totalorder %s606, %s607
      %p616 = scmp.eq.s32.totalorder %s71, 0
      %p617 = por %p615, %p616
      %p618 = scmp.ne.s32.totalorder %s606, %s607
      %p619 = scmp.eq.s32.totalorder %s72, 1
      %p620 = por %p618, %p619
      %p622 = scmp.ne.s32.totalorder %s607, %s621
      %p623 = scmp.eq.s32.totalorder %s72, 0
      %p624 = por %p622, %p623
      %s626 = sadd.s32 %s625, 1
      %p629 = scmp.eq.s32.totalorder %s66, 1
      %p630 = scmp.ne.s32.totalorder %s625, %s627
      %p631 = scmp.eq.s32.totalorder %s66, 0
      %p632 = por %p630, %p631
      %p633 = scmp.ne.s32.totalorder %s625, %s627
      %p634 = scmp.eq.s32.totalorder %s71, 1
      %p635 = por %p633, %p634
      %p636 = scmp.ne.s32.totalorder %s627, %s628
      %p637 = scmp.eq.s32.totalorder %s71, 0
      %p638 = por %p636, %p637
      %p639 = scmp.ne.s32.totalorder %s627, %s628
      %p640 = scmp.eq.s32.totalorder %s72, 1
      %p641 = por %p639, %p640
      %p643 = scmp.ne.s32.totalorder %s628, %s642
      %p644 = scmp.eq.s32.totalorder %s72, 0
      %p645 = por %p643, %p644
      %s647 = sadd.s32 %s646, 1
      %p650 = scmp.eq.s32.totalorder %s66, 1
      %p651 = scmp.ne.s32.totalorder %s646, %s648
      %p652 = scmp.eq.s32.totalorder %s66, 0
      %p653 = por %p651, %p652
      %p654 = scmp.ne.s32.totalorder %s646, %s648
      %p655 = scmp.eq.s32.totalorder %s71, 1
      %p656 = por %p654, %p655
      %p657 = scmp.ne.s32.totalorder %s648, %s649
      %p658 = scmp.eq.s32.totalorder %s71, 0
      %p659 = por %p657, %p658
      %p660 = scmp.ne.s32.totalorder %s648, %s649
      %p661 = scmp.eq.s32.totalorder %s72, 1
      %p662 = por %p660, %p661
      %p664 = scmp.ne.s32.totalorder %s649, %s663
      %p665 = scmp.eq.s32.totalorder %s72, 0
      %p666 = por %p664, %p665
      %s668 = sadd.s32 %s667, 1
      %p671 = scmp.eq.s32.totalorder %s66, 1
      %p672 = scmp.ne.s32.totalorder %s667, %s669
      %p673 = scmp.eq.s32.totalorder %s66, 0
      %p674 = por %p672, %p673
      %p675 = scmp.ne.s32.totalorder %s667, %s669
      %p676 = scmp.eq.s32.totalorder %s71, 1
      %p677 = por %p675, %p676
      %p678 = scmp.ne.s32.totalorder %s669, %s670
      %p679 = scmp.eq.s32.totalorder %s71, 0
      %p680 = por %p678, %p679
      %p681 = scmp.ne.s32.totalorder %s669, %s670
      %p682 = scmp.eq.s32.totalorder %s72, 1
      %p683 = por %p681, %p682
      %p685 = scmp.ne.s32.totalorder %s670, %s684
      %p686 = scmp.eq.s32.totalorder %s72, 0
      %p687 = por %p685, %p686
      %s688 = ssub.s32 %s66, %s73
      %p689 = scmp.eq.s32.totalorder %s688, 0
      %s691 = sadd.s32 %s690, 1
      %s692 = scalar_select %p689, %s690, %s691
      %p695 = pneg %p689
      %p696 = scmp.eq.s32.totalorder %s66, 1
      %p697 = por %p695, %p696
      %p698 = scmp.ne.s32.totalorder %s690, %s693
      %p699 = scmp.eq.s32.totalorder %s66, 0
      %p700 = por %p698, %p699
      %p701 = scmp.ne.s32.totalorder %s690, %s693
      %p702 = scmp.eq.s32.totalorder %s71, 1
      %p703 = por %p701, %p702
      %p704 = scmp.ne.s32.totalorder %s693, %s694
      %p705 = scmp.eq.s32.totalorder %s71, 0
      %p706 = por %p704, %p705
      %p707 = scmp.ne.s32.totalorder %s693, %s694
      %p708 = scmp.eq.s32.totalorder %s72, 1
      %p709 = por %p707, %p708
      %p711 = scmp.ne.s32.totalorder %s694, %s710
      %p712 = scmp.eq.s32.totalorder %s72, 0
      %p713 = por %p711, %p712
      %p714 = scmp.le.s32.totalorder 1, %s66
      %p715 = scmp.lt.s32.totalorder %s66, 3
      %p716 = pnand %p714, %p715
      %p717 = pneg %p716
      // Predicated region
      $region9: #{fwd.1} parent=5 // pred_check
        _
      $region10: #{fwd.1} parent=5 // pred_check_branch
        %719 = sbr.rel (%p716) target = $region12
      $region11: #{fwd.1} parent=5 // pred_region
        %s720 = ssub.s32 %s66, 1
        // Predicated region
        $region13: #{fwd.1} parent=11 // pred_check
          %p721 = pneg %p87
        $region14: #{fwd.1} parent=11 // pred_check_branch
          %723 = sbr.rel (%p721) target = $region16
        $region15: #{fwd.1} parent=11 // pred_region
          %725 = vsyncadd [#allocation3], 0
          %s727 = sshll.u32 %s1, 4
          %s728 = int_to_ptr.vmem [resolvable:$true] %s727
          %730 = dma.vmem_to_smem %s728, 16, [#allocation2], [#allocation3]
        $region16: #{fwd.1} parent=11 // pred_fallthru
          _
        // Predicated region
        $region17: #{fwd.1} parent=11 // pred_check
          %p731 = pneg %p134
        $region18: #{fwd.1} parent=11 // pred_check_branch
          %733 = sbr.rel (%p731) target = $region20
        $region19: #{fwd.1} parent=11 // pred_region
          _
        $region20: #{fwd.1} parent=11 // pred_fallthru
          _
        // Predicated region
        $region21: #{fwd.1} parent=11 // pred_check
          %p734 = pneg %p155
        $region22: #{fwd.1} parent=11 // pred_check_branch
          %736 = sbr.rel (%p734) target = $region24
        $region23: #{fwd.1} parent=11 // pred_region
          _
        $region24: #{fwd.1} parent=11 // pred_fallthru
          _
        // Predicated region
        $region25: #{fwd.1} parent=11 // pred_check
          %p737 = pneg %p176
        $region26: #{fwd.1} parent=11 // pred_check_branch
          %739 = sbr.rel (%p737) target = $region28
        $region27: #{fwd.1} parent=11 // pred_region
          _
        $region28: #{fwd.1} parent=11 // pred_fallthru
          _
        // Predicated region
        $region29: #{fwd.1} parent=11 // pred_check
          %p740 = pneg %p197
        $region30: #{fwd.1} parent=11 // pred_check_branch
          %742 = sbr.rel (%p740) target = $region32
        $region31: #{fwd.1} parent=11 // pred_region
          _
        $region32: #{fwd.1} parent=11 // pred_fallthru
          _
        // Predicated region
        $region33: #{fwd.1} parent=11 // pred_check
          %p743 = pneg %p218
        $region34: #{fwd.1} parent=11 // pred_check_branch
          %745 = sbr.rel (%p743) target = $region36
        $region35: #{fwd.1} parent=11 // pred_region
          _
        $region36: #{fwd.1} parent=11 // pred_fallthru
          _
        // Predicated region
        $region37: #{fwd.1} parent=11 // pred_check
          %p746 = pneg %p239
        $region38: #{fwd.1} parent=11 // pred_check_branch
          %748 = sbr.rel (%p746) target = $region40
        $region39: #{fwd.1} parent=11 // pred_region
          _
        $region40: #{fwd.1} parent=11 // pred_fallthru
          _
        // Predicated region
        $region41: #{fwd.1} parent=11 // pred_check
          %p749 = pneg %p260
        $region42: #{fwd.1} parent=11 // pred_check_branch
          %751 = sbr.rel (%p749) target = $region44
        $region43: #{fwd.1} parent=11 // pred_region
          _
        $region44: #{fwd.1} parent=11 // pred_fallthru
          _
        // Predicated region
        $region45: #{fwd.1} parent=11 // pred_check
          %p752 = pneg %p281
        $region46: #{fwd.1} parent=11 // pred_check_branch
          %754 = sbr.rel (%p752) target = $region48
        $region47: #{fwd.1} parent=11 // pred_region
          _
        $region48: #{fwd.1} parent=11 // pred_fallthru
          _
        // Predicated region
        $region49: #{fwd.1} parent=11 // pred_check
          %p755 = pneg %p302
        $region50: #{fwd.1} parent=11 // pred_check_branch
          %757 = sbr.rel (%p755) target = $region52
        $region51: #{fwd.1} parent=11 // pred_region
          _
        $region52: #{fwd.1} parent=11 // pred_fallthru
          _
        // Predicated region
        $region53: #{fwd.1} parent=11 // pred_check
          %p758 = pneg %p323
        $region54: #{fwd.1} parent=11 // pred_check_branch
          %760 = sbr.rel (%p758) target = $region56
        $region55: #{fwd.1} parent=11 // pred_region
          _
        $region56: #{fwd.1} parent=11 // pred_fallthru
          _
        // Predicated region
        $region57: #{fwd.1} parent=11 // pred_check
          %p761 = pneg %p344
        $region58: #{fwd.1} parent=11 // pred_check_branch
          %763 = sbr.rel (%p761) target = $region60
        $region59: #{fwd.1} parent=11 // pred_region
          _
        $region60: #{fwd.1} parent=11 // pred_fallthru
          _
        // Predicated region
        $region61: #{fwd.1} parent=11 // pred_check
          %p764 = pneg %p365
        $region62: #{fwd.1} parent=11 // pred_check_branch
          %766 = sbr.rel (%p764) target = $region64
        $region63: #{fwd.1} parent=11 // pred_region
          _
        $region64: #{fwd.1} parent=11 // pred_fallthru
          _
        // Predicated region
        $region65: #{fwd.1} parent=11 // pred_check
          %p767 = pneg %p386
        $region66: #{fwd.1} parent=11 // pred_check_branch
          %769 = sbr.rel (%p767) target = $region68
        $region67: #{fwd.1} parent=11 // pred_region
          _
        $region68: #{fwd.1} parent=11 // pred_fallthru
          _
        // Predicated region
        $region69: #{fwd.1} parent=11 // pred_check
          %p770 = pneg %p407
        $region70: #{fwd.1} parent=11 // pred_check_branch
          %772 = sbr.rel (%p770) target = $region72
        $region71: #{fwd.1} parent=11 // pred_region
          _
        $region72: #{fwd.1} parent=11 // pred_fallthru
          _
        // Predicated region
        $region73: #{fwd.1} parent=11 // pred_check
          %p773 = pneg %p428
        $region74: #{fwd.1} parent=11 // pred_check_branch
          %775 = sbr.rel (%p773) target = $region76
        $region75: #{fwd.1} parent=11 // pred_region
          _
        $region76: #{fwd.1} parent=11 // pred_fallthru
          _
        // Predicated region
        $region77: #{fwd.1} parent=11 // pred_check
          %p776 = pneg %p449
        $region78: #{fwd.1} parent=11 // pred_check_branch
          %778 = sbr.rel (%p776) target = $region80
        $region79: #{fwd.1} parent=11 // pred_region
          _
        $region80: #{fwd.1} parent=11 // pred_fallthru
          _
        // Predicated region
        $region81: #{fwd.1} parent=11 // pred_check
          %p779 = pneg %p470
        $region82: #{fwd.1} parent=11 // pred_check_branch
          %781 = sbr.rel (%p779) target = $region84
        $region83: #{fwd.1} parent=11 // pred_region
          _
        $region84: #{fwd.1} parent=11 // pred_fallthru
          _
        // Predicated region
        $region85: #{fwd.1} parent=11 // pred_check
          %p782 = pneg %p491
        $region86: #{fwd.1} parent=11 // pred_check_branch
          %784 = sbr.rel (%p782) target = $region88
        $region87: #{fwd.1} parent=11 // pred_region
          _
        $region88: #{fwd.1} parent=11 // pred_fallthru
          _
        // Predicated region
        $region89: #{fwd.1} parent=11 // pred_check
          %p785 = pneg %p512
        $region90: #{fwd.1} parent=11 // pred_check_branch
          %787 = sbr.rel (%p785) target = $region92
        $region91: #{fwd.1} parent=11 // pred_region
          _
        $region92: #{fwd.1} parent=11 // pred_fallthru
          _
        // Predicated region
        $region93: #{fwd.1} parent=11 // pred_check
          %p788 = pneg %p533
        $region94: #{fwd.1} parent=11 // pred_check_branch
          %790 = sbr.rel (%p788) target = $region96
        $region95: #{fwd.1} parent=11 // pred_region
          _
        $region96: #{fwd.1} parent=11 // pred_fallthru
          _
        // Predicated region
        $region97: #{fwd.1} parent=11 // pred_check
          %p791 = pneg %p554
        $region98: #{fwd.1} parent=11 // pred_check_branch
          %793 = sbr.rel (%p791) target = $region100
        $region99: #{fwd.1} parent=11 // pred_region
          _
        $region100: #{fwd.1} parent=11 // pred_fallthru
          _
        // Predicated region
        $region101: #{fwd.1} parent=11 // pred_check
          %p794 = pneg %p575
        $region102: #{fwd.1} parent=11 // pred_check_branch
          %796 = sbr.rel (%p794) target = $region104
        $region103: #{fwd.1} parent=11 // pred_region
          _
        $region104: #{fwd.1} parent=11 // pred_fallthru
          _
        // Predicated region
        $region105: #{fwd.1} parent=11 // pred_check
          %p797 = pneg %p596
        $region106: #{fwd.1} parent=11 // pred_check_branch
          %799 = sbr.rel (%p797) target = $region108
        $region107: #{fwd.1} parent=11 // pred_region
          _
        $region108: #{fwd.1} parent=11 // pred_fallthru
          _
        // Predicated region
        $region109: #{fwd.1} parent=11 // pred_check
          %p800 = pneg %p617
        $region110: #{fwd.1} parent=11 // pred_check_branch
          %802 = sbr.rel (%p800) target = $region112
        $region111: #{fwd.1} parent=11 // pred_region
          _
        $region112: #{fwd.1} parent=11 // pred_fallthru
          _
        // Predicated region
        $region113: #{fwd.1} parent=11 // pred_check
          %p803 = pneg %p638
        $region114: #{fwd.1} parent=11 // pred_check_branch
          %805 = sbr.rel (%p803) target = $region116
        $region115: #{fwd.1} parent=11 // pred_region
          _
        $region116: #{fwd.1} parent=11 // pred_fallthru
          _
        // Predicated region
        $region117: #{fwd.1} parent=11 // pred_check
          %p806 = pneg %p659
        $region118: #{fwd.1} parent=11 // pred_check_branch
          %808 = sbr.rel (%p806) target = $region120
        $region119: #{fwd.1} parent=11 // pred_region
          _
        $region120: #{fwd.1} parent=11 // pred_fallthru
          _
        // Predicated region
        $region121: #{fwd.1} parent=11 // pred_check
          %p809 = pneg %p680
        $region122: #{fwd.1} parent=11 // pred_check_branch
          %811 = sbr.rel (%p809) target = $region124
        $region123: #{fwd.1} parent=11 // pred_region
          _
        $region124: #{fwd.1} parent=11 // pred_fallthru
          _
      $region12: #{fwd.1} parent=5 // pred_fallthru
        _
      %p812 = scmp.lt.s32.totalorder %s66, 2
      // Predicated region
      $region125: #{fwd.1} parent=5 // pred_check
        %p813 = pneg %p812
      $region126: #{fwd.1} parent=5 // pred_check_branch
        %815 = sbr.rel (%p813) target = $region128
      $region127: #{fwd.1} parent=5 // pred_region
        // Predicated region
        $region129: #{fwd.1} parent=127 // pred_check
          %p816 = pneg %p107
        $region130: #{fwd.1} parent=127 // pred_check_branch
          %818 = sbr.rel (%p816) target = $region132
        $region131: #{fwd.1} parent=127 // pred_region
          %s819 = smul.u32 2, %s66
          %p820 = scmp.lt.s32.totalorder %s819, 3
          %s821 = scalar_select %p820, %s819, 3
          %s822 = smul.addr %s821, 8
          %s823 = scalar_lea.vmem %s3, %s822
          %s824 = smul.u32 2, %s66
        $region132: #{fwd.1} parent=127 // pred_fallthru
          _
      $region128: #{fwd.1} parent=5 // pred_fallthru
        _
      %p825 = scmp.le.s32.totalorder 1, %s66
      %p826 = scmp.lt.s32.totalorder %s66, 3
      %p827 = pnand %p825, %p826
      %p828 = pneg %p827
      // Predicated region
      $region133: #{fwd.1} parent=5 // pred_check
        _
      $region134: #{fwd.1} parent=5 // pred_check_branch
        %830 = sbr.rel (%p827) target = $region136
      $region135: #{fwd.1} parent=5 // pred_region
        %s831 = ssub.s32 %s66, 1
        // Predicated region
        $region137: #{fwd.1} parent=135 // pred_check
          %p832 = pneg %p87
        $region138: #{fwd.1} parent=135 // pred_check_branch
          %834 = sbr.rel (%p832) target = $region140
        $region139: #{fwd.1} parent=135 // pred_region
          %836 = dma.done [#allocation3], 16
        $region140: #{fwd.1} parent=135 // pred_fallthru
          _
        %837 = sfence
        %p838 = pneg %p87
        %p839 = pneg %p84
        %s840 = smul.u32 2, %s71
        %p841 = scmp.lt.s32.totalorder %s840, 3
        %s842 = scalar_select %p841, %s840, 3
        %s843 = smul.addr %s842, 8
        %s844 = scalar_lea.vmem %s3, %s843
        %p845 = pneg %p113
        %p846 = pneg %p110
        %p847 = pneg %p134
        %p848 = pneg %p131
        %p849 = pneg %p155
        %p850 = pneg %p152
        %p851 = pneg %p176
        %p852 = pneg %p173
        %p853 = pneg %p197
        %p854 = pneg %p194
        %p855 = pneg %p218
        %p856 = pneg %p215
        %p857 = pneg %p239
        %p858 = pneg %p236
        %p859 = pneg %p260
        %p860 = pneg %p257
        %p861 = pneg %p281
        %p862 = pneg %p278
        %p863 = pneg %p302
        %p864 = pneg %p299
        %p865 = pneg %p323
        %p866 = pneg %p320
        %p867 = pneg %p344
        %p868 = pneg %p341
        %p869 = pneg %p365
        %p870 = pneg %p362
        %p871 = pneg %p386
        %p872 = pneg %p383
        %p873 = pneg %p407
        %p874 = pneg %p404
        %p875 = pneg %p428
        %p876 = pneg %p425
        %p877 = pneg %p449
        %p878 = pneg %p446
        %p879 = pneg %p470
        %p880 = pneg %p467
        %p881 = pneg %p491
        %p882 = pneg %p488
        %p883 = pneg %p512
        %p884 = pneg %p509
        %p885 = pneg %p533
        %p886 = pneg %p530
        %p887 = pneg %p554
        %p888 = pneg %p551
        %p889 = pneg %p575
        %p890 = pneg %p572
        %p891 = pneg %p596
        %p892 = pneg %p593
        %p893 = pneg %p617
        %p894 = pneg %p614
        %p895 = pneg %p638
        %p896 = pneg %p635
        %p897 = pneg %p659
        %p898 = pneg %p656
        %p899 = pneg %p680
        %p900 = pneg %p677
        %p901 = pneg %p706
        %p902 = pneg %p703
        %s903 = smul.u32 2, %s71
        %p904 = scmp.lt.s32.totalorder %s903, 3
        %s905 = scalar_select %p904, %s903, 3
        %s906 = smul.addr %s905, 8
        %s907 = scalar_lea.vmem %s59, %s906
        %s908 = smul.u32 2, %s71
        %p909 = scmp.lt.s32.totalorder %s908, 3
        %s910 = scalar_select %p909, %s908, 3
        %s911 = smul.addr %s910, 8
        %s912 = scalar_lea.vmem %s3, %s911
        %s913 = smul.u32 2, %s71
        %s914 = smul.u32 2, %s71
        %p915 = scmp.lt.s32.totalorder %s914, 3
        %s916 = scalar_select %p915, %s914, 3
        %s917 = smul.addr %s916, 8
        %s918 = scalar_lea.vmem %s59, %s917
        %s919 = smul.u32 2, %s71
        %v920 = vld [vmem:[%s912] sm:$0xff]
        %v921 = vld [vmem:[%s912 + $0x8] sm:$0xff]
        %v922 = vld [vmem:[%s7] sm:$0xff]
        %v923 = vld [vmem:[%s7 + $0x8] sm:$0xff]
        %v924 = vld [vmem:[%s7 + $0x10] sm:$0x1]
        %v925 = vld [vmem:[%s9] sm:$0x1]
        %v927 = vperm.slane %v925, 0
        %vm929 = vcmask 138240
        %v931 = vsel %vm929, %v920, 0
        %v934 = vsel %vm929, %v921, 0
        %vm936 = vcmask 1040384
        %v938 = vsel %vm936, %v924, 0
        %940 = vmatpush.msra.mxu0 0.0
        %941 = vmatpush.msra.mxu0 0.0
        %942 = vmatpush.msra.mxu0 0.0
        %943 = vmatpush.msra.mxu0 0.0
        %944 = vmatpush.msra.mxu0 0.0
        %945 = vmatpush.msra.mxu0 0.0
        %946 = vmatpush.msra.mxu0 0.0
        %947 = vmatpush.msra.mxu0 0.0
        %948 = vmatpush.msra.mxu0 0.0
        %949 = vmatpush.msra.mxu0 0.0
        %950 = vmatpush.msra.mxu0 0.0
        %951 = vmatpush.msra.mxu0 0.0
        %952 = vmatpush.msra.mxu0 0.0
        %953 = vmatpush.msra.mxu0 %v938
        %954 = vmatpush.msra.mxu0 %v923
        %955 = vmatpush.msra.mxu0 %v922
        %956 = vmatmul.f32.gmra.mxu0 %v931
        %v957 = vpop.f32.mrf.mxu0
        %v958 = vadd.f32 %v927, %v957
        %959 = vmatmul.f32.gmra.mxu0 %v934
        %v960 = vpop.f32.mrf.mxu0
        %v961 = vadd.f32 %v927, %v960
        %962 = vdwg.mxu0
        %s963 = sld [smem:[#allocation2]]
        %vm964 = vcmp.ge.f32.partialorder %v958, 0.0
        %vm965 = vcmp.ge.f32.partialorder %v961, 0.0
        %v966 = vstv %s963
        %v967 = vmul.f32 %v966, %v958
        %v968 = vmul.f32 %v966, %v961
        %v969 = vsel %vm964, %v958, %v967
        %v970 = vsel %vm965, %v961, %v968
        %v971 = vld [vmem:[%s11] sm:$0xff]
        %v972 = vld [vmem:[%s11 + $0x8] sm:$0xff]
        %v973 = vld [vmem:[%s11 + $0x10] sm:$0xff]
        %v974 = vld [vmem:[%s11 + $0x18] sm:$0xff]
        %v975 = vld [vmem:[%s13] sm:$0x1]
        %v977 = vperm.slane %v975, 0
        %vm979 = vcmask 261120
        %v981 = vsel %vm979, %v969, 0
        %v984 = vsel %vm979, %v970, 0
        %986 = vmatpush.msra.mxu0 0.0
        %987 = vmatpush.msra.mxu0 0.0
        %988 = vmatpush.msra.mxu0 0.0
        %989 = vmatpush.msra.mxu0 0.0
        %990 = vmatpush.msra.mxu0 0.0
        %991 = vmatpush.msra.mxu0 0.0
        %992 = vmatpush.msra.mxu0 0.0
        %993 = vmatpush.msra.mxu0 0.0
        %994 = vmatpush.msra.mxu0 0.0
        %995 = vmatpush.msra.mxu0 0.0
        %996 = vmatpush.msra.mxu0 0.0
        %997 = vmatpush.msra.mxu0 0.0
        %998 = vmatpush.msra.mxu0 %v974
        %999 = vmatpush.msra.mxu0 %v973
        %1000 = vmatpush.msra.mxu0 %v972
        %1001 = vmatpush.msra.mxu0 %v971
        %1002 = vmatmul.f32.gmra.mxu0 %v981
        %v1003 = vpop.f32.mrf.mxu0
        %v1004 = vadd.f32 %v977, %v1003
        %1005 = vmatmul.f32.gmra.mxu0 %v984
        %v1006 = vpop.f32.mrf.mxu0
        %v1007 = vadd.f32 %v977, %v1006
        %1008 = vdwg.mxu0
        %s1009 = sld [smem:[#allocation2 + $0x1]]
        %vm1010 = vcmp.ge.f32.partialorder %v1004, 0.0
        %vm1011 = vcmp.ge.f32.partialorder %v1007, 0.0
        %v1012 = vstv %s1009
        %v1013 = vmul.f32 %v1012, %v1004
        %v1014 = vmul.f32 %v1012, %v1007
        %v1015 = vsel %vm1010, %v1004, %v1013
        %v1016 = vsel %vm1011, %v1007, %v1014
        %v1017 = vld [vmem:[%s5] sm:$0xff]
        %v1018 = vld [vmem:[%s5 + $0x8] sm:$0xff]
        %v1019 = vld [vmem:[%s5 + $0x10] sm:$0xff]
        %v1020 = vld [vmem:[%s5 + $0x18] sm:$0xff]
        %v1021 = vld [vmem:[%s5 + $0x20] sm:$0xff]
        %v1022 = vld [vmem:[%s5 + $0x28] sm:$0xff]
        %v1023 = vld [vmem:[%s5 + $0x30] sm:$0xff]
        %v1024 = vld [vmem:[%s5 + $0x38] sm:$0xff]
        %v1025 = vld [vmem:[%s5 + $0x40] sm:$0xff]
        %v1026 = vld [vmem:[%s5 + $0x48] sm:$0xff]
        %v1027 = vld [vmem:[%s5 + $0x50] sm:$0xff]
        %v1028 = vld [vmem:[%s5 + $0x58] sm:$0xff]
        %v1029 = vld [vmem:[%s5 + $0x60] sm:$0xff]
        %v1030 = vld [vmem:[%s5 + $0x68] sm:$0xff]
        %v1031 = vld [vmem:[%s5 + $0x70] sm:$0xff]
        %v1032 = vld [vmem:[%s5 + $0x78] sm:$0xff]
        %v1033 = vld [vmem:[%s5 + $0x80] sm:$0xff]
        %v1034 = vld [vmem:[%s5 + $0x88] sm:$0xff]
        %v1035 = vld [vmem:[%s5 + $0x90] sm:$0xff]
        %v1036 = vld [vmem:[%s5 + $0x98] sm:$0xff]
        %v1037 = vld [vmem:[%s5 + $0xa0] sm:$0xff]
        %v1038 = vld [vmem:[%s5 + $0xa8] sm:$0xff]
        %v1039 = vld [vmem:[%s5 + $0xb0] sm:$0xff]
        %v1040 = vld [vmem:[%s5 + $0xb8] sm:$0xff]
        %v1041 = vld [vmem:[%s5 + $0xc0] sm:$0xff]
        %v1042 = vld [vmem:[%s5 + $0xc8] sm:$0xff]
        %v1043 = vld [vmem:[%s5 + $0xd0] sm:$0xff]
        %v1044 = vld [vmem:[%s5 + $0xd8] sm:$0xff]
        %v1045 = vld [vmem:[%s5 + $0xe0] sm:$0xff]
        %v1046 = vld [vmem:[%s5 + $0xe8] sm:$0xff]
        %v1047 = vld [vmem:[%s5 + $0xf0] sm:$0xff]
        %v1048 = vld [vmem:[%s5 + $0xf8] sm:$0xff]
        %v1049 = vld [vmem:[%s15] sm:$0x1]
        %v1050 = vld [vmem:[%s17] sm:$0x1]
        %v1051 = vsel %vm979, %v1015, 0.0
        %1052 = vadd.xlane.f32.xlu0 %v1051
        %v1053 = vpop.xlane.xlu0 %1052
        %v1054 = vsel %vm979, %v1016, 0.0
        %1055 = vadd.xlane.f32.xlu0 %v1054
        %v1056 = vpop.xlane.xlu0 %1055
        %v1057 = vrcp.pop 32.0
        %v1058 = vmul.f32 32.0, %v1057
        %v1059 = vsub.f32 1.0, %v1058
        %v1060 = vmul.f32 %v1057, %v1059
        %v1061 = vadd.f32 %v1057, %v1060
        %vm1062 = vweird.f32 %v1057
        %v1063 = vsel %vm1062, %v1057, %v1061
        %v1064 = vmul.f32 %v1053, %v1063
        %v1065 = vmul.f32 %v1056, %v1063
        %v1066 = vsub.f32 %v1015, %v1064
        %v1067 = vsub.f32 %v1016, %v1065
        %v1068 = vmul.f32 %v1066, %v1066
        %v1069 = vmul.f32 %v1067, %v1067
        %v1070 = vsel %vm979, %v1068, 0.0
        %1071 = vadd.xlane.f32.xlu0 %v1070
        %v1072 = vpop.xlane.xlu0 %1071
        %v1073 = vsel %vm979, %v1069, 0.0
        %1074 = vadd.xlane.f32.xlu0 %v1073
        %v1075 = vpop.xlane.xlu0 %1074
        %v1076 = vmul.f32 %v1072, %v1063
        %v1077 = vmul.f32 %v1075, %v1063
        %v1078 = vadd.f32 %v1076, 1e-05
        %v1079 = vadd.f32 %v1077, 1e-05
        %v1080 = vrsqrt.pop %v1078
        %v1081 = vmul.f32 %v1080, %v1078
        %v1082 = vmul.f32 %v1081, %v1080
        %v1083 = vmul.f32 0.5, %v1082
        %v1084 = vsub.f32 1.5, %v1083
        %v1085 = vmul.f32 %v1080, %v1084
        %vm1086 = vweird.f32 %v1078
        %vm1087 = vweird.f32 %v1080
        %vm1088 = vmor %vm1086, %vm1087
        %v1089 = vsel %vm1088, %v1080, %v1085
        %v1090 = vrsqrt.pop %v1079
        %v1091 = vmul.f32 %v1090, %v1079
        %v1092 = vmul.f32 %v1091, %v1090
        %v1093 = vmul.f32 0.5, %v1092
        %v1094 = vsub.f32 1.5, %v1093
        %v1095 = vmul.f32 %v1090, %v1094
        %vm1096 = vweird.f32 %v1079
        %vm1097 = vweird.f32 %v1090
        %vm1098 = vmor %vm1096, %vm1097
        %v1099 = vsel %vm1098, %v1090, %v1095
        %v1100 = vmul.f32 %v1066, %v1089
        %v1101 = vmul.f32 %v1067, %v1099
        %v1103 = vperm.slane %v1049, 0
        %v1105 = vmul.f32 %v1100, %v1103
        %v1106 = vmul.f32 %v1101, %v1103
        %v1108 = vperm.slane %v1050, 0
        %v1110 = vadd.f32 %v1105, %v1108
        %v1111 = vadd.f32 %v1106, %v1108
        %v1112 = vld [vmem:[%s19] sm:$0xff]
        %v1113 = vld [vmem:[%s19 + $0x8] sm:$0xff]
        %v1114 = vld [vmem:[%s19 + $0x10] sm:$0xff]
        %v1115 = vld [vmem:[%s19 + $0x18] sm:$0xff]
        %v1116 = vld [vmem:[%s21] sm:$0x1]
        %v1118 = vperm.slane %v1116, 0
        %v1121 = vsel %vm979, %v1110, 0
        %v1124 = vsel %vm979, %v1111, 0
        %1126 = vmatpush.msra.mxu0 0.0
        %1127 = vmatpush.msra.mxu0 0.0
        %1128 = vmatpush.msra.mxu0 0.0
        %1129 = vmatpush.msra.mxu0 0.0
        %1130 = vmatpush.msra.mxu0 0.0
        %1131 = vmatpush.msra.mxu0 0.0
        %1132 = vmatpush.msra.mxu0 0.0
        %1133 = vmatpush.msra.mxu0 0.0
        %1134 = vmatpush.msra.mxu0 0.0
        %1135 = vmatpush.msra.mxu0 0.0
        %1136 = vmatpush.msra.mxu0 0.0
        %1137 = vmatpush.msra.mxu0 0.0
        %1138 = vmatpush.msra.mxu0 %v1115
        %1139 = vmatpush.msra.mxu0 %v1114
        %1140 = vmatpush.msra.mxu0 %v1113
        %1141 = vmatpush.msra.mxu0 %v1112
        %1142 = vmatmul.f32.gmra.mxu0 %v1121
        %v1143 = vpop.f32.mrf.mxu0
        %v1144 = vadd.f32 %v1118, %v1143
        %1145 = vmatmul.f32.gmra.mxu0 %v1124
        %v1146 = vpop.f32.mrf.mxu0
        %v1147 = vadd.f32 %v1118, %v1146
        %1148 = vdwg.mxu0
        %v1149 = vld [vmem:[%s23] sm:$0xff]
        %v1150 = vld [vmem:[%s23 + $0x8] sm:$0xff]
        %v1151 = vld [vmem:[%s23 + $0x10] sm:$0xff]
        %v1152 = vld [vmem:[%s23 + $0x18] sm:$0xff]
        %v1153 = vld [vmem:[%s25] sm:$0x1]
        %v1155 = vperm.slane %v1153, 0
        %1157 = vmatpush.msra.mxu0 0.0
        %1158 = vmatpush.msra.mxu0 0.0
        %1159 = vmatpush.msra.mxu0 0.0
        %1160 = vmatpush.msra.mxu0 0.0
        %1161 = vmatpush.msra.mxu0 0.0
        %1162 = vmatpush.msra.mxu0 0.0
        %1163 = vmatpush.msra.mxu0 0.0
        %1164 = vmatpush.msra.mxu0 0.0
        %1165 = vmatpush.msra.mxu0 0.0
        %1166 = vmatpush.msra.mxu0 0.0
        %1167 = vmatpush.msra.mxu0 0.0
        %1168 = vmatpush.msra.mxu0 0.0
        %1169 = vmatpush.msra.mxu0 %v1152
        %1170 = vmatpush.msra.mxu0 %v1151
        %1171 = vmatpush.msra.mxu0 %v1150
        %1172 = vmatpush.msra.mxu0 %v1149
        %1173 = vmatmul.f32.gmra.mxu0 %v1121
        %v1174 = vpop.f32.mrf.mxu0
        %v1175 = vadd.f32 %v1155, %v1174
        %1176 = vmatmul.f32.gmra.mxu0 %v1124
        %v1177 = vpop.f32.mrf.mxu0
        %v1178 = vadd.f32 %v1155, %v1177
        %1179 = vdwg.mxu0
        %v1180 = vld [vmem:[%s27] sm:$0xff]
        %v1181 = vld [vmem:[%s27 + $0x8] sm:$0xff]
        %v1182 = vld [vmem:[%s27 + $0x10] sm:$0xff]
        %v1183 = vld [vmem:[%s27 + $0x18] sm:$0xff]
        %v1184 = vld [vmem:[%s29] sm:$0x1]
        %v1186 = vperm.slane %v1184, 0
        %1188 = vmatpush.msra.mxu0 0.0
        %1189 = vmatpush.msra.mxu0 0.0
        %1190 = vmatpush.msra.mxu0 0.0
        %1191 = vmatpush.msra.mxu0 0.0
        %1192 = vmatpush.msra.mxu0 0.0
        %1193 = vmatpush.msra.mxu0 0.0
        %1194 = vmatpush.msra.mxu0 0.0
        %1195 = vmatpush.msra.mxu0 0.0
        %1196 = vmatpush.msra.mxu0 0.0
        %1197 = vmatpush.msra.mxu0 0.0
        %1198 = vmatpush.msra.mxu0 0.0
        %1199 = vmatpush.msra.mxu0 0.0
        %1200 = vmatpush.msra.mxu0 %v1183
        %1201 = vmatpush.msra.mxu0 %v1182
        %1202 = vmatpush.msra.mxu0 %v1181
        %1203 = vmatpush.msra.mxu0 %v1180
        %1204 = vmatmul.f32.gmra.mxu0 %v1121
        %v1205 = vpop.f32.mrf.mxu0
        %v1206 = vadd.f32 %v1186, %v1205
        %1207 = vmatmul.f32.gmra.mxu0 %v1124
        %v1208 = vpop.f32.mrf.mxu0
        %v1209 = vadd.f32 %v1186, %v1208
        %1210 = vdwg.mxu0
        %v1211 = vmul.f32 %v1144, 0.35355338
        %v1212 = vmul.f32 %v1147, 0.35355338
        %v1213 = vld [vmem:[%s31] sm:$0xff]
        %v1214 = vld [vmem:[%s31 + $0x8] sm:$0xff]
        %v1215 = vld [vmem:[%s31 + $0x10] sm:$0xff]
        %v1216 = vld [vmem:[%s31 + $0x18] sm:$0xff]
        %v1219 = vrot.slane %v1211, 1
        %v1220 = vrot.slane %v1211, 2
        %v1221 = vrot.slane %v1211, 3
        %v1222 = vrot.slane %v1211, 4
        %v1223 = vrot.slane %v1211, 5
        %v1224 = vrot.slane %v1211, 6
        %v1225 = vrot.slane %v1211, 7
        %v1226 = vrot.slane %v1212, 1
        %v1227 = vrot.slane %v1212, 2
        %v1228 = vrot.slane %v1212, 3
        %v1229 = vrot.slane %v1212, 4
        %v1230 = vrot.slane %v1212, 5
        %v1231 = vrot.slane %v1212, 6
        %v1232 = vrot.slane %v1212, 7
        %v1233 = vperm.slane %v1211, 0
        %v1234 = vperm.slane %v1219, 0
        %v1235 = vperm.slane %v1220, 0
        %v1236 = vperm.slane %v1221, 0
        %v1237 = vperm.slane %v1222, 0
        %v1238 = vperm.slane %v1223, 0
        %v1239 = vperm.slane %v1224, 0
        %v1240 = vperm.slane %v1225, 0
        %v1241 = vperm.slane %v1212, 0
        %v1242 = vperm.slane %v1226, 0
        %v1243 = vperm.slane %v1227, 0
        %v1244 = vperm.slane %v1228, 0
        %v1245 = vperm.slane %v1229, 0
        %v1246 = vperm.slane %v1230, 0
        %v1247 = vperm.slane %v1231, 0
        %v1248 = vperm.slane %v1232, 0
        %v1265 = vmul.f32 %v1233, %v1017
        %v1266 = vmul.f32 %v1233, %v1018
        %v1267 = vmul.f32 %v1234, %v1019
        %v1268 = vmul.f32 %v1234, %v1020
        %v1269 = vmul.f32 %v1235, %v1021
        %v1270 = vmul.f32 %v1235, %v1022
        %v1271 = vmul.f32 %v1236, %v1023
        %v1272 = vmul.f32 %v1236, %v1024
        %v1273 = vmul.f32 %v1237, %v1025
        %v1274 = vmul.f32 %v1237, %v1026
        %v1275 = vmul.f32 %v1238, %v1027
        %v1276 = vmul.f32 %v1238, %v1028
        %v1277 = vmul.f32 %v1239, %v1029
        %v1278 = vmul.f32 %v1239, %v1030
        %v1279 = vmul.f32 %v1240, %v1031
        %v1280 = vmul.f32 %v1240, %v1032
        %v1281 = vmul.f32 %v1241, %v1033
        %v1282 = vmul.f32 %v1241, %v1034
        %v1283 = vmul.f32 %v1242, %v1035
        %v1284 = vmul.f32 %v1242, %v1036
        %v1285 = vmul.f32 %v1243, %v1037
        %v1286 = vmul.f32 %v1243, %v1038
        %v1287 = vmul.f32 %v1244, %v1039
        %v1288 = vmul.f32 %v1244, %v1040
        %v1289 = vmul.f32 %v1245, %v1041
        %v1290 = vmul.f32 %v1245, %v1042
        %v1291 = vmul.f32 %v1246, %v1043
        %v1292 = vmul.f32 %v1246, %v1044
        %v1293 = vmul.f32 %v1247, %v1045
        %v1294 = vmul.f32 %v1247, %v1046
        %v1295 = vmul.f32 %v1248, %v1047
        %v1296 = vmul.f32 %v1248, %v1048
        %vm1297 = vcmask 64512
        %v1298 = vsel %vm1297, %v1265, 0.0
        %1299 = vadd.xlane.f32.xlu0 %v1298
        %v1300 = vpop.xlane.xlu0 %1299
        %v1301 = vsel %vm1297, %v1266, 0.0
        %1302 = vadd.xlane.f32.xlu0 %v1301
        %v1303 = vpop.xlane.xlu0 %1302
        %v1304 = vsel %vm1297, %v1267, 0.0
        %1305 = vadd.xlane.f32.xlu0 %v1304
        %v1306 = vpop.xlane.xlu0 %1305
        %v1307 = vsel %vm1297, %v1268, 0.0
        %1308 = vadd.xlane.f32.xlu0 %v1307
        %v1309 = vpop.xlane.xlu0 %1308
        %v1310 = vsel %vm1297, %v1269, 0.0
        %1311 = vadd.xlane.f32.xlu0 %v1310
        %v1312 = vpop.xlane.xlu0 %1311
        %v1313 = vsel %vm1297, %v1270, 0.0
        %1314 = vadd.xlane.f32.xlu0 %v1313
        %v1315 = vpop.xlane.xlu0 %1314
        %v1316 = vsel %vm1297, %v1271, 0.0
        %1317 = vadd.xlane.f32.xlu0 %v1316
        %v1318 = vpop.xlane.xlu0 %1317
        %v1319 = vsel %vm1297, %v1272, 0.0
        %1320 = vadd.xlane.f32.xlu0 %v1319
        %v1321 = vpop.xlane.xlu0 %1320
        %v1322 = vsel %vm1297, %v1273, 0.0
        %1323 = vadd.xlane.f32.xlu0 %v1322
        %v1324 = vpop.xlane.xlu0 %1323
        %v1325 = vsel %vm1297, %v1274, 0.0
        %1326 = vadd.xlane.f32.xlu0 %v1325
        %v1327 = vpop.xlane.xlu0 %1326
        %v1328 = vsel %vm1297, %v1275, 0.0
        %1329 = vadd.xlane.f32.xlu0 %v1328
        %v1330 = vpop.xlane.xlu0 %1329
        %v1331 = vsel %vm1297, %v1276, 0.0
        %1332 = vadd.xlane.f32.xlu0 %v1331
        %v1333 = vpop.xlane.xlu0 %1332
        %v1334 = vsel %vm1297, %v1277, 0.0
        %1335 = vadd.xlane.f32.xlu0 %v1334
        %v1336 = vpop.xlane.xlu0 %1335
        %v1337 = vsel %vm1297, %v1278, 0.0
        %1338 = vadd.xlane.f32.xlu0 %v1337
        %v1339 = vpop.xlane.xlu0 %1338
        %v1340 = vsel %vm1297, %v1279, 0.0
        %1341 = vadd.xlane.f32.xlu0 %v1340
        %v1342 = vpop.xlane.xlu0 %1341
        %v1343 = vsel %vm1297, %v1280, 0.0
        %1344 = vadd.xlane.f32.xlu0 %v1343
        %v1345 = vpop.xlane.xlu0 %1344
        %v1346 = vsel %vm1297, %v1281, 0.0
        %1347 = vadd.xlane.f32.xlu0 %v1346
        %v1348 = vpop.xlane.xlu0 %1347
        %v1349 = vsel %vm1297, %v1282, 0.0
        %1350 = vadd.xlane.f32.xlu0 %v1349
        %v1351 = vpop.xlane.xlu0 %1350
        %v1352 = vsel %vm1297, %v1283, 0.0
        %1353 = vadd.xlane.f32.xlu0 %v1352
        %v1354 = vpop.xlane.xlu0 %1353
        %v1355 = vsel %vm1297, %v1284, 0.0
        %1356 = vadd.xlane.f32.xlu0 %v1355
        %v1357 = vpop.xlane.xlu0 %1356
        %v1358 = vsel %vm1297, %v1285, 0.0
        %1359 = vadd.xlane.f32.xlu0 %v1358
        %v1360 = vpop.xlane.xlu0 %1359
        %v1361 = vsel %vm1297, %v1286, 0.0
        %1362 = vadd.xlane.f32.xlu0 %v1361
        %v1363 = vpop.xlane.xlu0 %1362
        %v1364 = vsel %vm1297, %v1287, 0.0
        %1365 = vadd.xlane.f32.xlu0 %v1364
        %v1366 = vpop.xlane.xlu0 %1365
        %v1367 = vsel %vm1297, %v1288, 0.0
        %1368 = vadd.xlane.f32.xlu0 %v1367
        %v1369 = vpop.xlane.xlu0 %1368
        %v1370 = vsel %vm1297, %v1289, 0.0
        %1371 = vadd.xlane.f32.xlu0 %v1370
        %v1372 = vpop.xlane.xlu0 %1371
        %v1373 = vsel %vm1297, %v1290, 0.0
        %1374 = vadd.xlane.f32.xlu0 %v1373
        %v1375 = vpop.xlane.xlu0 %1374
        %v1376 = vsel %vm1297, %v1291, 0.0
        %1377 = vadd.xlane.f32.xlu0 %v1376
        %v1378 = vpop.xlane.xlu0 %1377
        %v1379 = vsel %vm1297, %v1292, 0.0
        %1380 = vadd.xlane.f32.xlu0 %v1379
        %v1381 = vpop.xlane.xlu0 %1380
        %v1382 = vsel %vm1297, %v1293, 0.0
        %1383 = vadd.xlane.f32.xlu0 %v1382
        %v1384 = vpop.xlane.xlu0 %1383
        %v1385 = vsel %vm1297, %v1294, 0.0
        %1386 = vadd.xlane.f32.xlu0 %v1385
        %v1387 = vpop.xlane.xlu0 %1386
        %v1388 = vsel %vm1297, %v1295, 0.0
        %1389 = vadd.xlane.f32.xlu0 %v1388
        %v1390 = vpop.xlane.xlu0 %1389
        %v1391 = vsel %vm1297, %v1296, 0.0
        %1392 = vadd.xlane.f32.xlu0 %v1391
        %v1393 = vpop.xlane.xlu0 %1392
        %v1426 = vlaneseq
        %v1427 = vand.u32 %v1426, 127
        %v1428 = vperm.slane %v1300, %v1427
        %v1429 = vadd.s32 %v1427, 4294967288
        %v1430 = vperm.slane %v1303, %v1429
        %vm1431 = vcmask 130112
        %v1432 = vsel %vm1431, %v1430, %v1428
        %v1433 = vperm.slane %v1306, %v1427
        %v1434 = vperm.slane %v1309, %v1429
        %v1435 = vsel %vm1431, %v1434, %v1433
        %v1436 = vperm.slane %v1312, %v1427
        %v1437 = vperm.slane %v1315, %v1429
        %v1438 = vsel %vm1431, %v1437, %v1436
        %v1439 = vperm.slane %v1318, %v1427
        %v1440 = vperm.slane %v1321, %v1429
        %v1441 = vsel %vm1431, %v1440, %v1439
        %v1442 = vperm.slane %v1324, %v1427
        %v1443 = vperm.slane %v1327, %v1429
        %v1444 = vsel %vm1431, %v1443, %v1442
        %v1445 = vperm.slane %v1330, %v1427
        %v1446 = vperm.slane %v1333, %v1429
        %v1447 = vsel %vm1431, %v1446, %v1445
        %v1448 = vperm.slane %v1336, %v1427
        %v1449 = vperm.slane %v1339, %v1429
        %v1450 = vsel %vm1431, %v1449, %v1448
        %v1451 = vperm.slane %v1342, %v1427
        %v1452 = vperm.slane %v1345, %v1429
        %v1453 = vsel %vm1431, %v1452, %v1451
        %v1454 = vperm.slane %v1348, %v1427
        %v1455 = vperm.slane %v1351, %v1429
        %v1456 = vsel %vm1431, %v1455, %v1454
        %v1457 = vperm.slane %v1354, %v1427
        %v1458 = vperm.slane %v1357, %v1429
        %v1459 = vsel %vm1431, %v1458, %v1457
        %v1460 = vperm.slane %v1360, %v1427
        %v1461 = vperm.slane %v1363, %v1429
        %v1462 = vsel %vm1431, %v1461, %v1460
        %v1463 = vperm.slane %v1366, %v1427
        %v1464 = vperm.slane %v1369, %v1429
        %v1465 = vsel %vm1431, %v1464, %v1463
        %v1466 = vperm.slane %v1372, %v1427
        %v1467 = vperm.slane %v1375, %v1429
        %v1468 = vsel %vm1431, %v1467, %v1466
        %v1469 = vperm.slane %v1378, %v1427
        %v1470 = vperm.slane %v1381, %v1429
        %v1471 = vsel %vm1431, %v1470, %v1469
        %v1472 = vperm.slane %v1384, %v1427
        %v1473 = vperm.slane %v1387, %v1429
        %v1474 = vsel %vm1431, %v1473, %v1472
        %v1475 = vperm.slane %v1390, %v1427
        %v1476 = vperm.slane %v1393, %v1429
        %v1477 = vsel %vm1431, %v1476, %v1475
        %vm1478 = vcmask 1041409
        %v1479 = vsel %vm1478, %v1435, %v1432
        %vm1480 = vcmask 1042434
        %v1481 = vsel %vm1480, %v1438, %v1479
        %vm1482 = vcmask 1043459
        %v1483 = vsel %vm1482, %v1441, %v1481
        %vm1484 = vcmask 1044484
        %v1485 = vsel %vm1484, %v1444, %v1483
        %vm1486 = vcmask 1045509
        %v1487 = vsel %vm1486, %v1447, %v1485
        %vm1488 = vcmask 1046534
        %v1489 = vsel %vm1488, %v1450, %v1487
        %vm1490 = vcmask 1047559
        %v1491 = vsel %vm1490, %v1453, %v1489
        %v1492 = vsel %vm1478, %v1459, %v1456
        %v1493 = vsel %vm1480, %v1462, %v1492
        %v1494 = vsel %vm1482, %v1465, %v1493
        %v1495 = vsel %vm1484, %v1468, %v1494
        %v1496 = vsel %vm1486, %v1471, %v1495
        %v1497 = vsel %vm1488, %v1474, %v1496
        %v1498 = vsel %vm1490, %v1477, %v1497
        %v1501 = vsel %vm1297, %v1211, 0
        %v1503 = vsel %vm1297, %v1212, 0
        %v1506 = vsel %vm1297, %v1175, 0
        %v1509 = vsel %vm1297, %v1178, 0
        %1511 = vmatpush.xpose.msra.mxu0 0.0
        %1512 = vmatpush.xpose.msra.mxu0 0.0
        %1513 = vmatpush.xpose.msra.mxu0 0.0
        %1514 = vmatpush.xpose.msra.mxu0 0.0
        %1515 = vmatpush.xpose.msra.mxu0 0.0
        %1516 = vmatpush.xpose.msra.mxu0 0.0
        %1517 = vmatpush.xpose.msra.mxu0 0.0
        %1518 = vmatpush.xpose.msra.mxu0 0.0
        %1519 = vmatpush.xpose.msra.mxu0 0.0
        %1520 = vmatpush.xpose.msra.mxu0 0.0
        %1521 = vmatpush.xpose.msra.mxu0 0.0
        %1522 = vmatpush.xpose.msra.mxu0 0.0
        %1523 = vmatpush.xpose.msra.mxu0 0.0
        %1524 = vmatpush.xpose.msra.mxu0 0.0
        %1525 = vmatpush.xpose.msra.mxu0 %v1509
        %1526 = vmatpush.xpose.msra.mxu0 %v1506
        %1527 = vmatmul.f32.gmra.mxu0 %v1501
        %v1528 = vpop.f32.mrf.mxu0
        %v1529 = vadd.f32 %v1491, %v1528
        %1530 = vmatmul.f32.gmra.mxu0 %v1503
        %v1531 = vpop.f32.mrf.mxu0
        %v1532 = vadd.f32 %v1498, %v1531
        %1533 = vdwg.mxu0
        %vm1534 = vcmask 130048
        %v1535 = vsel %vm1534, %v1529, -inf
        %1536 = vmax.xlane.f32.xlu0 %v1535
        %v1537 = vpop.xlane.xlu0 %1536
        %v1538 = vsel %vm1534, %v1532, -inf
        %1539 = vmax.xlane.f32.xlu0 %v1538
        %v1540 = vpop.xlane.xlu0 %1539
        %v1541 = vsub.f32 %v1529, %v1537
        %v1542 = vsub.f32 %v1532, %v1540
        %v1543 = vmul.f32 %v1541, 1.442695
        %v1544 = vpow.pop %v1543
        %v1545 = vmul.f32 %v1542, 1.442695
        %v1546 = vpow.pop %v1545
        %v1547 = vsel %vm1534, %v1544, 0.0
        %1548 = vadd.xlane.f32.xlu0 %v1547
        %v1549 = vpop.xlane.xlu0 %1548
        %v1550 = vsel %vm1534, %v1546, 0.0
        %1551 = vadd.xlane.f32.xlu0 %v1550
        %v1552 = vpop.xlane.xlu0 %1551
        %v1553 = vrcp.pop %v1549
        %v1554 = vmul.f32 %v1549, %v1553
        %v1555 = vsub.f32 1.0, %v1554
        %v1556 = vmul.f32 %v1553, %v1555
        %v1557 = vadd.f32 %v1553, %v1556
        %vm1558 = vweird.f32 %v1549
        %vm1559 = vweird.f32 %v1553
        %vm1560 = vmor %vm1558, %vm1559
        %v1561 = vsel %vm1560, %v1553, %v1557
        %v1562 = vand.u32 2147483647, %v1549
        %vm1563 = vcmp.eq.f32.partialorder %v1562, 8.507059e+37
        %v1564 = vand.u32 %v1549, 2147483648
        %v1565 = vor.u32 1.1754944e-38, %v1564
        %v1566 = vsel %vm1563, %v1565, %v1561
        %v1567 = vmul.f32 %v1544, %v1566
        %v1568 = vrcp.pop %v1552
        %v1569 = vmul.f32 %v1552, %v1568
        %v1570 = vsub.f32 1.0, %v1569
        %v1571 = vmul.f32 %v1568, %v1570
        %v1572 = vadd.f32 %v1568, %v1571
        %vm1573 = vweird.f32 %v1552
        %vm1574 = vweird.f32 %v1568
        %vm1575 = vmor %vm1573, %vm1574
        %v1576 = vsel %vm1575, %v1568, %v1572
        %v1577 = vand.u32 2147483647, %v1552
        %vm1578 = vcmp.eq.f32.partialorder %v1577, 8.507059e+37
        %v1579 = vand.u32 %v1552, 2147483648
        %v1580 = vor.u32 1.1754944e-38, %v1579
        %v1581 = vsel %vm1578, %v1580, %v1576
        %v1582 = vmul.f32 %v1546, %v1581
        %v1584 = vsel %vm1534, %v1567, 0
        %v1587 = vsel %vm1534, %v1582, 0
        %1589 = vmatpush.msra.mxu0 0.0
        %1590 = vmatpush.msra.mxu0 0.0
        %1591 = vmatpush.msra.mxu0 0.0
        %1592 = vmatpush.msra.mxu0 0.0
        %1593 = vmatpush.msra.mxu0 0.0
        %1594 = vmatpush.msra.mxu0 0.0
        %1595 = vmatpush.msra.mxu0 0.0
        %1596 = vmatpush.msra.mxu0 0.0
        %1597 = vmatpush.msra.mxu0 0.0
        %1598 = vmatpush.msra.mxu0 0.0
        %1599 = vmatpush.msra.mxu0 0.0
        %1600 = vmatpush.msra.mxu0 0.0
        %1601 = vmatpush.msra.mxu0 0.0
        %1602 = vmatpush.msra.mxu0 0.0
        %1603 = vmatpush.msra.mxu0 %v1209
        %1604 = vmatpush.msra.mxu0 %v1206
        %1605 = vmatmul.f32.gmra.mxu0 %v1584
        %v1606 = vpop.f32.mrf.mxu0
        %v1607 = vadd.f32 0.0, %v1606
        %1608 = vmatmul.f32.gmra.mxu0 %v1587
        %v1609 = vpop.f32.mrf.mxu0
        %v1610 = vadd.f32 0.0, %v1609
        %1611 = vdwg.mxu0
        %1644 = vrot.lane.b32.xlu0 %v1017, 8
        %v1645 = vpop.permute.xlu0 %1644
        %1646 = vrot.lane.b32.xlu0 %v1018, 8
        %v1647 = vpop.permute.xlu0 %1646
        %1648 = vrot.lane.b32.xlu0 %v1019, 8
        %v1649 = vpop.permute.xlu0 %1648
        %1650 = vrot.lane.b32.xlu0 %v1020, 8
        %v1651 = vpop.permute.xlu0 %1650
        %1652 = vrot.lane.b32.xlu0 %v1021, 8
        %v1653 = vpop.permute.xlu0 %1652
        %1654 = vrot.lane.b32.xlu0 %v1022, 8
        %v1655 = vpop.permute.xlu0 %1654
        %1656 = vrot.lane.b32.xlu0 %v1023, 8
        %v1657 = vpop.permute.xlu0 %1656
        %1658 = vrot.lane.b32.xlu0 %v1024, 8
        %v1659 = vpop.permute.xlu0 %1658
        %1660 = vrot.lane.b32.xlu0 %v1025, 8
        %v1661 = vpop.permute.xlu0 %1660
        %1662 = vrot.lane.b32.xlu0 %v1026, 8
        %v1663 = vpop.permute.xlu0 %1662
        %1664 = vrot.lane.b32.xlu0 %v1027, 8
        %v1665 = vpop.permute.xlu0 %1664
        %1666 = vrot.lane.b32.xlu0 %v1028, 8
        %v1667 = vpop.permute.xlu0 %1666
        %1668 = vrot.lane.b32.xlu0 %v1029, 8
        %v1669 = vpop.permute.xlu0 %1668
        %1670 = vrot.lane.b32.xlu0 %v1030, 8
        %v1671 = vpop.permute.xlu0 %1670
        %1672 = vrot.lane.b32.xlu0 %v1031, 8
        %v1673 = vpop.permute.xlu0 %1672
        %1674 = vrot.lane.b32.xlu0 %v1032, 8
        %v1675 = vpop.permute.xlu0 %1674
        %1676 = vrot.lane.b32.xlu0 %v1033, 8
        %v1677 = vpop.permute.xlu0 %1676
        %1678 = vrot.lane.b32.xlu0 %v1034, 8
        %v1679 = vpop.permute.xlu0 %1678
        %1680 = vrot.lane.b32.xlu0 %v1035, 8
        %v1681 = vpop.permute.xlu0 %1680
        %1682 = vrot.lane.b32.xlu0 %v1036, 8
        %v1683 = vpop.permute.xlu0 %1682
        %1684 = vrot.lane.b32.xlu0 %v1037, 8
        %v1685 = vpop.permute.xlu0 %1684
        %1686 = vrot.lane.b32.xlu0 %v1038, 8
        %v1687 = vpop.permute.xlu0 %1686
        %1688 = vrot.lane.b32.xlu0 %v1039, 8
        %v1689 = vpop.permute.xlu0 %1688
        %1690 = vrot.lane.b32.xlu0 %v1040, 8
        %v1691 = vpop.permute.xlu0 %1690
        %1692 = vrot.lane.b32.xlu0 %v1041, 8
        %v1693 = vpop.permute.xlu0 %1692
        %1694 = vrot.lane.b32.xlu0 %v1042, 8
        %v1695 = vpop.permute.xlu0 %1694
        %1696 = vrot.lane.b32.xlu0 %v1043, 8
        %v1697 = vpop.permute.xlu0 %1696
        %1698 = vrot.lane.b32.xlu0 %v1044, 8
        %v1699 = vpop.permute.xlu0 %1698
        %1700 = vrot.lane.b32.xlu0 %v1045, 8
        %v1701 = vpop.permute.xlu0 %1700
        %1702 = vrot.lane.b32.xlu0 %v1046, 8
        %v1703 = vpop.permute.xlu0 %1702
        %1704 = vrot.lane.b32.xlu0 %v1047, 8
        %v1705 = vpop.permute.xlu0 %1704
        %1706 = vrot.lane.b32.xlu0 %v1048, 8
        %v1707 = vpop.permute.xlu0 %1706
        %v1740 = vmul.f32 %v1233, %v1645
        %v1741 = vmul.f32 %v1233, %v1647
        %v1742 = vmul.f32 %v1234, %v1649
        %v1743 = vmul.f32 %v1234, %v1651
        %v1744 = vmul.f32 %v1235, %v1653
        %v1745 = vmul.f32 %v1235, %v1655
        %v1746 = vmul.f32 %v1236, %v1657
        %v1747 = vmul.f32 %v1236, %v1659
        %v1748 = vmul.f32 %v1237, %v1661
        %v1749 = vmul.f32 %v1237, %v1663
        %v1750 = vmul.f32 %v1238, %v1665
        %v1751 = vmul.f32 %v1238, %v1667
        %v1752 = vmul.f32 %v1239, %v1669
        %v1753 = vmul.f32 %v1239, %v1671
        %v1754 = vmul.f32 %v1240, %v1673
        %v1755 = vmul.f32 %v1240, %v1675
        %v1756 = vmul.f32 %v1241, %v1677
        %v1757 = vmul.f32 %v1241, %v1679
        %v1758 = vmul.f32 %v1242, %v1681
        %v1759 = vmul.f32 %v1242, %v1683
        %v1760 = vmul.f32 %v1243, %v1685
        %v1761 = vmul.f32 %v1243, %v1687
        %v1762 = vmul.f32 %v1244, %v1689
        %v1763 = vmul.f32 %v1244, %v1691
        %v1764 = vmul.f32 %v1245, %v1693
        %v1765 = vmul.f32 %v1245, %v1695
        %v1766 = vmul.f32 %v1246, %v1697
        %v1767 = vmul.f32 %v1246, %v1699
        %v1768 = vmul.f32 %v1247, %v1701
        %v1769 = vmul.f32 %v1247, %v1703
        %v1770 = vmul.f32 %v1248, %v1705
        %v1771 = vmul.f32 %v1248, %v1707
        %1804 = vrot.lane.b32.xlu0 %v1740, 120
        %v1805 = vpop.permute.xlu0 %1804
        %1806 = vrot.lane.b32.xlu0 %v1741, 120
        %v1807 = vpop.permute.xlu0 %1806
        %1808 = vrot.lane.b32.xlu0 %v1742, 120
        %v1809 = vpop.permute.xlu0 %1808
        %1810 = vrot.lane.b32.xlu0 %v1743, 120
        %v1811 = vpop.permute.xlu0 %1810
        %1812 = vrot.lane.b32.xlu0 %v1744, 120
        %v1813 = vpop.permute.xlu0 %1812
        %1814 = vrot.lane.b32.xlu0 %v1745, 120
        %v1815 = vpop.permute.xlu0 %1814
        %1816 = vrot.lane.b32.xlu0 %v1746, 120
        %v1817 = vpop.permute.xlu0 %1816
        %1818 = vrot.lane.b32.xlu0 %v1747, 120
        %v1819 = vpop.permute.xlu0 %1818
        %1820 = vrot.lane.b32.xlu0 %v1748, 120
        %v1821 = vpop.permute.xlu0 %1820
        %1822 = vrot.lane.b32.xlu0 %v1749, 120
        %v1823 = vpop.permute.xlu0 %1822
        %1824 = vrot.lane.b32.xlu0 %v1750, 120
        %v1825 = vpop.permute.xlu0 %1824
        %1826 = vrot.lane.b32.xlu0 %v1751, 120
        %v1827 = vpop.permute.xlu0 %1826
        %1828 = vrot.lane.b32.xlu0 %v1752, 120
        %v1829 = vpop.permute.xlu0 %1828
        %1830 = vrot.lane.b32.xlu0 %v1753, 120
        %v1831 = vpop.permute.xlu0 %1830
        %1832 = vrot.lane.b32.xlu0 %v1754, 120
        %v1833 = vpop.permute.xlu0 %1832
        %1834 = vrot.lane.b32.xlu0 %v1755, 120
        %v1835 = vpop.permute.xlu0 %1834
        %1836 = vrot.lane.b32.xlu0 %v1756, 120
        %v1837 = vpop.permute.xlu0 %1836
        %1838 = vrot.lane.b32.xlu0 %v1757, 120
        %v1839 = vpop.permute.xlu0 %1838
        %1840 = vrot.lane.b32.xlu0 %v1758, 120
        %v1841 = vpop.permute.xlu0 %1840
        %1842 = vrot.lane.b32.xlu0 %v1759, 120
        %v1843 = vpop.permute.xlu0 %1842
        %1844 = vrot.lane.b32.xlu0 %v1760, 120
        %v1845 = vpop.permute.xlu0 %1844
        %1846 = vrot.lane.b32.xlu0 %v1761, 120
        %v1847 = vpop.permute.xlu0 %1846
        %1848 = vrot.lane.b32.xlu0 %v1762, 120
        %v1849 = vpop.permute.xlu0 %1848
        %1850 = vrot.lane.b32.xlu0 %v1763, 120
        %v1851 = vpop.permute.xlu0 %1850
        %1852 = vrot.lane.b32.xlu0 %v1764, 120
        %v1853 = vpop.permute.xlu0 %1852
        %1854 = vrot.lane.b32.xlu0 %v1765, 120
        %v1855 = vpop.permute.xlu0 %1854
        %1856 = vrot.lane.b32.xlu0 %v1766, 120
        %v1857 = vpop.permute.xlu0 %1856
        %1858 = vrot.lane.b32.xlu0 %v1767, 120
        %v1859 = vpop.permute.xlu0 %1858
        %1860 = vrot.lane.b32.xlu0 %v1768, 120
        %v1861 = vpop.permute.xlu0 %1860
        %1862 = vrot.lane.b32.xlu0 %v1769, 120
        %v1863 = vpop.permute.xlu0 %1862
        %1864 = vrot.lane.b32.xlu0 %v1770, 120
        %v1865 = vpop.permute.xlu0 %1864
        %1866 = vrot.lane.b32.xlu0 %v1771, 120
        %v1867 = vpop.permute.xlu0 %1866
        %v1900 = vsel %vm1297, %v1805, 0.0
        %1901 = vadd.xlane.f32.xlu0 %v1900
        %v1902 = vpop.xlane.xlu0 %1901
        %v1903 = vsel %vm1297, %v1807, 0.0
        %1904 = vadd.xlane.f32.xlu0 %v1903
        %v1905 = vpop.xlane.xlu0 %1904
        %v1906 = vsel %vm1297, %v1809, 0.0
        %1907 = vadd.xlane.f32.xlu0 %v1906
        %v1908 = vpop.xlane.xlu0 %1907
        %v1909 = vsel %vm1297, %v1811, 0.0
        %1910 = vadd.xlane.f32.xlu0 %v1909
        %v1911 = vpop.xlane.xlu0 %1910
        %v1912 = vsel %vm1297, %v1813, 0.0
        %1913 = vadd.xlane.f32.xlu0 %v1912
        %v1914 = vpop.xlane.xlu0 %1913
        %v1915 = vsel %vm1297, %v1815, 0.0
        %1916 = vadd.xlane.f32.xlu0 %v1915
        %v1917 = vpop.xlane.xlu0 %1916
        %v1918 = vsel %vm1297, %v1817, 0.0
        %1919 = vadd.xlane.f32.xlu0 %v1918
        %v1920 = vpop.xlane.xlu0 %1919
        %v1921 = vsel %vm1297, %v1819, 0.0
        %1922 = vadd.xlane.f32.xlu0 %v1921
        %v1923 = vpop.xlane.xlu0 %1922
        %v1924 = vsel %vm1297, %v1821, 0.0
        %1925 = vadd.xlane.f32.xlu0 %v1924
        %v1926 = vpop.xlane.xlu0 %1925
        %v1927 = vsel %vm1297, %v1823, 0.0
        %1928 = vadd.xlane.f32.xlu0 %v1927
        %v1929 = vpop.xlane.xlu0 %1928
        %v1930 = vsel %vm1297, %v1825, 0.0
        %1931 = vadd.xlane.f32.xlu0 %v1930
        %v1932 = vpop.xlane.xlu0 %1931
        %v1933 = vsel %vm1297, %v1827, 0.0
        %1934 = vadd.xlane.f32.xlu0 %v1933
        %v1935 = vpop.xlane.xlu0 %1934
        %v1936 = vsel %vm1297, %v1829, 0.0
        %1937 = vadd.xlane.f32.xlu0 %v1936
        %v1938 = vpop.xlane.xlu0 %1937
        %v1939 = vsel %vm1297, %v1831, 0.0
        %1940 = vadd.xlane.f32.xlu0 %v1939
        %v1941 = vpop.xlane.xlu0 %1940
        %v1942 = vsel %vm1297, %v1833, 0.0
        %1943 = vadd.xlane.f32.xlu0 %v1942
        %v1944 = vpop.xlane.xlu0 %1943
        %v1945 = vsel %vm1297, %v1835, 0.0
        %1946 = vadd.xlane.f32.xlu0 %v1945
        %v1947 = vpop.xlane.xlu0 %1946
        %v1948 = vsel %vm1297, %v1837, 0.0
        %1949 = vadd.xlane.f32.xlu0 %v1948
        %v1950 = vpop.xlane.xlu0 %1949
        %v1951 = vsel %vm1297, %v1839, 0.0
        %1952 = vadd.xlane.f32.xlu0 %v1951
        %v1953 = vpop.xlane.xlu0 %1952
        %v1954 = vsel %vm1297, %v1841, 0.0
        %1955 = vadd.xlane.f32.xlu0 %v1954
        %v1956 = vpop.xlane.xlu0 %1955
        %v1957 = vsel %vm1297, %v1843, 0.0
        %1958 = vadd.xlane.f32.xlu0 %v1957
        %v1959 = vpop.xlane.xlu0 %1958
        %v1960 = vsel %vm1297, %v1845, 0.0
        %1961 = vadd.xlane.f32.xlu0 %v1960
        %v1962 = vpop.xlane.xlu0 %1961
        %v1963 = vsel %vm1297, %v1847, 0.0
        %1964 = vadd.xlane.f32.xlu0 %v1963
        %v1965 = vpop.xlane.xlu0 %1964
        %v1966 = vsel %vm1297, %v1849, 0.0
        %1967 = vadd.xlane.f32.xlu0 %v1966
        %v1968 = vpop.xlane.xlu0 %1967
        %v1969 = vsel %vm1297, %v1851, 0.0
        %1970 = vadd.xlane.f32.xlu0 %v1969
        %v1971 = vpop.xlane.xlu0 %1970
        %v1972 = vsel %vm1297, %v1853, 0.0
        %1973 = vadd.xlane.f32.xlu0 %v1972
        %v1974 = vpop.xlane.xlu0 %1973
        %v1975 = vsel %vm1297, %v1855, 0.0
        %1976 = vadd.xlane.f32.xlu0 %v1975
        %v1977 = vpop.xlane.xlu0 %1976
        %v1978 = vsel %vm1297, %v1857, 0.0
        %1979 = vadd.xlane.f32.xlu0 %v1978
        %v1980 = vpop.xlane.xlu0 %1979
        %v1981 = vsel %vm1297, %v1859, 0.0
        %1982 = vadd.xlane.f32.xlu0 %v1981
        %v1983 = vpop.xlane.xlu0 %1982
        %v1984 = vsel %vm1297, %v1861, 0.0
        %1985 = vadd.xlane.f32.xlu0 %v1984
        %v1986 = vpop.xlane.xlu0 %1985
        %v1987 = vsel %vm1297, %v1863, 0.0
        %1988 = vadd.xlane.f32.xlu0 %v1987
        %v1989 = vpop.xlane.xlu0 %1988
        %v1990 = vsel %vm1297, %v1865, 0.0
        %1991 = vadd.xlane.f32.xlu0 %v1990
        %v1992 = vpop.xlane.xlu0 %1991
        %v1993 = vsel %vm1297, %v1867, 0.0
        %1994 = vadd.xlane.f32.xlu0 %v1993
        %v1995 = vpop.xlane.xlu0 %1994
        %1996 = vrot.lane.b32.xlu0 %v1211, 120
        %v1997 = vpop.permute.xlu0 %1996
        %1998 = vrot.lane.b32.xlu0 %v1212, 120
        %v1999 = vpop.permute.xlu0 %1998
        %2000 = vrot.lane.b32.xlu0 %v1175, 120
        %v2001 = vpop.permute.xlu0 %2000
        %2002 = vrot.lane.b32.xlu0 %v1178, 120
        %v2003 = vpop.permute.xlu0 %2002
        %v2036 = vperm.slane %v1902, %v1427
        %v2037 = vperm.slane %v1905, %v1429
        %v2038 = vsel %vm1431, %v2037, %v2036
        %v2039 = vperm.slane %v1908, %v1427
        %v2040 = vperm.slane %v1911, %v1429
        %v2041 = vsel %vm1431, %v2040, %v2039
        %v2042 = vperm.slane %v1914, %v1427
        %v2043 = vperm.slane %v1917, %v1429
        %v2044 = vsel %vm1431, %v2043, %v2042
        %v2045 = vperm.slane %v1920, %v1427
        %v2046 = vperm.slane %v1923, %v1429
        %v2047 = vsel %vm1431, %v2046, %v2045
        %v2048 = vperm.slane %v1926, %v1427
        %v2049 = vperm.slane %v1929, %v1429
        %v2050 = vsel %vm1431, %v2049, %v2048
        %v2051 = vperm.slane %v1932, %v1427
        %v2052 = vperm.slane %v1935, %v1429
        %v2053 = vsel %vm1431, %v2052, %v2051
        %v2054 = vperm.slane %v1938, %v1427
        %v2055 = vperm.slane %v1941, %v1429
        %v2056 = vsel %vm1431, %v2055, %v2054
        %v2057 = vperm.slane %v1944, %v1427
        %v2058 = vperm.slane %v1947, %v1429
        %v2059 = vsel %vm1431, %v2058, %v2057
        %v2060 = vperm.slane %v1950, %v1427
        %v2061 = vperm.slane %v1953, %v1429
        %v2062 = vsel %vm1431, %v2061, %v2060
        %v2063 = vperm.slane %v1956, %v1427
        %v2064 = vperm.slane %v1959, %v1429
        %v2065 = vsel %vm1431, %v2064, %v2063
        %v2066 = vperm.slane %v1962, %v1427
        %v2067 = vperm.slane %v1965, %v1429
        %v2068 = vsel %vm1431, %v2067, %v2066
        %v2069 = vperm.slane %v1968, %v1427
        %v2070 = vperm.slane %v1971, %v1429
        %v2071 = vsel %vm1431, %v2070, %v2069
        %v2072 = vperm.slane %v1974, %v1427
        %v2073 = vperm.slane %v1977, %v1429
        %v2074 = vsel %vm1431, %v2073, %v2072
        %v2075 = vperm.slane %v1980, %v1427
        %v2076 = vperm.slane %v1983, %v1429
        %v2077 = vsel %vm1431, %v2076, %v2075
        %v2078 = vperm.slane %v1986, %v1427
        %v2079 = vperm.slane %v1989, %v1429
        %v2080 = vsel %vm1431, %v2079, %v2078
        %v2081 = vperm.slane %v1992, %v1427
        %v2082 = vperm.slane %v1995, %v1429
        %v2083 = vsel %vm1431, %v2082, %v2081
        %v2084 = vsel %vm1478, %v2041, %v2038
        %v2085 = vsel %vm1480, %v2044, %v2084
        %v2086 = vsel %vm1482, %v2047, %v2085
        %v2087 = vsel %vm1484, %v2050, %v2086
        %v2088 = vsel %vm1486, %v2053, %v2087
        %v2089 = vsel %vm1488, %v2056, %v2088
        %v2090 = vsel %vm1490, %v2059, %v2089
        %v2091 = vsel %vm1478, %v2065, %v2062
        %v2092 = vsel %vm1480, %v2068, %v2091
        %v2093 = vsel %vm1482, %v2071, %v2092
        %v2094 = vsel %vm1484, %v2074, %v2093
        %v2095 = vsel %vm1486, %v2077, %v2094
        %v2096 = vsel %vm1488, %v2080, %v2095
        %v2097 = vsel %vm1490, %v2083, %v2096
        %v2100 = vsel %vm1297, %v1997, 0
        %v2102 = vsel %vm1297, %v1999, 0
        %v2104 = vsel %vm1297, %v2001, 0
        %v2106 = vsel %vm1297, %v2003, 0
        %2108 = vmatpush.xpose.msra.mxu0 0.0
        %2109 = vmatpush.xpose.msra.mxu0 0.0
        %2110 = vmatpush.xpose.msra.mxu0 0.0
        %2111 = vmatpush.xpose.msra.mxu0 0.0
        %2112 = vmatpush.xpose.msra.mxu0 0.0
        %2113 = vmatpush.xpose.msra.mxu0 0.0
        %2114 = vmatpush.xpose.msra.mxu0 0.0
        %2115 = vmatpush.xpose.msra.mxu0 0.0
        %2116 = vmatpush.xpose.msra.mxu0 0.0
        %2117 = vmatpush.xpose.msra.mxu0 0.0
        %2118 = vmatpush.xpose.msra.mxu0 0.0
        %2119 = vmatpush.xpose.msra.mxu0 0.0
        %2120 = vmatpush.xpose.msra.mxu0 0.0
        %2121 = vmatpush.xpose.msra.mxu0 0.0
        %2122 = vmatpush.xpose.msra.mxu0 %v2106
        %2123 = vmatpush.xpose.msra.mxu0 %v2104
        %2124 = vmatmul.f32.gmra.mxu0 %v2100
        %v2125 = vpop.f32.mrf.mxu0
        %v2126 = vadd.f32 %v2090, %v2125
        %2127 = vmatmul.f32.gmra.mxu0 %v2102
        %v2128 = vpop.f32.mrf.mxu0
        %v2129 = vadd.f32 %v2097, %v2128
        %2130 = vdwg.mxu0
        %v2131 = vsel %vm1534, %v2126, -inf
        %2132 = vmax.xlane.f32.xlu0 %v2131
        %v2133 = vpop.xlane.xlu0 %2132
        %v2134 = vsel %vm1534, %v2129, -inf
        %2135 = vmax.xlane.f32.xlu0 %v2134
        %v2136 = vpop.xlane.xlu0 %2135
        %v2137 = vsub.f32 %v2126, %v2133
        %v2138 = vsub.f32 %v2129, %v2136
        %v2139 = vmul.f32 %v2137, 1.442695
        %v2140 = vpow.pop %v2139
        %v2141 = vmul.f32 %v2138, 1.442695
        %v2142 = vpow.pop %v2141
        %v2143 = vsel %vm1534, %v2140, 0.0
        %2144 = vadd.xlane.f32.xlu0 %v2143
        %v2145 = vpop.xlane.xlu0 %2144
        %v2146 = vsel %vm1534, %v2142, 0.0
        %2147 = vadd.xlane.f32.xlu0 %v2146
        %v2148 = vpop.xlane.xlu0 %2147
        %v2149 = vrcp.pop %v2145
        %v2150 = vmul.f32 %v2145, %v2149
        %v2151 = vsub.f32 1.0, %v2150
        %v2152 = vmul.f32 %v2149, %v2151
        %v2153 = vadd.f32 %v2149, %v2152
        %vm2154 = vweird.f32 %v2145
        %vm2155 = vweird.f32 %v2149
        %vm2156 = vmor %vm2154, %vm2155
        %v2157 = vsel %vm2156, %v2149, %v2153
        %v2158 = vand.u32 2147483647, %v2145
        %vm2159 = vcmp.eq.f32.partialorder %v2158, 8.507059e+37
        %v2160 = vand.u32 %v2145, 2147483648
        %v2161 = vor.u32 1.1754944e-38, %v2160
        %v2162 = vsel %vm2159, %v2161, %v2157
        %v2163 = vmul.f32 %v2140, %v2162
        %v2164 = vrcp.pop %v2148
        %v2165 = vmul.f32 %v2148, %v2164
        %v2166 = vsub.f32 1.0, %v2165
        %v2167 = vmul.f32 %v2164, %v2166
        %v2168 = vadd.f32 %v2164, %v2167
        %vm2169 = vweird.f32 %v2148
        %vm2170 = vweird.f32 %v2164
        %vm2171 = vmor %vm2169, %vm2170
        %v2172 = vsel %vm2171, %v2164, %v2168
        %v2173 = vand.u32 2147483647, %v2148
        %vm2174 = vcmp.eq.f32.partialorder %v2173, 8.507059e+37
        %v2175 = vand.u32 %v2148, 2147483648
        %v2176 = vor.u32 1.1754944e-38, %v2175
        %v2177 = vsel %vm2174, %v2176, %v2172
        %v2178 = vmul.f32 %v2142, %v2177
        %2181 = vrot.lane.b32.xlu0 %v1206, 120
        %v2182 = vpop.permute.xlu0 %2181
        %2183 = vrot.lane.b32.xlu0 %v1209, 120
        %v2184 = vpop.permute.xlu0 %2183
        %v2188 = vsel %vm1534, %v2163, 0
        %v2191 = vsel %vm1534, %v2178, 0
        %2193 = vmatpush.msra.mxu0 0.0
        %2194 = vmatpush.msra.mxu0 0.0
        %2195 = vmatpush.msra.mxu0 0.0
        %2196 = vmatpush.msra.mxu0 0.0
        %2197 = vmatpush.msra.mxu0 0.0
        %2198 = vmatpush.msra.mxu0 0.0
        %2199 = vmatpush.msra.mxu0 0.0
        %2200 = vmatpush.msra.mxu0 0.0
        %2201 = vmatpush.msra.mxu0 0.0
        %2202 = vmatpush.msra.mxu0 0.0
        %2203 = vmatpush.msra.mxu0 0.0
        %2204 = vmatpush.msra.mxu0 0.0
        %2205 = vmatpush.msra.mxu0 0.0
        %2206 = vmatpush.msra.mxu0 0.0
        %2207 = vmatpush.msra.mxu0 %v2184
        %2208 = vmatpush.msra.mxu0 %v2182
        %2209 = vmatmul.f32.gmra.mxu0 %v2188
        %v2210 = vpop.f32.mrf.mxu0
        %v2211 = vadd.f32 0.0, %v2210
        %2212 = vmatmul.f32.gmra.mxu0 %v2191
        %v2213 = vpop.f32.mrf.mxu0
        %v2214 = vadd.f32 0.0, %v2213
        %2215 = vdwg.mxu0
        %v2217 = vsel %vm1297, %v2211, 0
        %v2220 = vsel %vm1297, %v2214, 0
        %2222 = vmatpush.msra.mxu0 0.0
        %2223 = vmatpush.msra.mxu0 0.0
        %2224 = vmatpush.msra.mxu0 0.0
        %2225 = vmatpush.msra.mxu0 0.0
        %2226 = vmatpush.msra.mxu0 0.0
        %2227 = vmatpush.msra.mxu0 0.0
        %2228 = vmatpush.msra.mxu0 0.0
        %2229 = vmatpush.msra.mxu0 0.0
        %2230 = vmatpush.msra.mxu0 0.0
        %2231 = vmatpush.msra.mxu0 0.0
        %2232 = vmatpush.msra.mxu0 0.0
        %2233 = vmatpush.msra.mxu0 0.0
        %2234 = vmatpush.msra.mxu0 0.0
        %2235 = vmatpush.msra.mxu0 0.0
        %2236 = vmatpush.msra.mxu0 0.0
        %2237 = vmatpush.msra.mxu0 %v1214
        %2238 = vmatmul.f32.gmra.mxu0 %v2217
        %v2239 = vpop.f32.mrf.mxu0
        %v2240 = vadd.f32 0.0, %v2239
        %2241 = vmatmul.f32.gmra.mxu0 %v2220
        %v2242 = vpop.f32.mrf.mxu0
        %v2243 = vadd.f32 0.0, %v2242
        %2244 = vdwg.mxu0
        %v2246 = vsel %vm1297, %v1607, 0
        %v2249 = vsel %vm1297, %v1610, 0
        %2251 = vmatpush.msra.mxu0 0.0
        %2252 = vmatpush.msra.mxu0 0.0
        %2253 = vmatpush.msra.mxu0 0.0
        %2254 = vmatpush.msra.mxu0 0.0
        %2255 = vmatpush.msra.mxu0 0.0
        %2256 = vmatpush.msra.mxu0 0.0
        %2257 = vmatpush.msra.mxu0 0.0
        %2258 = vmatpush.msra.mxu0 0.0
        %2259 = vmatpush.msra.mxu0 0.0
        %2260 = vmatpush.msra.mxu0 0.0
        %2261 = vmatpush.msra.mxu0 0.0
        %2262 = vmatpush.msra.mxu0 0.0
        %2263 = vmatpush.msra.mxu0 0.0
        %2264 = vmatpush.msra.mxu0 0.0
        %2265 = vmatpush.msra.mxu0 0.0
        %2266 = vmatpush.msra.mxu0 %v1213
        %2267 = vmatmul.f32.gmra.mxu0 %v2246
        %v2268 = vpop.f32.mrf.mxu0
        %v2269 = vadd.f32 %v2240, %v2268
        %2270 = vmatmul.f32.gmra.mxu0 %v2249
        %v2271 = vpop.f32.mrf.mxu0
        %v2272 = vadd.f32 %v2243, %v2271
        %2273 = vdwg.mxu0
        %2274 = vrot.lane.b32.xlu0 %v1017, 16
        %v2275 = vpop.permute.xlu0 %2274
        %2276 = vrot.lane.b32.xlu0 %v1018, 16
        %v2277 = vpop.permute.xlu0 %2276
        %2278 = vrot.lane.b32.xlu0 %v1019, 16
        %v2279 = vpop.permute.xlu0 %2278
        %2280 = vrot.lane.b32.xlu0 %v1020, 16
        %v2281 = vpop.permute.xlu0 %2280
        %2282 = vrot.lane.b32.xlu0 %v1021, 16
        %v2283 = vpop.permute.xlu0 %2282
        %2284 = vrot.lane.b32.xlu0 %v1022, 16
        %v2285 = vpop.permute.xlu0 %2284
        %2286 = vrot.lane.b32.xlu0 %v1023, 16
        %v2287 = vpop.permute.xlu0 %2286
        %2288 = vrot.lane.b32.xlu0 %v1024, 16
        %v2289 = vpop.permute.xlu0 %2288
        %2290 = vrot.lane.b32.xlu0 %v1025, 16
        %v2291 = vpop.permute.xlu0 %2290
        %2292 = vrot.lane.b32.xlu0 %v1026, 16
        %v2293 = vpop.permute.xlu0 %2292
        %2294 = vrot.lane.b32.xlu0 %v1027, 16
        %v2295 = vpop.permute.xlu0 %2294
        %2296 = vrot.lane.b32.xlu0 %v1028, 16
        %v2297 = vpop.permute.xlu0 %2296
        %2298 = vrot.lane.b32.xlu0 %v1029, 16
        %v2299 = vpop.permute.xlu0 %2298
        %2300 = vrot.lane.b32.xlu0 %v1030, 16
        %v2301 = vpop.permute.xlu0 %2300
        %2302 = vrot.lane.b32.xlu0 %v1031, 16
        %v2303 = vpop.permute.xlu0 %2302
        %2304 = vrot.lane.b32.xlu0 %v1032, 16
        %v2305 = vpop.permute.xlu0 %2304
        %2306 = vrot.lane.b32.xlu0 %v1033, 16
        %v2307 = vpop.permute.xlu0 %2306
        %2308 = vrot.lane.b32.xlu0 %v1034, 16
        %v2309 = vpop.permute.xlu0 %2308
        %2310 = vrot.lane.b32.xlu0 %v1035, 16
        %v2311 = vpop.permute.xlu0 %2310
        %2312 = vrot.lane.b32.xlu0 %v1036, 16
        %v2313 = vpop.permute.xlu0 %2312
        %2314 = vrot.lane.b32.xlu0 %v1037, 16
        %v2315 = vpop.permute.xlu0 %2314
        %2316 = vrot.lane.b32.xlu0 %v1038, 16
        %v2317 = vpop.permute.xlu0 %2316
        %2318 = vrot.lane.b32.xlu0 %v1039, 16
        %v2319 = vpop.permute.xlu0 %2318
        %2320 = vrot.lane.b32.xlu0 %v1040, 16
        %v2321 = vpop.permute.xlu0 %2320
        %2322 = vrot.lane.b32.xlu0 %v1041, 16
        %v2323 = vpop.permute.xlu0 %2322
        %2324 = vrot.lane.b32.xlu0 %v1042, 16
        %v2325 = vpop.permute.xlu0 %2324
        %2326 = vrot.lane.b32.xlu0 %v1043, 16
        %v2327 = vpop.permute.xlu0 %2326
        %2328 = vrot.lane.b32.xlu0 %v1044, 16
        %v2329 = vpop.permute.xlu0 %2328
        %2330 = vrot.lane.b32.xlu0 %v1045, 16
        %v2331 = vpop.permute.xlu0 %2330
        %2332 = vrot.lane.b32.xlu0 %v1046, 16
        %v2333 = vpop.permute.xlu0 %2332
        %2334 = vrot.lane.b32.xlu0 %v1047, 16
        %v2335 = vpop.permute.xlu0 %2334
        %2336 = vrot.lane.b32.xlu0 %v1048, 16
        %v2337 = vpop.permute.xlu0 %2336
        %v2370 = vmul.f32 %v1233, %v2275
        %v2371 = vmul.f32 %v1233, %v2277
        %v2372 = vmul.f32 %v1234, %v2279
        %v2373 = vmul.f32 %v1234, %v2281
        %v2374 = vmul.f32 %v1235, %v2283
        %v2375 = vmul.f32 %v1235, %v2285
        %v2376 = vmul.f32 %v1236, %v2287
        %v2377 = vmul.f32 %v1236, %v2289
        %v2378 = vmul.f32 %v1237, %v2291
        %v2379 = vmul.f32 %v1237, %v2293
        %v2380 = vmul.f32 %v1238, %v2295
        %v2381 = vmul.f32 %v1238, %v2297
        %v2382 = vmul.f32 %v1239, %v2299
        %v2383 = vmul.f32 %v1239, %v2301
        %v2384 = vmul.f32 %v1240, %v2303
        %v2385 = vmul.f32 %v1240, %v2305
        %v2386 = vmul.f32 %v1241, %v2307
        %v2387 = vmul.f32 %v1241, %v2309
        %v2388 = vmul.f32 %v1242, %v2311
        %v2389 = vmul.f32 %v1242, %v2313
        %v2390 = vmul.f32 %v1243, %v2315
        %v2391 = vmul.f32 %v1243, %v2317
        %v2392 = vmul.f32 %v1244, %v2319
        %v2393 = vmul.f32 %v1244, %v2321
        %v2394 = vmul.f32 %v1245, %v2323
        %v2395 = vmul.f32 %v1245, %v2325
        %v2396 = vmul.f32 %v1246, %v2327
        %v2397 = vmul.f32 %v1246, %v2329
        %v2398 = vmul.f32 %v1247, %v2331
        %v2399 = vmul.f32 %v1247, %v2333
        %v2400 = vmul.f32 %v1248, %v2335
        %v2401 = vmul.f32 %v1248, %v2337
        %2434 = vrot.lane.b32.xlu0 %v2370, 112
        %v2435 = vpop.permute.xlu0 %2434
        %2436 = vrot.lane.b32.xlu0 %v2371, 112
        %v2437 = vpop.permute.xlu0 %2436
        %2438 = vrot.lane.b32.xlu0 %v2372, 112
        %v2439 = vpop.permute.xlu0 %2438
        %2440 = vrot.lane.b32.xlu0 %v2373, 112
        %v2441 = vpop.permute.xlu0 %2440
        %2442 = vrot.lane.b32.xlu0 %v2374, 112
        %v2443 = vpop.permute.xlu0 %2442
        %2444 = vrot.lane.b32.xlu0 %v2375, 112
        %v2445 = vpop.permute.xlu0 %2444
        %2446 = vrot.lane.b32.xlu0 %v2376, 112
        %v2447 = vpop.permute.xlu0 %2446
        %2448 = vrot.lane.b32.xlu0 %v2377, 112
        %v2449 = vpop.permute.xlu0 %2448
        %2450 = vrot.lane.b32.xlu0 %v2378, 112
        %v2451 = vpop.permute.xlu0 %2450
        %2452 = vrot.lane.b32.xlu0 %v2379, 112
        %v2453 = vpop.permute.xlu0 %2452
        %2454 = vrot.lane.b32.xlu0 %v2380, 112
        %v2455 = vpop.permute.xlu0 %2454
        %2456 = vrot.lane.b32.xlu0 %v2381, 112
        %v2457 = vpop.permute.xlu0 %2456
        %2458 = vrot.lane.b32.xlu0 %v2382, 112
        %v2459 = vpop.permute.xlu0 %2458
        %2460 = vrot.lane.b32.xlu0 %v2383, 112
        %v2461 = vpop.permute.xlu0 %2460
        %2462 = vrot.lane.b32.xlu0 %v2384, 112
        %v2463 = vpop.permute.xlu0 %2462
        %2464 = vrot.lane.b32.xlu0 %v2385, 112
        %v2465 = vpop.permute.xlu0 %2464
        %2466 = vrot.lane.b32.xlu0 %v2386, 112
        %v2467 = vpop.permute.xlu0 %2466
        %2468 = vrot.lane.b32.xlu0 %v2387, 112
        %v2469 = vpop.permute.xlu0 %2468
        %2470 = vrot.lane.b32.xlu0 %v2388, 112
        %v2471 = vpop.permute.xlu0 %2470
        %2472 = vrot.lane.b32.xlu0 %v2389, 112
        %v2473 = vpop.permute.xlu0 %2472
        %2474 = vrot.lane.b32.xlu0 %v2390, 112
        %v2475 = vpop.permute.xlu0 %2474
        %2476 = vrot.lane.b32.xlu0 %v2391, 112
        %v2477 = vpop.permute.xlu0 %2476
        %2478 = vrot.lane.b32.xlu0 %v2392, 112
        %v2479 = vpop.permute.xlu0 %2478
        %2480 = vrot.lane.b32.xlu0 %v2393, 112
        %v2481 = vpop.permute.xlu0 %2480
        %2482 = vrot.lane.b32.xlu0 %v2394, 112
        %v2483 = vpop.permute.xlu0 %2482
        %2484 = vrot.lane.b32.xlu0 %v2395, 112
        %v2485 = vpop.permute.xlu0 %2484
        %2486 = vrot.lane.b32.xlu0 %v2396, 112
        %v2487 = vpop.permute.xlu0 %2486
        %2488 = vrot.lane.b32.xlu0 %v2397, 112
        %v2489 = vpop.permute.xlu0 %2488
        %2490 = vrot.lane.b32.xlu0 %v2398, 112
        %v2491 = vpop.permute.xlu0 %2490
        %2492 = vrot.lane.b32.xlu0 %v2399, 112
        %v2493 = vpop.permute.xlu0 %2492
        %2494 = vrot.lane.b32.xlu0 %v2400, 112
        %v2495 = vpop.permute.xlu0 %2494
        %2496 = vrot.lane.b32.xlu0 %v2401, 112
        %v2497 = vpop.permute.xlu0 %2496
        %v2530 = vsel %vm1297, %v2435, 0.0
        %2531 = vadd.xlane.f32.xlu0 %v2530
        %v2532 = vpop.xlane.xlu0 %2531
        %v2533 = vsel %vm1297, %v2437, 0.0
        %2534 = vadd.xlane.f32.xlu0 %v2533
        %v2535 = vpop.xlane.xlu0 %2534
        %v2536 = vsel %vm1297, %v2439, 0.0
        %2537 = vadd.xlane.f32.xlu0 %v2536
        %v2538 = vpop.xlane.xlu0 %2537
        %v2539 = vsel %vm1297, %v2441, 0.0
        %2540 = vadd.xlane.f32.xlu0 %v2539
        %v2541 = vpop.xlane.xlu0 %2540
        %v2542 = vsel %vm1297, %v2443, 0.0
        %2543 = vadd.xlane.f32.xlu0 %v2542
        %v2544 = vpop.xlane.xlu0 %2543
        %v2545 = vsel %vm1297, %v2445, 0.0
        %2546 = vadd.xlane.f32.xlu0 %v2545
        %v2547 = vpop.xlane.xlu0 %2546
        %v2548 = vsel %vm1297, %v2447, 0.0
        %2549 = vadd.xlane.f32.xlu0 %v2548
        %v2550 = vpop.xlane.xlu0 %2549
        %v2551 = vsel %vm1297, %v2449, 0.0
        %2552 = vadd.xlane.f32.xlu0 %v2551
        %v2553 = vpop.xlane.xlu0 %2552
        %v2554 = vsel %vm1297, %v2451, 0.0
        %2555 = vadd.xlane.f32.xlu0 %v2554
        %v2556 = vpop.xlane.xlu0 %2555
        %v2557 = vsel %vm1297, %v2453, 0.0
        %2558 = vadd.xlane.f32.xlu0 %v2557
        %v2559 = vpop.xlane.xlu0 %2558
        %v2560 = vsel %vm1297, %v2455, 0.0
        %2561 = vadd.xlane.f32.xlu0 %v2560
        %v2562 = vpop.xlane.xlu0 %2561
        %v2563 = vsel %vm1297, %v2457, 0.0
        %2564 = vadd.xlane.f32.xlu0 %v2563
        %v2565 = vpop.xlane.xlu0 %2564
        %v2566 = vsel %vm1297, %v2459, 0.0
        %2567 = vadd.xlane.f32.xlu0 %v2566
        %v2568 = vpop.xlane.xlu0 %2567
        %v2569 = vsel %vm1297, %v2461, 0.0
        %2570 = vadd.xlane.f32.xlu0 %v2569
        %v2571 = vpop.xlane.xlu0 %2570
        %v2572 = vsel %vm1297, %v2463, 0.0
        %2573 = vadd.xlane.f32.xlu0 %v2572
        %v2574 = vpop.xlane.xlu0 %2573
        %v2575 = vsel %vm1297, %v2465, 0.0
        %2576 = vadd.xlane.f32.xlu0 %v2575
        %v2577 = vpop.xlane.xlu0 %2576
        %v2578 = vsel %vm1297, %v2467, 0.0
        %2579 = vadd.xlane.f32.xlu0 %v2578
        %v2580 = vpop.xlane.xlu0 %2579
        %v2581 = vsel %vm1297, %v2469, 0.0
        %2582 = vadd.xlane.f32.xlu0 %v2581
        %v2583 = vpop.xlane.xlu0 %2582
        %v2584 = vsel %vm1297, %v2471, 0.0
        %2585 = vadd.xlane.f32.xlu0 %v2584
        %v2586 = vpop.xlane.xlu0 %2585
        %v2587 = vsel %vm1297, %v2473, 0.0
        %2588 = vadd.xlane.f32.xlu0 %v2587
        %v2589 = vpop.xlane.xlu0 %2588
        %v2590 = vsel %vm1297, %v2475, 0.0
        %2591 = vadd.xlane.f32.xlu0 %v2590
        %v2592 = vpop.xlane.xlu0 %2591
        %v2593 = vsel %vm1297, %v2477, 0.0
        %2594 = vadd.xlane.f32.xlu0 %v2593
        %v2595 = vpop.xlane.xlu0 %2594
        %v2596 = vsel %vm1297, %v2479, 0.0
        %2597 = vadd.xlane.f32.xlu0 %v2596
        %v2598 = vpop.xlane.xlu0 %2597
        %v2599 = vsel %vm1297, %v2481, 0.0
        %2600 = vadd.xlane.f32.xlu0 %v2599
        %v2601 = vpop.xlane.xlu0 %2600
        %v2602 = vsel %vm1297, %v2483, 0.0
        %2603 = vadd.xlane.f32.xlu0 %v2602
        %v2604 = vpop.xlane.xlu0 %2603
        %v2605 = vsel %vm1297, %v2485, 0.0
        %2606 = vadd.xlane.f32.xlu0 %v2605
        %v2607 = vpop.xlane.xlu0 %2606
        %v2608 = vsel %vm1297, %v2487, 0.0
        %2609 = vadd.xlane.f32.xlu0 %v2608
        %v2610 = vpop.xlane.xlu0 %2609
        %v2611 = vsel %vm1297, %v2489, 0.0
        %2612 = vadd.xlane.f32.xlu0 %v2611
        %v2613 = vpop.xlane.xlu0 %2612
        %v2614 = vsel %vm1297, %v2491, 0.0
        %2615 = vadd.xlane.f32.xlu0 %v2614
        %v2616 = vpop.xlane.xlu0 %2615
        %v2617 = vsel %vm1297, %v2493, 0.0
        %2618 = vadd.xlane.f32.xlu0 %v2617
        %v2619 = vpop.xlane.xlu0 %2618
        %v2620 = vsel %vm1297, %v2495, 0.0
        %2621 = vadd.xlane.f32.xlu0 %v2620
        %v2622 = vpop.xlane.xlu0 %2621
        %v2623 = vsel %vm1297, %v2497, 0.0
        %2624 = vadd.xlane.f32.xlu0 %v2623
        %v2625 = vpop.xlane.xlu0 %2624
        %2626 = vrot.lane.b32.xlu0 %v1211, 112
        %v2627 = vpop.permute.xlu0 %2626
        %2628 = vrot.lane.b32.xlu0 %v1212, 112
        %v2629 = vpop.permute.xlu0 %2628
        %2630 = vrot.lane.b32.xlu0 %v1175, 112
        %v2631 = vpop.permute.xlu0 %2630
        %2632 = vrot.lane.b32.xlu0 %v1178, 112
        %v2633 = vpop.permute.xlu0 %2632
        %v2666 = vperm.slane %v2532, %v1427
        %v2667 = vperm.slane %v2535, %v1429
        %v2668 = vsel %vm1431, %v2667, %v2666
        %v2669 = vperm.slane %v2538, %v1427
        %v2670 = vperm.slane %v2541, %v1429
        %v2671 = vsel %vm1431, %v2670, %v2669
        %v2672 = vperm.slane %v2544, %v1427
        %v2673 = vperm.slane %v2547, %v1429
        %v2674 = vsel %vm1431, %v2673, %v2672
        %v2675 = vperm.slane %v2550, %v1427
        %v2676 = vperm.slane %v2553, %v1429
        %v2677 = vsel %vm1431, %v2676, %v2675
        %v2678 = vperm.slane %v2556, %v1427
        %v2679 = vperm.slane %v2559, %v1429
        %v2680 = vsel %vm1431, %v2679, %v2678
        %v2681 = vperm.slane %v2562, %v1427
        %v2682 = vperm.slane %v2565, %v1429
        %v2683 = vsel %vm1431, %v2682, %v2681
        %v2684 = vperm.slane %v2568, %v1427
        %v2685 = vperm.slane %v2571, %v1429
        %v2686 = vsel %vm1431, %v2685, %v2684
        %v2687 = vperm.slane %v2574, %v1427
        %v2688 = vperm.slane %v2577, %v1429
        %v2689 = vsel %vm1431, %v2688, %v2687
        %v2690 = vperm.slane %v2580, %v1427
        %v2691 = vperm.slane %v2583, %v1429
        %v2692 = vsel %vm1431, %v2691, %v2690
        %v2693 = vperm.slane %v2586, %v1427
        %v2694 = vperm.slane %v2589, %v1429
        %v2695 = vsel %vm1431, %v2694, %v2693
        %v2696 = vperm.slane %v2592, %v1427
        %v2697 = vperm.slane %v2595, %v1429
        %v2698 = vsel %vm1431, %v2697, %v2696
        %v2699 = vperm.slane %v2598, %v1427
        %v2700 = vperm.slane %v2601, %v1429
        %v2701 = vsel %vm1431, %v2700, %v2699
        %v2702 = vperm.slane %v2604, %v1427
        %v2703 = vperm.slane %v2607, %v1429
        %v2704 = vsel %vm1431, %v2703, %v2702
        %v2705 = vperm.slane %v2610, %v1427
        %v2706 = vperm.slane %v2613, %v1429
        %v2707 = vsel %vm1431, %v2706, %v2705
        %v2708 = vperm.slane %v2616, %v1427
        %v2709 = vperm.slane %v2619, %v1429
        %v2710 = vsel %vm1431, %v2709, %v2708
        %v2711 = vperm.slane %v2622, %v1427
        %v2712 = vperm.slane %v2625, %v1429
        %v2713 = vsel %vm1431, %v2712, %v2711
        %v2714 = vsel %vm1478, %v2671, %v2668
        %v2715 = vsel %vm1480, %v2674, %v2714
        %v2716 = vsel %vm1482, %v2677, %v2715
        %v2717 = vsel %vm1484, %v2680, %v2716
        %v2718 = vsel %vm1486, %v2683, %v2717
        %v2719 = vsel %vm1488, %v2686, %v2718
        %v2720 = vsel %vm1490, %v2689, %v2719
        %v2721 = vsel %vm1478, %v2695, %v2692
        %v2722 = vsel %vm1480, %v2698, %v2721
        %v2723 = vsel %vm1482, %v2701, %v2722
        %v2724 = vsel %vm1484, %v2704, %v2723
        %v2725 = vsel %vm1486, %v2707, %v2724
        %v2726 = vsel %vm1488, %v2710, %v2725
        %v2727 = vsel %vm1490, %v2713, %v2726
        %v2730 = vsel %vm1297, %v2627, 0
        %v2732 = vsel %vm1297, %v2629, 0
        %v2734 = vsel %vm1297, %v2631, 0
        %v2736 = vsel %vm1297, %v2633, 0
        %2738 = vmatpush.xpose.msra.mxu0 0.0
        %2739 = vmatpush.xpose.msra.mxu0 0.0
        %2740 = vmatpush.xpose.msra.mxu0 0.0
        %2741 = vmatpush.xpose.msra.mxu0 0.0
        %2742 = vmatpush.xpose.msra.mxu0 0.0
        %2743 = vmatpush.xpose.msra.mxu0 0.0
        %2744 = vmatpush.xpose.msra.mxu0 0.0
        %2745 = vmatpush.xpose.msra.mxu0 0.0
        %2746 = vmatpush.xpose.msra.mxu0 0.0
        %2747 = vmatpush.xpose.msra.mxu0 0.0
        %2748 = vmatpush.xpose.msra.mxu0 0.0
        %2749 = vmatpush.xpose.msra.mxu0 0.0
        %2750 = vmatpush.xpose.msra.mxu0 0.0
        %2751 = vmatpush.xpose.msra.mxu0 0.0
        %2752 = vmatpush.xpose.msra.mxu0 %v2736
        %2753 = vmatpush.xpose.msra.mxu0 %v2734
        %2754 = vmatmul.f32.gmra.mxu0 %v2730
        %v2755 = vpop.f32.mrf.mxu0
        %v2756 = vadd.f32 %v2720, %v2755
        %2757 = vmatmul.f32.gmra.mxu0 %v2732
        %v2758 = vpop.f32.mrf.mxu0
        %v2759 = vadd.f32 %v2727, %v2758
        %2760 = vdwg.mxu0
        %v2761 = vsel %vm1534, %v2756, -inf
        %2762 = vmax.xlane.f32.xlu0 %v2761
        %v2763 = vpop.xlane.xlu0 %2762
        %v2764 = vsel %vm1534, %v2759, -inf
        %2765 = vmax.xlane.f32.xlu0 %v2764
        %v2766 = vpop.xlane.xlu0 %2765
        %v2767 = vsub.f32 %v2756, %v2763
        %v2768 = vsub.f32 %v2759, %v2766
        %v2769 = vmul.f32 %v2767, 1.442695
        %v2770 = vpow.pop %v2769
        %v2771 = vmul.f32 %v2768, 1.442695
        %v2772 = vpow.pop %v2771
        %v2773 = vsel %vm1534, %v2770, 0.0
        %2774 = vadd.xlane.f32.xlu0 %v2773
        %v2775 = vpop.xlane.xlu0 %2774
        %v2776 = vsel %vm1534, %v2772, 0.0
        %2777 = vadd.xlane.f32.xlu0 %v2776
        %v2778 = vpop.xlane.xlu0 %2777
        %v2779 = vrcp.pop %v2775
        %v2780 = vmul.f32 %v2775, %v2779
        %v2781 = vsub.f32 1.0, %v2780
        %v2782 = vmul.f32 %v2779, %v2781
        %v2783 = vadd.f32 %v2779, %v2782
        %vm2784 = vweird.f32 %v2775
        %vm2785 = vweird.f32 %v2779
        %vm2786 = vmor %vm2784, %vm2785
        %v2787 = vsel %vm2786, %v2779, %v2783
        %v2788 = vand.u32 2147483647, %v2775
        %vm2789 = vcmp.eq.f32.partialorder %v2788, 8.507059e+37
        %v2790 = vand.u32 %v2775, 2147483648
        %v2791 = vor.u32 1.1754944e-38, %v2790
        %v2792 = vsel %vm2789, %v2791, %v2787
        %v2793 = vmul.f32 %v2770, %v2792
        %v2794 = vrcp.pop %v2778
        %v2795 = vmul.f32 %v2778, %v2794
        %v2796 = vsub.f32 1.0, %v2795
        %v2797 = vmul.f32 %v2794, %v2796
        %v2798 = vadd.f32 %v2794, %v2797
        %vm2799 = vweird.f32 %v2778
        %vm2800 = vweird.f32 %v2794
        %vm2801 = vmor %vm2799, %vm2800
        %v2802 = vsel %vm2801, %v2794, %v2798
        %v2803 = vand.u32 2147483647, %v2778
        %vm2804 = vcmp.eq.f32.partialorder %v2803, 8.507059e+37
        %v2805 = vand.u32 %v2778, 2147483648
        %v2806 = vor.u32 1.1754944e-38, %v2805
        %v2807 = vsel %vm2804, %v2806, %v2802
        %v2808 = vmul.f32 %v2772, %v2807
        %2809 = vrot.lane.b32.xlu0 %v1206, 112
        %v2810 = vpop.permute.xlu0 %2809
        %2811 = vrot.lane.b32.xlu0 %v1209, 112
        %v2812 = vpop.permute.xlu0 %2811
        %v2816 = vsel %vm1534, %v2793, 0
        %v2819 = vsel %vm1534, %v2808, 0
        %2821 = vmatpush.msra.mxu0 0.0
        %2822 = vmatpush.msra.mxu0 0.0
        %2823 = vmatpush.msra.mxu0 0.0
        %2824 = vmatpush.msra.mxu0 0.0
        %2825 = vmatpush.msra.mxu0 0.0
        %2826 = vmatpush.msra.mxu0 0.0
        %2827 = vmatpush.msra.mxu0 0.0
        %2828 = vmatpush.msra.mxu0 0.0
        %2829 = vmatpush.msra.mxu0 0.0
        %2830 = vmatpush.msra.mxu0 0.0
        %2831 = vmatpush.msra.mxu0 0.0
        %2832 = vmatpush.msra.mxu0 0.0
        %2833 = vmatpush.msra.mxu0 0.0
        %2834 = vmatpush.msra.mxu0 0.0
        %2835 = vmatpush.msra.mxu0 %v2812
        %2836 = vmatpush.msra.mxu0 %v2810
        %2837 = vmatmul.f32.gmra.mxu0 %v2816
        %v2838 = vpop.f32.mrf.mxu0
        %v2839 = vadd.f32 0.0, %v2838
        %2840 = vmatmul.f32.gmra.mxu0 %v2819
        %v2841 = vpop.f32.mrf.mxu0
        %v2842 = vadd.f32 0.0, %v2841
        %2843 = vdwg.mxu0
        %v2845 = vsel %vm1297, %v2839, 0
        %v2848 = vsel %vm1297, %v2842, 0
        %2850 = vmatpush.msra.mxu0 0.0
        %2851 = vmatpush.msra.mxu0 0.0
        %2852 = vmatpush.msra.mxu0 0.0
        %2853 = vmatpush.msra.mxu0 0.0
        %2854 = vmatpush.msra.mxu0 0.0
        %2855 = vmatpush.msra.mxu0 0.0
        %2856 = vmatpush.msra.mxu0 0.0
        %2857 = vmatpush.msra.mxu0 0.0
        %2858 = vmatpush.msra.mxu0 0.0
        %2859 = vmatpush.msra.mxu0 0.0
        %2860 = vmatpush.msra.mxu0 0.0
        %2861 = vmatpush.msra.mxu0 0.0
        %2862 = vmatpush.msra.mxu0 0.0
        %2863 = vmatpush.msra.mxu0 0.0
        %2864 = vmatpush.msra.mxu0 0.0
        %2865 = vmatpush.msra.mxu0 %v1215
        %2866 = vmatmul.f32.gmra.mxu0 %v2845
        %v2867 = vpop.f32.mrf.mxu0
        %v2868 = vadd.f32 0.0, %v2867
        %2869 = vmatmul.f32.gmra.mxu0 %v2848
        %v2870 = vpop.f32.mrf.mxu0
        %v2871 = vadd.f32 0.0, %v2870
        %2872 = vdwg.mxu0
        %v2873 = vadd.f32 %v2269, %v2868
        %v2874 = vadd.f32 %v2272, %v2871
        %2875 = vrot.lane.b32.xlu0 %v1017, 24
        %v2876 = vpop.permute.xlu0 %2875
        %2877 = vrot.lane.b32.xlu0 %v1018, 24
        %v2878 = vpop.permute.xlu0 %2877
        %2879 = vrot.lane.b32.xlu0 %v1019, 24
        %v2880 = vpop.permute.xlu0 %2879
        %2881 = vrot.lane.b32.xlu0 %v1020, 24
        %v2882 = vpop.permute.xlu0 %2881
        %2883 = vrot.lane.b32.xlu0 %v1021, 24
        %v2884 = vpop.permute.xlu0 %2883
        %2885 = vrot.lane.b32.xlu0 %v1022, 24
        %v2886 = vpop.permute.xlu0 %2885
        %2887 = vrot.lane.b32.xlu0 %v1023, 24
        %v2888 = vpop.permute.xlu0 %2887
        %2889 = vrot.lane.b32.xlu0 %v1024, 24
        %v2890 = vpop.permute.xlu0 %2889
        %2891 = vrot.lane.b32.xlu0 %v1025, 24
        %v2892 = vpop.permute.xlu0 %2891
        %2893 = vrot.lane.b32.xlu0 %v1026, 24
        %v2894 = vpop.permute.xlu0 %2893
        %2895 = vrot.lane.b32.xlu0 %v1027, 24
        %v2896 = vpop.permute.xlu0 %2895
        %2897 = vrot.lane.b32.xlu0 %v1028, 24
        %v2898 = vpop.permute.xlu0 %2897
        %2899 = vrot.lane.b32.xlu0 %v1029, 24
        %v2900 = vpop.permute.xlu0 %2899
        %2901 = vrot.lane.b32.xlu0 %v1030, 24
        %v2902 = vpop.permute.xlu0 %2901
        %2903 = vrot.lane.b32.xlu0 %v1031, 24
        %v2904 = vpop.permute.xlu0 %2903
        %2905 = vrot.lane.b32.xlu0 %v1032, 24
        %v2906 = vpop.permute.xlu0 %2905
        %2907 = vrot.lane.b32.xlu0 %v1033, 24
        %v2908 = vpop.permute.xlu0 %2907
        %2909 = vrot.lane.b32.xlu0 %v1034, 24
        %v2910 = vpop.permute.xlu0 %2909
        %2911 = vrot.lane.b32.xlu0 %v1035, 24
        %v2912 = vpop.permute.xlu0 %2911
        %2913 = vrot.lane.b32.xlu0 %v1036, 24
        %v2914 = vpop.permute.xlu0 %2913
        %2915 = vrot.lane.b32.xlu0 %v1037, 24
        %v2916 = vpop.permute.xlu0 %2915
        %2917 = vrot.lane.b32.xlu0 %v1038, 24
        %v2918 = vpop.permute.xlu0 %2917
        %2919 = vrot.lane.b32.xlu0 %v1039, 24
        %v2920 = vpop.permute.xlu0 %2919
        %2921 = vrot.lane.b32.xlu0 %v1040, 24
        %v2922 = vpop.permute.xlu0 %2921
        %2923 = vrot.lane.b32.xlu0 %v1041, 24
        %v2924 = vpop.permute.xlu0 %2923
        %2925 = vrot.lane.b32.xlu0 %v1042, 24
        %v2926 = vpop.permute.xlu0 %2925
        %2927 = vrot.lane.b32.xlu0 %v1043, 24
        %v2928 = vpop.permute.xlu0 %2927
        %2929 = vrot.lane.b32.xlu0 %v1044, 24
        %v2930 = vpop.permute.xlu0 %2929
        %2931 = vrot.lane.b32.xlu0 %v1045, 24
        %v2932 = vpop.permute.xlu0 %2931
        %2933 = vrot.lane.b32.xlu0 %v1046, 24
        %v2934 = vpop.permute.xlu0 %2933
        %2935 = vrot.lane.b32.xlu0 %v1047, 24
        %v2936 = vpop.permute.xlu0 %2935
        %2937 = vrot.lane.b32.xlu0 %v1048, 24
        %v2938 = vpop.permute.xlu0 %2937
        %v2971 = vmul.f32 %v1233, %v2876
        %v2972 = vmul.f32 %v1233, %v2878
        %v2973 = vmul.f32 %v1234, %v2880
        %v2974 = vmul.f32 %v1234, %v2882
        %v2975 = vmul.f32 %v1235, %v2884
        %v2976 = vmul.f32 %v1235, %v2886
        %v2977 = vmul.f32 %v1236, %v2888
        %v2978 = vmul.f32 %v1236, %v2890
        %v2979 = vmul.f32 %v1237, %v2892
        %v2980 = vmul.f32 %v1237, %v2894
        %v2981 = vmul.f32 %v1238, %v2896
        %v2982 = vmul.f32 %v1238, %v2898
        %v2983 = vmul.f32 %v1239, %v2900
        %v2984 = vmul.f32 %v1239, %v2902
        %v2985 = vmul.f32 %v1240, %v2904
        %v2986 = vmul.f32 %v1240, %v2906
        %v2987 = vmul.f32 %v1241, %v2908
        %v2988 = vmul.f32 %v1241, %v2910
        %v2989 = vmul.f32 %v1242, %v2912
        %v2990 = vmul.f32 %v1242, %v2914
        %v2991 = vmul.f32 %v1243, %v2916
        %v2992 = vmul.f32 %v1243, %v2918
        %v2993 = vmul.f32 %v1244, %v2920
        %v2994 = vmul.f32 %v1244, %v2922
        %v2995 = vmul.f32 %v1245, %v2924
        %v2996 = vmul.f32 %v1245, %v2926
        %v2997 = vmul.f32 %v1246, %v2928
        %v2998 = vmul.f32 %v1246, %v2930
        %v2999 = vmul.f32 %v1247, %v2932
        %v3000 = vmul.f32 %v1247, %v2934
        %v3001 = vmul.f32 %v1248, %v2936
        %v3002 = vmul.f32 %v1248, %v2938
        %3035 = vrot.lane.b32.xlu0 %v2971, 104
        %v3036 = vpop.permute.xlu0 %3035
        %3037 = vrot.lane.b32.xlu0 %v2972, 104
        %v3038 = vpop.permute.xlu0 %3037
        %3039 = vrot.lane.b32.xlu0 %v2973, 104
        %v3040 = vpop.permute.xlu0 %3039
        %3041 = vrot.lane.b32.xlu0 %v2974, 104
        %v3042 = vpop.permute.xlu0 %3041
        %3043 = vrot.lane.b32.xlu0 %v2975, 104
        %v3044 = vpop.permute.xlu0 %3043
        %3045 = vrot.lane.b32.xlu0 %v2976, 104
        %v3046 = vpop.permute.xlu0 %3045
        %3047 = vrot.lane.b32.xlu0 %v2977, 104
        %v3048 = vpop.permute.xlu0 %3047
        %3049 = vrot.lane.b32.xlu0 %v2978, 104
        %v3050 = vpop.permute.xlu0 %3049
        %3051 = vrot.lane.b32.xlu0 %v2979, 104
        %v3052 = vpop.permute.xlu0 %3051
        %3053 = vrot.lane.b32.xlu0 %v2980, 104
        %v3054 = vpop.permute.xlu0 %3053
        %3055 = vrot.lane.b32.xlu0 %v2981, 104
        %v3056 = vpop.permute.xlu0 %3055
        %3057 = vrot.lane.b32.xlu0 %v2982, 104
        %v3058 = vpop.permute.xlu0 %3057
        %3059 = vrot.lane.b32.xlu0 %v2983, 104
        %v3060 = vpop.permute.xlu0 %3059
        %3061 = vrot.lane.b32.xlu0 %v2984, 104
        %v3062 = vpop.permute.xlu0 %3061
        %3063 = vrot.lane.b32.xlu0 %v2985, 104
        %v3064 = vpop.permute.xlu0 %3063
        %3065 = vrot.lane.b32.xlu0 %v2986, 104
        %v3066 = vpop.permute.xlu0 %3065
        %3067 = vrot.lane.b32.xlu0 %v2987, 104
        %v3068 = vpop.permute.xlu0 %3067
        %3069 = vrot.lane.b32.xlu0 %v2988, 104
        %v3070 = vpop.permute.xlu0 %3069
        %3071 = vrot.lane.b32.xlu0 %v2989, 104
        %v3072 = vpop.permute.xlu0 %3071
        %3073 = vrot.lane.b32.xlu0 %v2990, 104
        %v3074 = vpop.permute.xlu0 %3073
        %3075 = vrot.lane.b32.xlu0 %v2991, 104
        %v3076 = vpop.permute.xlu0 %3075
        %3077 = vrot.lane.b32.xlu0 %v2992, 104
        %v3078 = vpop.permute.xlu0 %3077
        %3079 = vrot.lane.b32.xlu0 %v2993, 104
        %v3080 = vpop.permute.xlu0 %3079
        %3081 = vrot.lane.b32.xlu0 %v2994, 104
        %v3082 = vpop.permute.xlu0 %3081
        %3083 = vrot.lane.b32.xlu0 %v2995, 104
        %v3084 = vpop.permute.xlu0 %3083
        %3085 = vrot.lane.b32.xlu0 %v2996, 104
        %v3086 = vpop.permute.xlu0 %3085
        %3087 = vrot.lane.b32.xlu0 %v2997, 104
        %v3088 = vpop.permute.xlu0 %3087
        %3089 = vrot.lane.b32.xlu0 %v2998, 104
        %v3090 = vpop.permute.xlu0 %3089
        %3091 = vrot.lane.b32.xlu0 %v2999, 104
        %v3092 = vpop.permute.xlu0 %3091
        %3093 = vrot.lane.b32.xlu0 %v3000, 104
        %v3094 = vpop.permute.xlu0 %3093
        %3095 = vrot.lane.b32.xlu0 %v3001, 104
        %v3096 = vpop.permute.xlu0 %3095
        %3097 = vrot.lane.b32.xlu0 %v3002, 104
        %v3098 = vpop.permute.xlu0 %3097
        %v3131 = vsel %vm1297, %v3036, 0.0
        %3132 = vadd.xlane.f32.xlu0 %v3131
        %v3133 = vpop.xlane.xlu0 %3132
        %v3134 = vsel %vm1297, %v3038, 0.0
        %3135 = vadd.xlane.f32.xlu0 %v3134
        %v3136 = vpop.xlane.xlu0 %3135
        %v3137 = vsel %vm1297, %v3040, 0.0
        %3138 = vadd.xlane.f32.xlu0 %v3137
        %v3139 = vpop.xlane.xlu0 %3138
        %v3140 = vsel %vm1297, %v3042, 0.0
        %3141 = vadd.xlane.f32.xlu0 %v3140
        %v3142 = vpop.xlane.xlu0 %3141
        %v3143 = vsel %vm1297, %v3044, 0.0
        %3144 = vadd.xlane.f32.xlu0 %v3143
        %v3145 = vpop.xlane.xlu0 %3144
        %v3146 = vsel %vm1297, %v3046, 0.0
        %3147 = vadd.xlane.f32.xlu0 %v3146
        %v3148 = vpop.xlane.xlu0 %3147
        %v3149 = vsel %vm1297, %v3048, 0.0
        %3150 = vadd.xlane.f32.xlu0 %v3149
        %v3151 = vpop.xlane.xlu0 %3150
        %v3152 = vsel %vm1297, %v3050, 0.0
        %3153 = vadd.xlane.f32.xlu0 %v3152
        %v3154 = vpop.xlane.xlu0 %3153
        %v3155 = vsel %vm1297, %v3052, 0.0
        %3156 = vadd.xlane.f32.xlu0 %v3155
        %v3157 = vpop.xlane.xlu0 %3156
        %v3158 = vsel %vm1297, %v3054, 0.0
        %3159 = vadd.xlane.f32.xlu0 %v3158
        %v3160 = vpop.xlane.xlu0 %3159
        %v3161 = vsel %vm1297, %v3056, 0.0
        %3162 = vadd.xlane.f32.xlu0 %v3161
        %v3163 = vpop.xlane.xlu0 %3162
        %v3164 = vsel %vm1297, %v3058, 0.0
        %3165 = vadd.xlane.f32.xlu0 %v3164
        %v3166 = vpop.xlane.xlu0 %3165
        %v3167 = vsel %vm1297, %v3060, 0.0
        %3168 = vadd.xlane.f32.xlu0 %v3167
        %v3169 = vpop.xlane.xlu0 %3168
        %v3170 = vsel %vm1297, %v3062, 0.0
        %3171 = vadd.xlane.f32.xlu0 %v3170
        %v3172 = vpop.xlane.xlu0 %3171
        %v3173 = vsel %vm1297, %v3064, 0.0
        %3174 = vadd.xlane.f32.xlu0 %v3173
        %v3175 = vpop.xlane.xlu0 %3174
        %v3176 = vsel %vm1297, %v3066, 0.0
        %3177 = vadd.xlane.f32.xlu0 %v3176
        %v3178 = vpop.xlane.xlu0 %3177
        %v3179 = vsel %vm1297, %v3068, 0.0
        %3180 = vadd.xlane.f32.xlu0 %v3179
        %v3181 = vpop.xlane.xlu0 %3180
        %v3182 = vsel %vm1297, %v3070, 0.0
        %3183 = vadd.xlane.f32.xlu0 %v3182
        %v3184 = vpop.xlane.xlu0 %3183
        %v3185 = vsel %vm1297, %v3072, 0.0
        %3186 = vadd.xlane.f32.xlu0 %v3185
        %v3187 = vpop.xlane.xlu0 %3186
        %v3188 = vsel %vm1297, %v3074, 0.0
        %3189 = vadd.xlane.f32.xlu0 %v3188
        %v3190 = vpop.xlane.xlu0 %3189
        %v3191 = vsel %vm1297, %v3076, 0.0
        %3192 = vadd.xlane.f32.xlu0 %v3191
        %v3193 = vpop.xlane.xlu0 %3192
        %v3194 = vsel %vm1297, %v3078, 0.0
        %3195 = vadd.xlane.f32.xlu0 %v3194
        %v3196 = vpop.xlane.xlu0 %3195
        %v3197 = vsel %vm1297, %v3080, 0.0
        %3198 = vadd.xlane.f32.xlu0 %v3197
        %v3199 = vpop.xlane.xlu0 %3198
        %v3200 = vsel %vm1297, %v3082, 0.0
        %3201 = vadd.xlane.f32.xlu0 %v3200
        %v3202 = vpop.xlane.xlu0 %3201
        %v3203 = vsel %vm1297, %v3084, 0.0
        %3204 = vadd.xlane.f32.xlu0 %v3203
        %v3205 = vpop.xlane.xlu0 %3204
        %v3206 = vsel %vm1297, %v3086, 0.0
        %3207 = vadd.xlane.f32.xlu0 %v3206
        %v3208 = vpop.xlane.xlu0 %3207
        %v3209 = vsel %vm1297, %v3088, 0.0
        %3210 = vadd.xlane.f32.xlu0 %v3209
        %v3211 = vpop.xlane.xlu0 %3210
        %v3212 = vsel %vm1297, %v3090, 0.0
        %3213 = vadd.xlane.f32.xlu0 %v3212
        %v3214 = vpop.xlane.xlu0 %3213
        %v3215 = vsel %vm1297, %v3092, 0.0
        %3216 = vadd.xlane.f32.xlu0 %v3215
        %v3217 = vpop.xlane.xlu0 %3216
        %v3218 = vsel %vm1297, %v3094, 0.0
        %3219 = vadd.xlane.f32.xlu0 %v3218
        %v3220 = vpop.xlane.xlu0 %3219
        %v3221 = vsel %vm1297, %v3096, 0.0
        %3222 = vadd.xlane.f32.xlu0 %v3221
        %v3223 = vpop.xlane.xlu0 %3222
        %v3224 = vsel %vm1297, %v3098, 0.0
        %3225 = vadd.xlane.f32.xlu0 %v3224
        %v3226 = vpop.xlane.xlu0 %3225
        %3227 = vrot.lane.b32.xlu0 %v1211, 104
        %v3228 = vpop.permute.xlu0 %3227
        %3229 = vrot.lane.b32.xlu0 %v1212, 104
        %v3230 = vpop.permute.xlu0 %3229
        %3231 = vrot.lane.b32.xlu0 %v1175, 104
        %v3232 = vpop.permute.xlu0 %3231
        %3233 = vrot.lane.b32.xlu0 %v1178, 104
        %v3234 = vpop.permute.xlu0 %3233
        %v3267 = vperm.slane %v3133, %v1427
        %v3268 = vperm.slane %v3136, %v1429
        %v3269 = vsel %vm1431, %v3268, %v3267
        %v3270 = vperm.slane %v3139, %v1427
        %v3271 = vperm.slane %v3142, %v1429
        %v3272 = vsel %vm1431, %v3271, %v3270
        %v3273 = vperm.slane %v3145, %v1427
        %v3274 = vperm.slane %v3148, %v1429
        %v3275 = vsel %vm1431, %v3274, %v3273
        %v3276 = vperm.slane %v3151, %v1427
        %v3277 = vperm.slane %v3154, %v1429
        %v3278 = vsel %vm1431, %v3277, %v3276
        %v3279 = vperm.slane %v3157, %v1427
        %v3280 = vperm.slane %v3160, %v1429
        %v3281 = vsel %vm1431, %v3280, %v3279
        %v3282 = vperm.slane %v3163, %v1427
        %v3283 = vperm.slane %v3166, %v1429
        %v3284 = vsel %vm1431, %v3283, %v3282
        %v3285 = vperm.slane %v3169, %v1427
        %v3286 = vperm.slane %v3172, %v1429
        %v3287 = vsel %vm1431, %v3286, %v3285
        %v3288 = vperm.slane %v3175, %v1427
        %v3289 = vperm.slane %v3178, %v1429
        %v3290 = vsel %vm1431, %v3289, %v3288
        %v3291 = vperm.slane %v3181, %v1427
        %v3292 = vperm.slane %v3184, %v1429
        %v3293 = vsel %vm1431, %v3292, %v3291
        %v3294 = vperm.slane %v3187, %v1427
        %v3295 = vperm.slane %v3190, %v1429
        %v3296 = vsel %vm1431, %v3295, %v3294
        %v3297 = vperm.slane %v3193, %v1427
        %v3298 = vperm.slane %v3196, %v1429
        %v3299 = vsel %vm1431, %v3298, %v3297
        %v3300 = vperm.slane %v3199, %v1427
        %v3301 = vperm.slane %v3202, %v1429
        %v3302 = vsel %vm1431, %v3301, %v3300
        %v3303 = vperm.slane %v3205, %v1427
        %v3304 = vperm.slane %v3208, %v1429
        %v3305 = vsel %vm1431, %v3304, %v3303
        %v3306 = vperm.slane %v3211, %v1427
        %v3307 = vperm.slane %v3214, %v1429
        %v3308 = vsel %vm1431, %v3307, %v3306
        %v3309 = vperm.slane %v3217, %v1427
        %v3310 = vperm.slane %v3220, %v1429
        %v3311 = vsel %vm1431, %v3310, %v3309
        %v3312 = vperm.slane %v3223, %v1427
        %v3313 = vperm.slane %v3226, %v1429
        %v3314 = vsel %vm1431, %v3313, %v3312
        %v3315 = vsel %vm1478, %v3272, %v3269
        %v3316 = vsel %vm1480, %v3275, %v3315
        %v3317 = vsel %vm1482, %v3278, %v3316
        %v3318 = vsel %vm1484, %v3281, %v3317
        %v3319 = vsel %vm1486, %v3284, %v3318
        %v3320 = vsel %vm1488, %v3287, %v3319
        %v3321 = vsel %vm1490, %v3290, %v3320
        %v3322 = vsel %vm1478, %v3296, %v3293
        %v3323 = vsel %vm1480, %v3299, %v3322
        %v3324 = vsel %vm1482, %v3302, %v3323
        %v3325 = vsel %vm1484, %v3305, %v3324
        %v3326 = vsel %vm1486, %v3308, %v3325
        %v3327 = vsel %vm1488, %v3311, %v3326
        %v3328 = vsel %vm1490, %v3314, %v3327
        %v3331 = vsel %vm1297, %v3228, 0
        %v3333 = vsel %vm1297, %v3230, 0
        %v3335 = vsel %vm1297, %v3232, 0
        %v3337 = vsel %vm1297, %v3234, 0
        %3339 = vmatpush.xpose.msra.mxu0 0.0
        %3340 = vmatpush.xpose.msra.mxu0 0.0
        %3341 = vmatpush.xpose.msra.mxu0 0.0
        %3342 = vmatpush.xpose.msra.mxu0 0.0
        %3343 = vmatpush.xpose.msra.mxu0 0.0
        %3344 = vmatpush.xpose.msra.mxu0 0.0
        %3345 = vmatpush.xpose.msra.mxu0 0.0
        %3346 = vmatpush.xpose.msra.mxu0 0.0
        %3347 = vmatpush.xpose.msra.mxu0 0.0
        %3348 = vmatpush.xpose.msra.mxu0 0.0
        %3349 = vmatpush.xpose.msra.mxu0 0.0
        %3350 = vmatpush.xpose.msra.mxu0 0.0
        %3351 = vmatpush.xpose.msra.mxu0 0.0
        %3352 = vmatpush.xpose.msra.mxu0 0.0
        %3353 = vmatpush.xpose.msra.mxu0 %v3337
        %3354 = vmatpush.xpose.msra.mxu0 %v3335
        %3355 = vmatmul.f32.gmra.mxu0 %v3331
        %v3356 = vpop.f32.mrf.mxu0
        %v3357 = vadd.f32 %v3321, %v3356
        %3358 = vmatmul.f32.gmra.mxu0 %v3333
        %v3359 = vpop.f32.mrf.mxu0
        %v3360 = vadd.f32 %v3328, %v3359
        %3361 = vdwg.mxu0
        %v3362 = vsel %vm1534, %v3357, -inf
        %3363 = vmax.xlane.f32.xlu0 %v3362
        %v3364 = vpop.xlane.xlu0 %3363
        %v3365 = vsel %vm1534, %v3360, -inf
        %3366 = vmax.xlane.f32.xlu0 %v3365
        %v3367 = vpop.xlane.xlu0 %3366
        %v3368 = vsub.f32 %v3357, %v3364
        %v3369 = vsub.f32 %v3360, %v3367
        %v3370 = vmul.f32 %v3368, 1.442695
        %v3371 = vpow.pop %v3370
        %v3372 = vmul.f32 %v3369, 1.442695
        %v3373 = vpow.pop %v3372
        %v3374 = vsel %vm1534, %v3371, 0.0
        %3375 = vadd.xlane.f32.xlu0 %v3374
        %v3376 = vpop.xlane.xlu0 %3375
        %v3377 = vsel %vm1534, %v3373, 0.0
        %3378 = vadd.xlane.f32.xlu0 %v3377
        %v3379 = vpop.xlane.xlu0 %3378
        %v3380 = vrcp.pop %v3376
        %v3381 = vmul.f32 %v3376, %v3380
        %v3382 = vsub.f32 1.0, %v3381
        %v3383 = vmul.f32 %v3380, %v3382
        %v3384 = vadd.f32 %v3380, %v3383
        %vm3385 = vweird.f32 %v3376
        %vm3386 = vweird.f32 %v3380
        %vm3387 = vmor %vm3385, %vm3386
        %v3388 = vsel %vm3387, %v3380, %v3384
        %v3389 = vand.u32 2147483647, %v3376
        %vm3390 = vcmp.eq.f32.partialorder %v3389, 8.507059e+37
        %v3391 = vand.u32 %v3376, 2147483648
        %v3392 = vor.u32 1.1754944e-38, %v3391
        %v3393 = vsel %vm3390, %v3392, %v3388
        %v3394 = vmul.f32 %v3371, %v3393
        %v3395 = vrcp.pop %v3379
        %v3396 = vmul.f32 %v3379, %v3395
        %v3397 = vsub.f32 1.0, %v3396
        %v3398 = vmul.f32 %v3395, %v3397
        %v3399 = vadd.f32 %v3395, %v3398
        %vm3400 = vweird.f32 %v3379
        %vm3401 = vweird.f32 %v3395
        %vm3402 = vmor %vm3400, %vm3401
        %v3403 = vsel %vm3402, %v3395, %v3399
        %v3404 = vand.u32 2147483647, %v3379
        %vm3405 = vcmp.eq.f32.partialorder %v3404, 8.507059e+37
        %v3406 = vand.u32 %v3379, 2147483648
        %v3407 = vor.u32 1.1754944e-38, %v3406
        %v3408 = vsel %vm3405, %v3407, %v3403
        %v3409 = vmul.f32 %v3373, %v3408
        %3410 = vrot.lane.b32.xlu0 %v1206, 104
        %v3411 = vpop.permute.xlu0 %3410
        %3412 = vrot.lane.b32.xlu0 %v1209, 104
        %v3413 = vpop.permute.xlu0 %3412
        %v3417 = vsel %vm1534, %v3394, 0
        %v3420 = vsel %vm1534, %v3409, 0
        %3422 = vmatpush.msra.mxu0 0.0
        %3423 = vmatpush.msra.mxu0 0.0
        %3424 = vmatpush.msra.mxu0 0.0
        %3425 = vmatpush.msra.mxu0 0.0
        %3426 = vmatpush.msra.mxu0 0.0
        %3427 = vmatpush.msra.mxu0 0.0
        %3428 = vmatpush.msra.mxu0 0.0
        %3429 = vmatpush.msra.mxu0 0.0
        %3430 = vmatpush.msra.mxu0 0.0
        %3431 = vmatpush.msra.mxu0 0.0
        %3432 = vmatpush.msra.mxu0 0.0
        %3433 = vmatpush.msra.mxu0 0.0
        %3434 = vmatpush.msra.mxu0 0.0
        %3435 = vmatpush.msra.mxu0 0.0
        %3436 = vmatpush.msra.mxu0 %v3413
        %3437 = vmatpush.msra.mxu0 %v3411
        %3438 = vmatmul.f32.gmra.mxu0 %v3417
        %v3439 = vpop.f32.mrf.mxu0
        %v3440 = vadd.f32 0.0, %v3439
        %3441 = vmatmul.f32.gmra.mxu0 %v3420
        %v3442 = vpop.f32.mrf.mxu0
        %v3443 = vadd.f32 0.0, %v3442
        %3444 = vdwg.mxu0
        %v3446 = vsel %vm1297, %v3440, 0
        %v3449 = vsel %vm1297, %v3443, 0
        %3451 = vmatpush.msra.mxu0 0.0
        %3452 = vmatpush.msra.mxu0 0.0
        %3453 = vmatpush.msra.mxu0 0.0
        %3454 = vmatpush.msra.mxu0 0.0
        %3455 = vmatpush.msra.mxu0 0.0
        %3456 = vmatpush.msra.mxu0 0.0
        %3457 = vmatpush.msra.mxu0 0.0
        %3458 = vmatpush.msra.mxu0 0.0
        %3459 = vmatpush.msra.mxu0 0.0
        %3460 = vmatpush.msra.mxu0 0.0
        %3461 = vmatpush.msra.mxu0 0.0
        %3462 = vmatpush.msra.mxu0 0.0
        %3463 = vmatpush.msra.mxu0 0.0
        %3464 = vmatpush.msra.mxu0 0.0
        %3465 = vmatpush.msra.mxu0 0.0
        %3466 = vmatpush.msra.mxu0 %v1216
        %3467 = vmatmul.f32.gmra.mxu0 %v3446
        %v3468 = vpop.f32.mrf.mxu0
        %v3469 = vadd.f32 0.0, %v3468
        %3470 = vmatmul.f32.gmra.mxu0 %v3449
        %v3471 = vpop.f32.mrf.mxu0
        %v3472 = vadd.f32 0.0, %v3471
        %3473 = vdwg.mxu0
        %v3474 = vadd.f32 %v2873, %v3469
        %v3475 = vadd.f32 %v2874, %v3472
        %v3476 = vld [vmem:[%s33] sm:$0x1]
        %v3478 = vperm.slane %v3476, 0
        %v3480 = vadd.f32 %v3474, %v3478
        %v3481 = vadd.f32 %v3475, %v3478
        %v3482 = vadd.f32 %v3480, %v1015
        %v3483 = vadd.f32 %v3481, %v1016
        %v3484 = vld [vmem:[%s35] sm:$0x1]
        %v3485 = vld [vmem:[%s37] sm:$0x1]
        %v3486 = vsel %vm979, %v3482, 0.0
        %3487 = vadd.xlane.f32.xlu0 %v3486
        %v3488 = vpop.xlane.xlu0 %3487
        %v3489 = vsel %vm979, %v3483, 0.0
        %3490 = vadd.xlane.f32.xlu0 %v3489
        %v3491 = vpop.xlane.xlu0 %3490
        %v3492 = vmul.f32 %v3488, %v1063
        %v3493 = vmul.f32 %v3491, %v1063
        %v3494 = vsub.f32 %v3482, %v3492
        %v3495 = vsub.f32 %v3483, %v3493
        %v3496 = vmul.f32 %v3494, %v3494
        %v3497 = vmul.f32 %v3495, %v3495
        %v3498 = vsel %vm979, %v3496, 0.0
        %3499 = vadd.xlane.f32.xlu0 %v3498
        %v3500 = vpop.xlane.xlu0 %3499
        %v3501 = vsel %vm979, %v3497, 0.0
        %3502 = vadd.xlane.f32.xlu0 %v3501
        %v3503 = vpop.xlane.xlu0 %3502
        %v3504 = vmul.f32 %v3500, %v1063
        %v3505 = vmul.f32 %v3503, %v1063
        %v3506 = vadd.f32 %v3504, 1e-05
        %v3507 = vadd.f32 %v3505, 1e-05
        %v3508 = vrsqrt.pop %v3506
        %v3509 = vmul.f32 %v3508, %v3506
        %v3510 = vmul.f32 %v3509, %v3508
        %v3511 = vmul.f32 0.5, %v3510
        %v3512 = vsub.f32 1.5, %v3511
        %v3513 = vmul.f32 %v3508, %v3512
        %vm3514 = vweird.f32 %v3506
        %vm3515 = vweird.f32 %v3508
        %vm3516 = vmor %vm3514, %vm3515
        %v3517 = vsel %vm3516, %v3508, %v3513
        %v3518 = vrsqrt.pop %v3507
        %v3519 = vmul.f32 %v3518, %v3507
        %v3520 = vmul.f32 %v3519, %v3518
        %v3521 = vmul.f32 0.5, %v3520
        %v3522 = vsub.f32 1.5, %v3521
        %v3523 = vmul.f32 %v3518, %v3522
        %vm3524 = vweird.f32 %v3507
        %vm3525 = vweird.f32 %v3518
        %vm3526 = vmor %vm3524, %vm3525
        %v3527 = vsel %vm3526, %v3518, %v3523
        %v3528 = vmul.f32 %v3494, %v3517
        %v3529 = vmul.f32 %v3495, %v3527
        %v3531 = vperm.slane %v3484, 0
        %v3533 = vmul.f32 %v3528, %v3531
        %v3534 = vmul.f32 %v3529, %v3531
        %v3536 = vperm.slane %v3485, 0
        %v3538 = vadd.f32 %v3533, %v3536
        %v3539 = vadd.f32 %v3534, %v3536
        %v3540 = vld [vmem:[%s39] sm:$0xff]
        %v3541 = vld [vmem:[%s39 + $0x8] sm:$0xff]
        %v3542 = vld [vmem:[%s39 + $0x10] sm:$0xff]
        %v3543 = vld [vmem:[%s39 + $0x18] sm:$0xff]
        %v3544 = vld [vmem:[%s41] sm:$0x1]
        %v3546 = vperm.slane %v3544, 0
        %v3549 = vsel %vm979, %v3538, 0
        %v3552 = vsel %vm979, %v3539, 0
        %3554 = vmatpush.msra.mxu0 0.0
        %3555 = vmatpush.msra.mxu0 0.0
        %3556 = vmatpush.msra.mxu0 0.0
        %3557 = vmatpush.msra.mxu0 0.0
        %3558 = vmatpush.msra.mxu0 0.0
        %3559 = vmatpush.msra.mxu0 0.0
        %3560 = vmatpush.msra.mxu0 0.0
        %3561 = vmatpush.msra.mxu0 0.0
        %3562 = vmatpush.msra.mxu0 0.0
        %3563 = vmatpush.msra.mxu0 0.0
        %3564 = vmatpush.msra.mxu0 0.0
        %3565 = vmatpush.msra.mxu0 0.0
        %3566 = vmatpush.msra.mxu0 %v3543
        %3567 = vmatpush.msra.mxu0 %v3542
        %3568 = vmatpush.msra.mxu0 %v3541
        %3569 = vmatpush.msra.mxu0 %v3540
        %3570 = vmatmul.f32.gmra.mxu0 %v3549
        %v3571 = vpop.f32.mrf.mxu0
        %v3572 = vadd.f32 %v3546, %v3571
        %3573 = vmatmul.f32.gmra.mxu0 %v3552
        %v3574 = vpop.f32.mrf.mxu0
        %v3575 = vadd.f32 %v3546, %v3574
        %3576 = vdwg.mxu0
        %s3577 = sld [smem:[#allocation2 + $0x4]]
        %vm3578 = vcmp.ge.f32.partialorder %v3572, 0.0
        %vm3579 = vcmp.ge.f32.partialorder %v3575, 0.0
        %v3580 = vstv %s3577
        %v3581 = vmul.f32 %v3580, %v3572
        %v3582 = vmul.f32 %v3580, %v3575
        %v3583 = vsel %vm3578, %v3572, %v3581
        %v3584 = vsel %vm3579, %v3575, %v3582
        %v3585 = vld [vmem:[%s43] sm:$0xff]
        %v3586 = vld [vmem:[%s43 + $0x8] sm:$0xff]
        %v3587 = vld [vmem:[%s43 + $0x10] sm:$0xff]
        %v3588 = vld [vmem:[%s43 + $0x18] sm:$0xff]
        %v3589 = vld [vmem:[%s43 + $0x20] sm:$0xff]
        %v3590 = vld [vmem:[%s43 + $0x28] sm:$0xff]
        %v3591 = vld [vmem:[%s43 + $0x30] sm:$0xff]
        %v3592 = vld [vmem:[%s43 + $0x38] sm:$0xff]
        %v3593 = vld [vmem:[%s45] sm:$0x1]
        %v3595 = vperm.slane %v3593, 0
        %vm3597 = vcmask 523264
        %v3599 = vsel %vm3597, %v3583, 0
        %v3602 = vsel %vm3597, %v3584, 0
        %3604 = vmatpush.msra.mxu0 0.0
        %3605 = vmatpush.msra.mxu0 0.0
        %3606 = vmatpush.msra.mxu0 0.0
        %3607 = vmatpush.msra.mxu0 0.0
        %3608 = vmatpush.msra.mxu0 0.0
        %3609 = vmatpush.msra.mxu0 0.0
        %3610 = vmatpush.msra.mxu0 0.0
        %3611 = vmatpush.msra.mxu0 0.0
        %3612 = vmatpush.msra.mxu0 %v3592
        %3613 = vmatpush.msra.mxu0 %v3591
        %3614 = vmatpush.msra.mxu0 %v3590
        %3615 = vmatpush.msra.mxu0 %v3589
        %3616 = vmatpush.msra.mxu0 %v3588
        %3617 = vmatpush.msra.mxu0 %v3587
        %3618 = vmatpush.msra.mxu0 %v3586
        %3619 = vmatpush.msra.mxu0 %v3585
        %3620 = vmatmul.f32.gmra.mxu0 %v3599
        %v3621 = vpop.f32.mrf.mxu0
        %v3622 = vadd.f32 %v3595, %v3621
        %3623 = vmatmul.f32.gmra.mxu0 %v3602
        %v3624 = vpop.f32.mrf.mxu0
        %v3625 = vadd.f32 %v3595, %v3624
        %3626 = vdwg.mxu0
        %v3627 = vadd.f32 %v3622, %v3482
        %v3628 = vadd.f32 %v3625, %v3483
        %s3629 = scalar_lea.vmem %s15, 1
        %v3630 = vld [vmem:[%s3629] sm:$0x1]
        %s3631 = scalar_lea.vmem %s17, 1
        %v3632 = vld [vmem:[%s3631] sm:$0x1]
        %v3633 = vsel %vm979, %v3627, 0.0
        %3634 = vadd.xlane.f32.xlu0 %v3633
        %v3635 = vpop.xlane.xlu0 %3634
        %v3636 = vsel %vm979, %v3628, 0.0
        %3637 = vadd.xlane.f32.xlu0 %v3636
        %v3638 = vpop.xlane.xlu0 %3637
        %v3639 = vmul.f32 %v3635, %v1063
        %v3640 = vmul.f32 %v3638, %v1063
        %v3641 = vsub.f32 %v3627, %v3639
        %v3642 = vsub.f32 %v3628, %v3640
        %v3643 = vmul.f32 %v3641, %v3641
        %v3644 = vmul.f32 %v3642, %v3642
        %v3645 = vsel %vm979, %v3643, 0.0
        %3646 = vadd.xlane.f32.xlu0 %v3645
        %v3647 = vpop.xlane.xlu0 %3646
        %v3648 = vsel %vm979, %v3644, 0.0
        %3649 = vadd.xlane.f32.xlu0 %v3648
        %v3650 = vpop.xlane.xlu0 %3649
        %v3651 = vmul.f32 %v3647, %v1063
        %v3652 = vmul.f32 %v3650, %v1063
        %v3653 = vadd.f32 %v3651, 1e-05
        %v3654 = vadd.f32 %v3652, 1e-05
        %v3655 = vrsqrt.pop %v3653
        %v3656 = vmul.f32 %v3655, %v3653
        %v3657 = vmul.f32 %v3656, %v3655
        %v3658 = vmul.f32 0.5, %v3657
        %v3659 = vsub.f32 1.5, %v3658
        %v3660 = vmul.f32 %v3655, %v3659
        %vm3661 = vweird.f32 %v3653
        %vm3662 = vweird.f32 %v3655
        %vm3663 = vmor %vm3661, %vm3662
        %v3664 = vsel %vm3663, %v3655, %v3660
        %v3665 = vrsqrt.pop %v3654
        %v3666 = vmul.f32 %v3665, %v3654
        %v3667 = vmul.f32 %v3666, %v3665
        %v3668 = vmul.f32 0.5, %v3667
        %v3669 = vsub.f32 1.5, %v3668
        %v3670 = vmul.f32 %v3665, %v3669
        %vm3671 = vweird.f32 %v3654
        %vm3672 = vweird.f32 %v3665
        %vm3673 = vmor %vm3671, %vm3672
        %v3674 = vsel %vm3673, %v3665, %v3670
        %v3675 = vmul.f32 %v3641, %v3664
        %v3676 = vmul.f32 %v3642, %v3674
        %v3678 = vperm.slane %v3630, 0
        %v3680 = vmul.f32 %v3675, %v3678
        %v3681 = vmul.f32 %v3676, %v3678
        %v3683 = vperm.slane %v3632, 0
        %v3685 = vadd.f32 %v3680, %v3683
        %v3686 = vadd.f32 %v3681, %v3683
        %s3687 = scalar_lea.vmem %s19, 32
        %v3688 = vld [vmem:[%s3687] sm:$0xff]
        %v3689 = vld [vmem:[%s3687 + $0x8] sm:$0xff]
        %v3690 = vld [vmem:[%s3687 + $0x10] sm:$0xff]
        %v3691 = vld [vmem:[%s3687 + $0x18] sm:$0xff]
        %s3692 = scalar_lea.vmem %s21, 1
        %v3693 = vld [vmem:[%s3692] sm:$0x1]
        %v3695 = vperm.slane %v3693, 0
        %v3698 = vsel %vm979, %v3685, 0
        %v3701 = vsel %vm979, %v3686, 0
        %3703 = vmatpush.msra.mxu0 0.0
        %3704 = vmatpush.msra.mxu0 0.0
        %3705 = vmatpush.msra.mxu0 0.0
        %3706 = vmatpush.msra.mxu0 0.0
        %3707 = vmatpush.msra.mxu0 0.0
        %3708 = vmatpush.msra.mxu0 0.0
        %3709 = vmatpush.msra.mxu0 0.0
        %3710 = vmatpush.msra.mxu0 0.0
        %3711 = vmatpush.msra.mxu0 0.0
        %3712 = vmatpush.msra.mxu0 0.0
        %3713 = vmatpush.msra.mxu0 0.0
        %3714 = vmatpush.msra.mxu0 0.0
        %3715 = vmatpush.msra.mxu0 %v3691
        %3716 = vmatpush.msra.mxu0 %v3690
        %3717 = vmatpush.msra.mxu0 %v3689
        %3718 = vmatpush.msra.mxu0 %v3688
        %3719 = vmatmul.f32.gmra.mxu0 %v3698
        %v3720 = vpop.f32.mrf.mxu0
        %v3721 = vadd.f32 %v3695, %v3720
        %3722 = vmatmul.f32.gmra.mxu0 %v3701
        %v3723 = vpop.f32.mrf.mxu0
        %v3724 = vadd.f32 %v3695, %v3723
        %3725 = vdwg.mxu0
        %s3726 = scalar_lea.vmem %s23, 32
        %v3727 = vld [vmem:[%s3726] sm:$0xff]
        %v3728 = vld [vmem:[%s3726 + $0x8] sm:$0xff]
        %v3729 = vld [vmem:[%s3726 + $0x10] sm:$0xff]
        %v3730 = vld [vmem:[%s3726 + $0x18] sm:$0xff]
        %s3731 = scalar_lea.vmem %s25, 1
        %v3732 = vld [vmem:[%s3731] sm:$0x1]
        %v3734 = vperm.slane %v3732, 0
        %3736 = vmatpush.msra.mxu0 0.0
        %3737 = vmatpush.msra.mxu0 0.0
        %3738 = vmatpush.msra.mxu0 0.0
        %3739 = vmatpush.msra.mxu0 0.0
        %3740 = vmatpush.msra.mxu0 0.0
        %3741 = vmatpush.msra.mxu0 0.0
        %3742 = vmatpush.msra.mxu0 0.0
        %3743 = vmatpush.msra.mxu0 0.0
        %3744 = vmatpush.msra.mxu0 0.0
        %3745 = vmatpush.msra.mxu0 0.0
        %3746 = vmatpush.msra.mxu0 0.0
        %3747 = vmatpush.msra.mxu0 0.0
        %3748 = vmatpush.msra.mxu0 %v3730
        %3749 = vmatpush.msra.mxu0 %v3729
        %3750 = vmatpush.msra.mxu0 %v3728
        %3751 = vmatpush.msra.mxu0 %v3727
        %3752 = vmatmul.f32.gmra.mxu0 %v3698
        %v3753 = vpop.f32.mrf.mxu0
        %v3754 = vadd.f32 %v3734, %v3753
        %3755 = vmatmul.f32.gmra.mxu0 %v3701
        %v3756 = vpop.f32.mrf.mxu0
        %v3757 = vadd.f32 %v3734, %v3756
        %3758 = vdwg.mxu0
        %s3759 = scalar_lea.vmem %s27, 32
        %v3760 = vld [vmem:[%s3759] sm:$0xff]
        %v3761 = vld [vmem:[%s3759 + $0x8] sm:$0xff]
        %v3762 = vld [vmem:[%s3759 + $0x10] sm:$0xff]
        %v3763 = vld [vmem:[%s3759 + $0x18] sm:$0xff]
        %s3764 = scalar_lea.vmem %s29, 1
        %v3765 = vld [vmem:[%s3764] sm:$0x1]
        %v3767 = vperm.slane %v3765, 0
        %3769 = vmatpush.msra.mxu0 0.0
        %3770 = vmatpush.msra.mxu0 0.0
        %3771 = vmatpush.msra.mxu0 0.0
        %3772 = vmatpush.msra.mxu0 0.0
        %3773 = vmatpush.msra.mxu0 0.0
        %3774 = vmatpush.msra.mxu0 0.0
        %3775 = vmatpush.msra.mxu0 0.0
        %3776 = vmatpush.msra.mxu0 0.0
        %3777 = vmatpush.msra.mxu0 0.0
        %3778 = vmatpush.msra.mxu0 0.0
        %3779 = vmatpush.msra.mxu0 0.0
        %3780 = vmatpush.msra.mxu0 0.0
        %3781 = vmatpush.msra.mxu0 %v3763
        %3782 = vmatpush.msra.mxu0 %v3762
        %3783 = vmatpush.msra.mxu0 %v3761
        %3784 = vmatpush.msra.mxu0 %v3760
        %3785 = vmatmul.f32.gmra.mxu0 %v3698
        %v3786 = vpop.f32.mrf.mxu0
        %v3787 = vadd.f32 %v3767, %v3786
        %3788 = vmatmul.f32.gmra.mxu0 %v3701
        %v3789 = vpop.f32.mrf.mxu0
        %v3790 = vadd.f32 %v3767, %v3789
        %3791 = vdwg.mxu0
        %v3792 = vmul.f32 %v3721, 0.35355338
        %v3793 = vmul.f32 %v3724, 0.35355338
        %s3794 = scalar_lea.vmem %s31, 32
        %v3795 = vld [vmem:[%s3794] sm:$0xff]
        %v3796 = vld [vmem:[%s3794 + $0x8] sm:$0xff]
        %v3797 = vld [vmem:[%s3794 + $0x10] sm:$0xff]
        %v3798 = vld [vmem:[%s3794 + $0x18] sm:$0xff]
        %v3801 = vrot.slane %v3792, 1
        %v3802 = vrot.slane %v3792, 2
        %v3803 = vrot.slane %v3792, 3
        %v3804 = vrot.slane %v3792, 4
        %v3805 = vrot.slane %v3792, 5
        %v3806 = vrot.slane %v3792, 6
        %v3807 = vrot.slane %v3792, 7
        %v3808 = vrot.slane %v3793, 1
        %v3809 = vrot.slane %v3793, 2
        %v3810 = vrot.slane %v3793, 3
        %v3811 = vrot.slane %v3793, 4
        %v3812 = vrot.slane %v3793, 5
        %v3813 = vrot.slane %v3793, 6
        %v3814 = vrot.slane %v3793, 7
        %v3815 = vperm.slane %v3792, 0
        %v3816 = vperm.slane %v3801, 0
        %v3817 = vperm.slane %v3802, 0
        %v3818 = vperm.slane %v3803, 0
        %v3819 = vperm.slane %v3804, 0
        %v3820 = vperm.slane %v3805, 0
        %v3821 = vperm.slane %v3806, 0
        %v3822 = vperm.slane %v3807, 0
        %v3823 = vperm.slane %v3793, 0
        %v3824 = vperm.slane %v3808, 0
        %v3825 = vperm.slane %v3809, 0
        %v3826 = vperm.slane %v3810, 0
        %v3827 = vperm.slane %v3811, 0
        %v3828 = vperm.slane %v3812, 0
        %v3829 = vperm.slane %v3813, 0
        %v3830 = vperm.slane %v3814, 0
        %v3847 = vmul.f32 %v3815, %v1017
        %v3848 = vmul.f32 %v3815, %v1018
        %v3849 = vmul.f32 %v3816, %v1019
        %v3850 = vmul.f32 %v3816, %v1020
        %v3851 = vmul.f32 %v3817, %v1021
        %v3852 = vmul.f32 %v3817, %v1022
        %v3853 = vmul.f32 %v3818, %v1023
        %v3854 = vmul.f32 %v3818, %v1024
        %v3855 = vmul.f32 %v3819, %v1025
        %v3856 = vmul.f32 %v3819, %v1026
        %v3857 = vmul.f32 %v3820, %v1027
        %v3858 = vmul.f32 %v3820, %v1028
        %v3859 = vmul.f32 %v3821, %v1029
        %v3860 = vmul.f32 %v3821, %v1030
        %v3861 = vmul.f32 %v3822, %v1031
        %v3862 = vmul.f32 %v3822, %v1032
        %v3863 = vmul.f32 %v3823, %v1033
        %v3864 = vmul.f32 %v3823, %v1034
        %v3865 = vmul.f32 %v3824, %v1035
        %v3866 = vmul.f32 %v3824, %v1036
        %v3867 = vmul.f32 %v3825, %v1037
        %v3868 = vmul.f32 %v3825, %v1038
        %v3869 = vmul.f32 %v3826, %v1039
        %v3870 = vmul.f32 %v3826, %v1040
        %v3871 = vmul.f32 %v3827, %v1041
        %v3872 = vmul.f32 %v3827, %v1042
        %v3873 = vmul.f32 %v3828, %v1043
        %v3874 = vmul.f32 %v3828, %v1044
        %v3875 = vmul.f32 %v3829, %v1045
        %v3876 = vmul.f32 %v3829, %v1046
        %v3877 = vmul.f32 %v3830, %v1047
        %v3878 = vmul.f32 %v3830, %v1048
        %v3879 = vsel %vm1297, %v3847, 0.0
        %3880 = vadd.xlane.f32.xlu0 %v3879
        %v3881 = vpop.xlane.xlu0 %3880
        %v3882 = vsel %vm1297, %v3848, 0.0
        %3883 = vadd.xlane.f32.xlu0 %v3882
        %v3884 = vpop.xlane.xlu0 %3883
        %v3885 = vsel %vm1297, %v3849, 0.0
        %3886 = vadd.xlane.f32.xlu0 %v3885
        %v3887 = vpop.xlane.xlu0 %3886
        %v3888 = vsel %vm1297, %v3850, 0.0
        %3889 = vadd.xlane.f32.xlu0 %v3888
        %v3890 = vpop.xlane.xlu0 %3889
        %v3891 = vsel %vm1297, %v3851, 0.0
        %3892 = vadd.xlane.f32.xlu0 %v3891
        %v3893 = vpop.xlane.xlu0 %3892
        %v3894 = vsel %vm1297, %v3852, 0.0
        %3895 = vadd.xlane.f32.xlu0 %v3894
        %v3896 = vpop.xlane.xlu0 %3895
        %v3897 = vsel %vm1297, %v3853, 0.0
        %3898 = vadd.xlane.f32.xlu0 %v3897
        %v3899 = vpop.xlane.xlu0 %3898
        %v3900 = vsel %vm1297, %v3854, 0.0
        %3901 = vadd.xlane.f32.xlu0 %v3900
        %v3902 = vpop.xlane.xlu0 %3901
        %v3903 = vsel %vm1297, %v3855, 0.0
        %3904 = vadd.xlane.f32.xlu0 %v3903
        %v3905 = vpop.xlane.xlu0 %3904
        %v3906 = vsel %vm1297, %v3856, 0.0
        %3907 = vadd.xlane.f32.xlu0 %v3906
        %v3908 = vpop.xlane.xlu0 %3907
        %v3909 = vsel %vm1297, %v3857, 0.0
        %3910 = vadd.xlane.f32.xlu0 %v3909
        %v3911 = vpop.xlane.xlu0 %3910
        %v3912 = vsel %vm1297, %v3858, 0.0
        %3913 = vadd.xlane.f32.xlu0 %v3912
        %v3914 = vpop.xlane.xlu0 %3913
        %v3915 = vsel %vm1297, %v3859, 0.0
        %3916 = vadd.xlane.f32.xlu0 %v3915
        %v3917 = vpop.xlane.xlu0 %3916
        %v3918 = vsel %vm1297, %v3860, 0.0
        %3919 = vadd.xlane.f32.xlu0 %v3918
        %v3920 = vpop.xlane.xlu0 %3919
        %v3921 = vsel %vm1297, %v3861, 0.0
        %3922 = vadd.xlane.f32.xlu0 %v3921
        %v3923 = vpop.xlane.xlu0 %3922
        %v3924 = vsel %vm1297, %v3862, 0.0
        %3925 = vadd.xlane.f32.xlu0 %v3924
        %v3926 = vpop.xlane.xlu0 %3925
        %v3927 = vsel %vm1297, %v3863, 0.0
        %3928 = vadd.xlane.f32.xlu0 %v3927
        %v3929 = vpop.xlane.xlu0 %3928
        %v3930 = vsel %vm1297, %v3864, 0.0
        %3931 = vadd.xlane.f32.xlu0 %v3930
        %v3932 = vpop.xlane.xlu0 %3931
        %v3933 = vsel %vm1297, %v3865, 0.0
        %3934 = vadd.xlane.f32.xlu0 %v3933
        %v3935 = vpop.xlane.xlu0 %3934
        %v3936 = vsel %vm1297, %v3866, 0.0
        %3937 = vadd.xlane.f32.xlu0 %v3936
        %v3938 = vpop.xlane.xlu0 %3937
        %v3939 = vsel %vm1297, %v3867, 0.0
        %3940 = vadd.xlane.f32.xlu0 %v3939
        %v3941 = vpop.xlane.xlu0 %3940
        %v3942 = vsel %vm1297, %v3868, 0.0
        %3943 = vadd.xlane.f32.xlu0 %v3942
        %v3944 = vpop.xlane.xlu0 %3943
        %v3945 = vsel %vm1297, %v3869, 0.0
        %3946 = vadd.xlane.f32.xlu0 %v3945
        %v3947 = vpop.xlane.xlu0 %3946
        %v3948 = vsel %vm1297, %v3870, 0.0
        %3949 = vadd.xlane.f32.xlu0 %v3948
        %v3950 = vpop.xlane.xlu0 %3949
        %v3951 = vsel %vm1297, %v3871, 0.0
        %3952 = vadd.xlane.f32.xlu0 %v3951
        %v3953 = vpop.xlane.xlu0 %3952
        %v3954 = vsel %vm1297, %v3872, 0.0
        %3955 = vadd.xlane.f32.xlu0 %v3954
        %v3956 = vpop.xlane.xlu0 %3955
        %v3957 = vsel %vm1297, %v3873, 0.0
        %3958 = vadd.xlane.f32.xlu0 %v3957
        %v3959 = vpop.xlane.xlu0 %3958
        %v3960 = vsel %vm1297, %v3874, 0.0
        %3961 = vadd.xlane.f32.xlu0 %v3960
        %v3962 = vpop.xlane.xlu0 %3961
        %v3963 = vsel %vm1297, %v3875, 0.0
        %3964 = vadd.xlane.f32.xlu0 %v3963
        %v3965 = vpop.xlane.xlu0 %3964
        %v3966 = vsel %vm1297, %v3876, 0.0
        %3967 = vadd.xlane.f32.xlu0 %v3966
        %v3968 = vpop.xlane.xlu0 %3967
        %v3969 = vsel %vm1297, %v3877, 0.0
        %3970 = vadd.xlane.f32.xlu0 %v3969
        %v3971 = vpop.xlane.xlu0 %3970
        %v3972 = vsel %vm1297, %v3878, 0.0
        %3973 = vadd.xlane.f32.xlu0 %v3972
        %v3974 = vpop.xlane.xlu0 %3973
        %v4007 = vperm.slane %v3881, %v1427
        %v4008 = vperm.slane %v3884, %v1429
        %v4009 = vsel %vm1431, %v4008, %v4007
        %v4010 = vperm.slane %v3887, %v1427
        %v4011 = vperm.slane %v3890, %v1429
        %v4012 = vsel %vm1431, %v4011, %v4010
        %v4013 = vperm.slane %v3893, %v1427
        %v4014 = vperm.slane %v3896, %v1429
        %v4015 = vsel %vm1431, %v4014, %v4013
        %v4016 = vperm.slane %v3899, %v1427
        %v4017 = vperm.slane %v3902, %v1429
        %v4018 = vsel %vm1431, %v4017, %v4016
        %v4019 = vperm.slane %v3905, %v1427
        %v4020 = vperm.slane %v3908, %v1429
        %v4021 = vsel %vm1431, %v4020, %v4019
        %v4022 = vperm.slane %v3911, %v1427
        %v4023 = vperm.slane %v3914, %v1429
        %v4024 = vsel %vm1431, %v4023, %v4022
        %v4025 = vperm.slane %v3917, %v1427
        %v4026 = vperm.slane %v3920, %v1429
        %v4027 = vsel %vm1431, %v4026, %v4025
        %v4028 = vperm.slane %v3923, %v1427
        %v4029 = vperm.slane %v3926, %v1429
        %v4030 = vsel %vm1431, %v4029, %v4028
        %v4031 = vperm.slane %v3929, %v1427
        %v4032 = vperm.slane %v3932, %v1429
        %v4033 = vsel %vm1431, %v4032, %v4031
        %v4034 = vperm.slane %v3935, %v1427
        %v4035 = vperm.slane %v3938, %v1429
        %v4036 = vsel %vm1431, %v4035, %v4034
        %v4037 = vperm.slane %v3941, %v1427
        %v4038 = vperm.slane %v3944, %v1429
        %v4039 = vsel %vm1431, %v4038, %v4037
        %v4040 = vperm.slane %v3947, %v1427
        %v4041 = vperm.slane %v3950, %v1429
        %v4042 = vsel %vm1431, %v4041, %v4040
        %v4043 = vperm.slane %v3953, %v1427
        %v4044 = vperm.slane %v3956, %v1429
        %v4045 = vsel %vm1431, %v4044, %v4043
        %v4046 = vperm.slane %v3959, %v1427
        %v4047 = vperm.slane %v3962, %v1429
        %v4048 = vsel %vm1431, %v4047, %v4046
        %v4049 = vperm.slane %v3965, %v1427
        %v4050 = vperm.slane %v3968, %v1429
        %v4051 = vsel %vm1431, %v4050, %v4049
        %v4052 = vperm.slane %v3971, %v1427
        %v4053 = vperm.slane %v3974, %v1429
        %v4054 = vsel %vm1431, %v4053, %v4052
        %v4055 = vsel %vm1478, %v4012, %v4009
        %v4056 = vsel %vm1480, %v4015, %v4055
        %v4057 = vsel %vm1482, %v4018, %v4056
        %v4058 = vsel %vm1484, %v4021, %v4057
        %v4059 = vsel %vm1486, %v4024, %v4058
        %v4060 = vsel %vm1488, %v4027, %v4059
        %v4061 = vsel %vm1490, %v4030, %v4060
        %v4062 = vsel %vm1478, %v4036, %v4033
        %v4063 = vsel %vm1480, %v4039, %v4062
        %v4064 = vsel %vm1482, %v4042, %v4063
        %v4065 = vsel %vm1484, %v4045, %v4064
        %v4066 = vsel %vm1486, %v4048, %v4065
        %v4067 = vsel %vm1488, %v4051, %v4066
        %v4068 = vsel %vm1490, %v4054, %v4067
        %v4071 = vsel %vm1297, %v3792, 0
        %v4073 = vsel %vm1297, %v3793, 0
        %v4076 = vsel %vm1297, %v3754, 0
        %v4079 = vsel %vm1297, %v3757, 0
        %4081 = vmatpush.xpose.msra.mxu0 0.0
        %4082 = vmatpush.xpose.msra.mxu0 0.0
        %4083 = vmatpush.xpose.msra.mxu0 0.0
        %4084 = vmatpush.xpose.msra.mxu0 0.0
        %4085 = vmatpush.xpose.msra.mxu0 0.0
        %4086 = vmatpush.xpose.msra.mxu0 0.0
        %4087 = vmatpush.xpose.msra.mxu0 0.0
        %4088 = vmatpush.xpose.msra.mxu0 0.0
        %4089 = vmatpush.xpose.msra.mxu0 0.0
        %4090 = vmatpush.xpose.msra.mxu0 0.0
        %4091 = vmatpush.xpose.msra.mxu0 0.0
        %4092 = vmatpush.xpose.msra.mxu0 0.0
        %4093 = vmatpush.xpose.msra.mxu0 0.0
        %4094 = vmatpush.xpose.msra.mxu0 0.0
        %4095 = vmatpush.xpose.msra.mxu0 %v4079
        %4096 = vmatpush.xpose.msra.mxu0 %v4076
        %4097 = vmatmul.f32.gmra.mxu0 %v4071
        %v4098 = vpop.f32.mrf.mxu0
        %v4099 = vadd.f32 %v4061, %v4098
        %4100 = vmatmul.f32.gmra.mxu0 %v4073
        %v4101 = vpop.f32.mrf.mxu0
        %v4102 = vadd.f32 %v4068, %v4101
        %4103 = vdwg.mxu0
        %v4104 = vsel %vm1534, %v4099, -inf
        %4105 = vmax.xlane.f32.xlu0 %v4104
        %v4106 = vpop.xlane.xlu0 %4105
        %v4107 = vsel %vm1534, %v4102, -inf
        %4108 = vmax.xlane.f32.xlu0 %v4107
        %v4109 = vpop.xlane.xlu0 %4108
        %v4110 = vsub.f32 %v4099, %v4106
        %v4111 = vsub.f32 %v4102, %v4109
        %v4112 = vmul.f32 %v4110, 1.442695
        %v4113 = vpow.pop %v4112
        %v4114 = vmul.f32 %v4111, 1.442695
        %v4115 = vpow.pop %v4114
        %v4116 = vsel %vm1534, %v4113, 0.0
        %4117 = vadd.xlane.f32.xlu0 %v4116
        %v4118 = vpop.xlane.xlu0 %4117
        %v4119 = vsel %vm1534, %v4115, 0.0
        %4120 = vadd.xlane.f32.xlu0 %v4119
        %v4121 = vpop.xlane.xlu0 %4120
        %v4122 = vrcp.pop %v4118
        %v4123 = vmul.f32 %v4118, %v4122
        %v4124 = vsub.f32 1.0, %v4123
        %v4125 = vmul.f32 %v4122, %v4124
        %v4126 = vadd.f32 %v4122, %v4125
        %vm4127 = vweird.f32 %v4118
        %vm4128 = vweird.f32 %v4122
        %vm4129 = vmor %vm4127, %vm4128
        %v4130 = vsel %vm4129, %v4122, %v4126
        %v4131 = vand.u32 2147483647, %v4118
        %vm4132 = vcmp.eq.f32.partialorder %v4131, 8.507059e+37
        %v4133 = vand.u32 %v4118, 2147483648
        %v4134 = vor.u32 1.1754944e-38, %v4133
        %v4135 = vsel %vm4132, %v4134, %v4130
        %v4136 = vmul.f32 %v4113, %v4135
        %v4137 = vrcp.pop %v4121
        %v4138 = vmul.f32 %v4121, %v4137
        %v4139 = vsub.f32 1.0, %v4138
        %v4140 = vmul.f32 %v4137, %v4139
        %v4141 = vadd.f32 %v4137, %v4140
        %vm4142 = vweird.f32 %v4121
        %vm4143 = vweird.f32 %v4137
        %vm4144 = vmor %vm4142, %vm4143
        %v4145 = vsel %vm4144, %v4137, %v4141
        %v4146 = vand.u32 2147483647, %v4121
        %vm4147 = vcmp.eq.f32.partialorder %v4146, 8.507059e+37
        %v4148 = vand.u32 %v4121, 2147483648
        %v4149 = vor.u32 1.1754944e-38, %v4148
        %v4150 = vsel %vm4147, %v4149, %v4145
        %v4151 = vmul.f32 %v4115, %v4150
        %v4153 = vsel %vm1534, %v4136, 0
        %v4156 = vsel %vm1534, %v4151, 0
        %4158 = vmatpush.msra.mxu0 0.0
        %4159 = vmatpush.msra.mxu0 0.0
        %4160 = vmatpush.msra.mxu0 0.0
        %4161 = vmatpush.msra.mxu0 0.0
        %4162 = vmatpush.msra.mxu0 0.0
        %4163 = vmatpush.msra.mxu0 0.0
        %4164 = vmatpush.msra.mxu0 0.0
        %4165 = vmatpush.msra.mxu0 0.0
        %4166 = vmatpush.msra.mxu0 0.0
        %4167 = vmatpush.msra.mxu0 0.0
        %4168 = vmatpush.msra.mxu0 0.0
        %4169 = vmatpush.msra.mxu0 0.0
        %4170 = vmatpush.msra.mxu0 0.0
        %4171 = vmatpush.msra.mxu0 0.0
        %4172 = vmatpush.msra.mxu0 %v3790
        %4173 = vmatpush.msra.mxu0 %v3787
        %4174 = vmatmul.f32.gmra.mxu0 %v4153
        %v4175 = vpop.f32.mrf.mxu0
        %v4176 = vadd.f32 0.0, %v4175
        %4177 = vmatmul.f32.gmra.mxu0 %v4156
        %v4178 = vpop.f32.mrf.mxu0
        %v4179 = vadd.f32 0.0, %v4178
        %4180 = vdwg.mxu0
        %v4181 = vmul.f32 %v3815, %v1645
        %v4182 = vmul.f32 %v3815, %v1647
        %v4183 = vmul.f32 %v3816, %v1649
        %v4184 = vmul.f32 %v3816, %v1651
        %v4185 = vmul.f32 %v3817, %v1653
        %v4186 = vmul.f32 %v3817, %v1655
        %v4187 = vmul.f32 %v3818, %v1657
        %v4188 = vmul.f32 %v3818, %v1659
        %v4189 = vmul.f32 %v3819, %v1661
        %v4190 = vmul.f32 %v3819, %v1663
        %v4191 = vmul.f32 %v3820, %v1665
        %v4192 = vmul.f32 %v3820, %v1667
        %v4193 = vmul.f32 %v3821, %v1669
        %v4194 = vmul.f32 %v3821, %v1671
        %v4195 = vmul.f32 %v3822, %v1673
        %v4196 = vmul.f32 %v3822, %v1675
        %v4197 = vmul.f32 %v3823, %v1677
        %v4198 = vmul.f32 %v3823, %v1679
        %v4199 = vmul.f32 %v3824, %v1681
        %v4200 = vmul.f32 %v3824, %v1683
        %v4201 = vmul.f32 %v3825, %v1685
        %v4202 = vmul.f32 %v3825, %v1687
        %v4203 = vmul.f32 %v3826, %v1689
        %v4204 = vmul.f32 %v3826, %v1691
        %v4205 = vmul.f32 %v3827, %v1693
        %v4206 = vmul.f32 %v3827, %v1695
        %v4207 = vmul.f32 %v3828, %v1697
        %v4208 = vmul.f32 %v3828, %v1699
        %v4209 = vmul.f32 %v3829, %v1701
        %v4210 = vmul.f32 %v3829, %v1703
        %v4211 = vmul.f32 %v3830, %v1705
        %v4212 = vmul.f32 %v3830, %v1707
        %4245 = vrot.lane.b32.xlu0 %v4181, 120
        %v4246 = vpop.permute.xlu0 %4245
        %4247 = vrot.lane.b32.xlu0 %v4182, 120
        %v4248 = vpop.permute.xlu0 %4247
        %4249 = vrot.lane.b32.xlu0 %v4183, 120
        %v4250 = vpop.permute.xlu0 %4249
        %4251 = vrot.lane.b32.xlu0 %v4184, 120
        %v4252 = vpop.permute.xlu0 %4251
        %4253 = vrot.lane.b32.xlu0 %v4185, 120
        %v4254 = vpop.permute.xlu0 %4253
        %4255 = vrot.lane.b32.xlu0 %v4186, 120
        %v4256 = vpop.permute.xlu0 %4255
        %4257 = vrot.lane.b32.xlu0 %v4187, 120
        %v4258 = vpop.permute.xlu0 %4257
        %4259 = vrot.lane.b32.xlu0 %v4188, 120
        %v4260 = vpop.permute.xlu0 %4259
        %4261 = vrot.lane.b32.xlu0 %v4189, 120
        %v4262 = vpop.permute.xlu0 %4261
        %4263 = vrot.lane.b32.xlu0 %v4190, 120
        %v4264 = vpop.permute.xlu0 %4263
        %4265 = vrot.lane.b32.xlu0 %v4191, 120
        %v4266 = vpop.permute.xlu0 %4265
        %4267 = vrot.lane.b32.xlu0 %v4192, 120
        %v4268 = vpop.permute.xlu0 %4267
        %4269 = vrot.lane.b32.xlu0 %v4193, 120
        %v4270 = vpop.permute.xlu0 %4269
        %4271 = vrot.lane.b32.xlu0 %v4194, 120
        %v4272 = vpop.permute.xlu0 %4271
        %4273 = vrot.lane.b32.xlu0 %v4195, 120
        %v4274 = vpop.permute.xlu0 %4273
        %4275 = vrot.lane.b32.xlu0 %v4196, 120
        %v4276 = vpop.permute.xlu0 %4275
        %4277 = vrot.lane.b32.xlu0 %v4197, 120
        %v4278 = vpop.permute.xlu0 %4277
        %4279 = vrot.lane.b32.xlu0 %v4198, 120
        %v4280 = vpop.permute.xlu0 %4279
        %4281 = vrot.lane.b32.xlu0 %v4199, 120
        %v4282 = vpop.permute.xlu0 %4281
        %4283 = vrot.lane.b32.xlu0 %v4200, 120
        %v4284 = vpop.permute.xlu0 %4283
        %4285 = vrot.lane.b32.xlu0 %v4201, 120
        %v4286 = vpop.permute.xlu0 %4285
        %4287 = vrot.lane.b32.xlu0 %v4202, 120
        %v4288 = vpop.permute.xlu0 %4287
        %4289 = vrot.lane.b32.xlu0 %v4203, 120
        %v4290 = vpop.permute.xlu0 %4289
        %4291 = vrot.lane.b32.xlu0 %v4204, 120
        %v4292 = vpop.permute.xlu0 %4291
        %4293 = vrot.lane.b32.xlu0 %v4205, 120
        %v4294 = vpop.permute.xlu0 %4293
        %4295 = vrot.lane.b32.xlu0 %v4206, 120
        %v4296 = vpop.permute.xlu0 %4295
        %4297 = vrot.lane.b32.xlu0 %v4207, 120
        %v4298 = vpop.permute.xlu0 %4297
        %4299 = vrot.lane.b32.xlu0 %v4208, 120
        %v4300 = vpop.permute.xlu0 %4299
        %4301 = vrot.lane.b32.xlu0 %v4209, 120
        %v4302 = vpop.permute.xlu0 %4301
        %4303 = vrot.lane.b32.xlu0 %v4210, 120
        %v4304 = vpop.permute.xlu0 %4303
        %4305 = vrot.lane.b32.xlu0 %v4211, 120
        %v4306 = vpop.permute.xlu0 %4305
        %4307 = vrot.lane.b32.xlu0 %v4212, 120
        %v4308 = vpop.permute.xlu0 %4307
        %v4341 = vsel %vm1297, %v4246, 0.0
        %4342 = vadd.xlane.f32.xlu0 %v4341
        %v4343 = vpop.xlane.xlu0 %4342
        %v4344 = vsel %vm1297, %v4248, 0.0
        %4345 = vadd.xlane.f32.xlu0 %v4344
        %v4346 = vpop.xlane.xlu0 %4345
        %v4347 = vsel %vm1297, %v4250, 0.0
        %4348 = vadd.xlane.f32.xlu0 %v4347
        %v4349 = vpop.xlane.xlu0 %4348
        %v4350 = vsel %vm1297, %v4252, 0.0
        %4351 = vadd.xlane.f32.xlu0 %v4350
        %v4352 = vpop.xlane.xlu0 %4351
        %v4353 = vsel %vm1297, %v4254, 0.0
        %4354 = vadd.xlane.f32.xlu0 %v4353
        %v4355 = vpop.xlane.xlu0 %4354
        %v4356 = vsel %vm1297, %v4256, 0.0
        %4357 = vadd.xlane.f32.xlu0 %v4356
        %v4358 = vpop.xlane.xlu0 %4357
        %v4359 = vsel %vm1297, %v4258, 0.0
        %4360 = vadd.xlane.f32.xlu0 %v4359
        %v4361 = vpop.xlane.xlu0 %4360
        %v4362 = vsel %vm1297, %v4260, 0.0
        %4363 = vadd.xlane.f32.xlu0 %v4362
        %v4364 = vpop.xlane.xlu0 %4363
        %v4365 = vsel %vm1297, %v4262, 0.0
        %4366 = vadd.xlane.f32.xlu0 %v4365
        %v4367 = vpop.xlane.xlu0 %4366
        %v4368 = vsel %vm1297, %v4264, 0.0
        %4369 = vadd.xlane.f32.xlu0 %v4368
        %v4370 = vpop.xlane.xlu0 %4369
        %v4371 = vsel %vm1297, %v4266, 0.0
        %4372 = vadd.xlane.f32.xlu0 %v4371
        %v4373 = vpop.xlane.xlu0 %4372
        %v4374 = vsel %vm1297, %v4268, 0.0
        %4375 = vadd.xlane.f32.xlu0 %v4374
        %v4376 = vpop.xlane.xlu0 %4375
        %v4377 = vsel %vm1297, %v4270, 0.0
        %4378 = vadd.xlane.f32.xlu0 %v4377
        %v4379 = vpop.xlane.xlu0 %4378
        %v4380 = vsel %vm1297, %v4272, 0.0
        %4381 = vadd.xlane.f32.xlu0 %v4380
        %v4382 = vpop.xlane.xlu0 %4381
        %v4383 = vsel %vm1297, %v4274, 0.0
        %4384 = vadd.xlane.f32.xlu0 %v4383
        %v4385 = vpop.xlane.xlu0 %4384
        %v4386 = vsel %vm1297, %v4276, 0.0
        %4387 = vadd.xlane.f32.xlu0 %v4386
        %v4388 = vpop.xlane.xlu0 %4387
        %v4389 = vsel %vm1297, %v4278, 0.0
        %4390 = vadd.xlane.f32.xlu0 %v4389
        %v4391 = vpop.xlane.xlu0 %4390
        %v4392 = vsel %vm1297, %v4280, 0.0
        %4393 = vadd.xlane.f32.xlu0 %v4392
        %v4394 = vpop.xlane.xlu0 %4393
        %v4395 = vsel %vm1297, %v4282, 0.0
        %4396 = vadd.xlane.f32.xlu0 %v4395
        %v4397 = vpop.xlane.xlu0 %4396
        %v4398 = vsel %vm1297, %v4284, 0.0
        %4399 = vadd.xlane.f32.xlu0 %v4398
        %v4400 = vpop.xlane.xlu0 %4399
        %v4401 = vsel %vm1297, %v4286, 0.0
        %4402 = vadd.xlane.f32.xlu0 %v4401
        %v4403 = vpop.xlane.xlu0 %4402
        %v4404 = vsel %vm1297, %v4288, 0.0
        %4405 = vadd.xlane.f32.xlu0 %v4404
        %v4406 = vpop.xlane.xlu0 %4405
        %v4407 = vsel %vm1297, %v4290, 0.0
        %4408 = vadd.xlane.f32.xlu0 %v4407
        %v4409 = vpop.xlane.xlu0 %4408
        %v4410 = vsel %vm1297, %v4292, 0.0
        %4411 = vadd.xlane.f32.xlu0 %v4410
        %v4412 = vpop.xlane.xlu0 %4411
        %v4413 = vsel %vm1297, %v4294, 0.0
        %4414 = vadd.xlane.f32.xlu0 %v4413
        %v4415 = vpop.xlane.xlu0 %4414
        %v4416 = vsel %vm1297, %v4296, 0.0
        %4417 = vadd.xlane.f32.xlu0 %v4416
        %v4418 = vpop.xlane.xlu0 %4417
        %v4419 = vsel %vm1297, %v4298, 0.0
        %4420 = vadd.xlane.f32.xlu0 %v4419
        %v4421 = vpop.xlane.xlu0 %4420
        %v4422 = vsel %vm1297, %v4300, 0.0
        %4423 = vadd.xlane.f32.xlu0 %v4422
        %v4424 = vpop.xlane.xlu0 %4423
        %v4425 = vsel %vm1297, %v4302, 0.0
        %4426 = vadd.xlane.f32.xlu0 %v4425
        %v4427 = vpop.xlane.xlu0 %4426
        %v4428 = vsel %vm1297, %v4304, 0.0
        %4429 = vadd.xlane.f32.xlu0 %v4428
        %v4430 = vpop.xlane.xlu0 %4429
        %v4431 = vsel %vm1297, %v4306, 0.0
        %4432 = vadd.xlane.f32.xlu0 %v4431
        %v4433 = vpop.xlane.xlu0 %4432
        %v4434 = vsel %vm1297, %v4308, 0.0
        %4435 = vadd.xlane.f32.xlu0 %v4434
        %v4436 = vpop.xlane.xlu0 %4435
        %4437 = vrot.lane.b32.xlu0 %v3792, 120
        %v4438 = vpop.permute.xlu0 %4437
        %4439 = vrot.lane.b32.xlu0 %v3793, 120
        %v4440 = vpop.permute.xlu0 %4439
        %4441 = vrot.lane.b32.xlu0 %v3754, 120
        %v4442 = vpop.permute.xlu0 %4441
        %4443 = vrot.lane.b32.xlu0 %v3757, 120
        %v4444 = vpop.permute.xlu0 %4443
        %v4477 = vperm.slane %v4343, %v1427
        %v4478 = vperm.slane %v4346, %v1429
        %v4479 = vsel %vm1431, %v4478, %v4477
        %v4480 = vperm.slane %v4349, %v1427
        %v4481 = vperm.slane %v4352, %v1429
        %v4482 = vsel %vm1431, %v4481, %v4480
        %v4483 = vperm.slane %v4355, %v1427
        %v4484 = vperm.slane %v4358, %v1429
        %v4485 = vsel %vm1431, %v4484, %v4483
        %v4486 = vperm.slane %v4361, %v1427
        %v4487 = vperm.slane %v4364, %v1429
        %v4488 = vsel %vm1431, %v4487, %v4486
        %v4489 = vperm.slane %v4367, %v1427
        %v4490 = vperm.slane %v4370, %v1429
        %v4491 = vsel %vm1431, %v4490, %v4489
        %v4492 = vperm.slane %v4373, %v1427
        %v4493 = vperm.slane %v4376, %v1429
        %v4494 = vsel %vm1431, %v4493, %v4492
        %v4495 = vperm.slane %v4379, %v1427
        %v4496 = vperm.slane %v4382, %v1429
        %v4497 = vsel %vm1431, %v4496, %v4495
        %v4498 = vperm.slane %v4385, %v1427
        %v4499 = vperm.slane %v4388, %v1429
        %v4500 = vsel %vm1431, %v4499, %v4498
        %v4501 = vperm.slane %v4391, %v1427
        %v4502 = vperm.slane %v4394, %v1429
        %v4503 = vsel %vm1431, %v4502, %v4501
        %v4504 = vperm.slane %v4397, %v1427
        %v4505 = vperm.slane %v4400, %v1429
        %v4506 = vsel %vm1431, %v4505, %v4504
        %v4507 = vperm.slane %v4403, %v1427
        %v4508 = vperm.slane %v4406, %v1429
        %v4509 = vsel %vm1431, %v4508, %v4507
        %v4510 = vperm.slane %v4409, %v1427
        %v4511 = vperm.slane %v4412, %v1429
        %v4512 = vsel %vm1431, %v4511, %v4510
        %v4513 = vperm.slane %v4415, %v1427
        %v4514 = vperm.slane %v4418, %v1429
        %v4515 = vsel %vm1431, %v4514, %v4513
        %v4516 = vperm.slane %v4421, %v1427
        %v4517 = vperm.slane %v4424, %v1429
        %v4518 = vsel %vm1431, %v4517, %v4516
        %v4519 = vperm.slane %v4427, %v1427
        %v4520 = vperm.slane %v4430, %v1429
        %v4521 = vsel %vm1431, %v4520, %v4519
        %v4522 = vperm.slane %v4433, %v1427
        %v4523 = vperm.slane %v4436, %v1429
        %v4524 = vsel %vm1431, %v4523, %v4522
        %v4525 = vsel %vm1478, %v4482, %v4479
        %v4526 = vsel %vm1480, %v4485, %v4525
        %v4527 = vsel %vm1482, %v4488, %v4526
        %v4528 = vsel %vm1484, %v4491, %v4527
        %v4529 = vsel %vm1486, %v4494, %v4528
        %v4530 = vsel %vm1488, %v4497, %v4529
        %v4531 = vsel %vm1490, %v4500, %v4530
        %v4532 = vsel %vm1478, %v4506, %v4503
        %v4533 = vsel %vm1480, %v4509, %v4532
        %v4534 = vsel %vm1482, %v4512, %v4533
        %v4535 = vsel %vm1484, %v4515, %v4534
        %v4536 = vsel %vm1486, %v4518, %v4535
        %v4537 = vsel %vm1488, %v4521, %v4536
        %v4538 = vsel %vm1490, %v4524, %v4537
        %v4541 = vsel %vm1297, %v4438, 0
        %v4543 = vsel %vm1297, %v4440, 0
        %v4545 = vsel %vm1297, %v4442, 0
        %v4547 = vsel %vm1297, %v4444, 0
        %4549 = vmatpush.xpose.msra.mxu0 0.0
        %4550 = vmatpush.xpose.msra.mxu0 0.0
        %4551 = vmatpush.xpose.msra.mxu0 0.0
        %4552 = vmatpush.xpose.msra.mxu0 0.0
        %4553 = vmatpush.xpose.msra.mxu0 0.0
        %4554 = vmatpush.xpose.msra.mxu0 0.0
        %4555 = vmatpush.xpose.msra.mxu0 0.0
        %4556 = vmatpush.xpose.msra.mxu0 0.0
        %4557 = vmatpush.xpose.msra.mxu0 0.0
        %4558 = vmatpush.xpose.msra.mxu0 0.0
        %4559 = vmatpush.xpose.msra.mxu0 0.0
        %4560 = vmatpush.xpose.msra.mxu0 0.0
        %4561 = vmatpush.xpose.msra.mxu0 0.0
        %4562 = vmatpush.xpose.msra.mxu0 0.0
        %4563 = vmatpush.xpose.msra.mxu0 %v4547
        %4564 = vmatpush.xpose.msra.mxu0 %v4545
        %4565 = vmatmul.f32.gmra.mxu0 %v4541
        %v4566 = vpop.f32.mrf.mxu0
        %v4567 = vadd.f32 %v4531, %v4566
        %4568 = vmatmul.f32.gmra.mxu0 %v4543
        %v4569 = vpop.f32.mrf.mxu0
        %v4570 = vadd.f32 %v4538, %v4569
        %4571 = vdwg.mxu0
        %v4572 = vsel %vm1534, %v4567, -inf
        %4573 = vmax.xlane.f32.xlu0 %v4572
        %v4574 = vpop.xlane.xlu0 %4573
        %v4575 = vsel %vm1534, %v4570, -inf
        %4576 = vmax.xlane.f32.xlu0 %v4575
        %v4577 = vpop.xlane.xlu0 %4576
        %v4578 = vsub.f32 %v4567, %v4574
        %v4579 = vsub.f32 %v4570, %v4577
        %v4580 = vmul.f32 %v4578, 1.442695
        %v4581 = vpow.pop %v4580
        %v4582 = vmul.f32 %v4579, 1.442695
        %v4583 = vpow.pop %v4582
        %v4584 = vsel %vm1534, %v4581, 0.0
        %4585 = vadd.xlane.f32.xlu0 %v4584
        %v4586 = vpop.xlane.xlu0 %4585
        %v4587 = vsel %vm1534, %v4583, 0.0
        %4588 = vadd.xlane.f32.xlu0 %v4587
        %v4589 = vpop.xlane.xlu0 %4588
        %v4590 = vrcp.pop %v4586
        %v4591 = vmul.f32 %v4586, %v4590
        %v4592 = vsub.f32 1.0, %v4591
        %v4593 = vmul.f32 %v4590, %v4592
        %v4594 = vadd.f32 %v4590, %v4593
        %vm4595 = vweird.f32 %v4586
        %vm4596 = vweird.f32 %v4590
        %vm4597 = vmor %vm4595, %vm4596
        %v4598 = vsel %vm4597, %v4590, %v4594
        %v4599 = vand.u32 2147483647, %v4586
        %vm4600 = vcmp.eq.f32.partialorder %v4599, 8.507059e+37
        %v4601 = vand.u32 %v4586, 2147483648
        %v4602 = vor.u32 1.1754944e-38, %v4601
        %v4603 = vsel %vm4600, %v4602, %v4598
        %v4604 = vmul.f32 %v4581, %v4603
        %v4605 = vrcp.pop %v4589
        %v4606 = vmul.f32 %v4589, %v4605
        %v4607 = vsub.f32 1.0, %v4606
        %v4608 = vmul.f32 %v4605, %v4607
        %v4609 = vadd.f32 %v4605, %v4608
        %vm4610 = vweird.f32 %v4589
        %vm4611 = vweird.f32 %v4605
        %vm4612 = vmor %vm4610, %vm4611
        %v4613 = vsel %vm4612, %v4605, %v4609
        %v4614 = vand.u32 2147483647, %v4589
        %vm4615 = vcmp.eq.f32.partialorder %v4614, 8.507059e+37
        %v4616 = vand.u32 %v4589, 2147483648
        %v4617 = vor.u32 1.1754944e-38, %v4616
        %v4618 = vsel %vm4615, %v4617, %v4613
        %v4619 = vmul.f32 %v4583, %v4618
        %4622 = vrot.lane.b32.xlu0 %v3787, 120
        %v4623 = vpop.permute.xlu0 %4622
        %4624 = vrot.lane.b32.xlu0 %v3790, 120
        %v4625 = vpop.permute.xlu0 %4624
        %v4629 = vsel %vm1534, %v4604, 0
        %v4632 = vsel %vm1534, %v4619, 0
        %4634 = vmatpush.msra.mxu0 0.0
        %4635 = vmatpush.msra.mxu0 0.0
        %4636 = vmatpush.msra.mxu0 0.0
        %4637 = vmatpush.msra.mxu0 0.0
        %4638 = vmatpush.msra.mxu0 0.0
        %4639 = vmatpush.msra.mxu0 0.0
        %4640 = vmatpush.msra.mxu0 0.0
        %4641 = vmatpush.msra.mxu0 0.0
        %4642 = vmatpush.msra.mxu0 0.0
        %4643 = vmatpush.msra.mxu0 0.0
        %4644 = vmatpush.msra.mxu0 0.0
        %4645 = vmatpush.msra.mxu0 0.0
        %4646 = vmatpush.msra.mxu0 0.0
        %4647 = vmatpush.msra.mxu0 0.0
        %4648 = vmatpush.msra.mxu0 %v4625
        %4649 = vmatpush.msra.mxu0 %v4623
        %4650 = vmatmul.f32.gmra.mxu0 %v4629
        %v4651 = vpop.f32.mrf.mxu0
        %v4652 = vadd.f32 0.0, %v4651
        %4653 = vmatmul.f32.gmra.mxu0 %v4632
        %v4654 = vpop.f32.mrf.mxu0
        %v4655 = vadd.f32 0.0, %v4654
        %4656 = vdwg.mxu0
        %v4658 = vsel %vm1297, %v4652, 0
        %v4661 = vsel %vm1297, %v4655, 0
        %4663 = vmatpush.msra.mxu0 0.0
        %4664 = vmatpush.msra.mxu0 0.0
        %4665 = vmatpush.msra.mxu0 0.0
        %4666 = vmatpush.msra.mxu0 0.0
        %4667 = vmatpush.msra.mxu0 0.0
        %4668 = vmatpush.msra.mxu0 0.0
        %4669 = vmatpush.msra.mxu0 0.0
        %4670 = vmatpush.msra.mxu0 0.0
        %4671 = vmatpush.msra.mxu0 0.0
        %4672 = vmatpush.msra.mxu0 0.0
        %4673 = vmatpush.msra.mxu0 0.0
        %4674 = vmatpush.msra.mxu0 0.0
        %4675 = vmatpush.msra.mxu0 0.0
        %4676 = vmatpush.msra.mxu0 0.0
        %4677 = vmatpush.msra.mxu0 0.0
        %4678 = vmatpush.msra.mxu0 %v3796
        %4679 = vmatmul.f32.gmra.mxu0 %v4658
        %v4680 = vpop.f32.mrf.mxu0
        %v4681 = vadd.f32 0.0, %v4680
        %4682 = vmatmul.f32.gmra.mxu0 %v4661
        %v4683 = vpop.f32.mrf.mxu0
        %v4684 = vadd.f32 0.0, %v4683
        %4685 = vdwg.mxu0
        %v4687 = vsel %vm1297, %v4176, 0
        %v4690 = vsel %vm1297, %v4179, 0
        %4692 = vmatpush.msra.mxu0 0.0
        %4693 = vmatpush.msra.mxu0 0.0
        %4694 = vmatpush.msra.mxu0 0.0
        %4695 = vmatpush.msra.mxu0 0.0
        %4696 = vmatpush.msra.mxu0 0.0
        %4697 = vmatpush.msra.mxu0 0.0
        %4698 = vmatpush.msra.mxu0 0.0
        %4699 = vmatpush.msra.mxu0 0.0
        %4700 = vmatpush.msra.mxu0 0.0
        %4701 = vmatpush.msra.mxu0 0.0
        %4702 = vmatpush.msra.mxu0 0.0
        %4703 = vmatpush.msra.mxu0 0.0
        %4704 = vmatpush.msra.mxu0 0.0
        %4705 = vmatpush.msra.mxu0 0.0
        %4706 = vmatpush.msra.mxu0 0.0
        %4707 = vmatpush.msra.mxu0 %v3795
        %4708 = vmatmul.f32.gmra.mxu0 %v4687
        %v4709 = vpop.f32.mrf.mxu0
        %v4710 = vadd.f32 %v4681, %v4709
        %4711 = vmatmul.f32.gmra.mxu0 %v4690
        %v4712 = vpop.f32.mrf.mxu0
        %v4713 = vadd.f32 %v4684, %v4712
        %4714 = vdwg.mxu0
        %v4715 = vmul.f32 %v3815, %v2275
        %v4716 = vmul.f32 %v3815, %v2277
        %v4717 = vmul.f32 %v3816, %v2279
        %v4718 = vmul.f32 %v3816, %v2281
        %v4719 = vmul.f32 %v3817, %v2283
        %v4720 = vmul.f32 %v3817, %v2285
        %v4721 = vmul.f32 %v3818, %v2287
        %v4722 = vmul.f32 %v3818, %v2289
        %v4723 = vmul.f32 %v3819, %v2291
        %v4724 = vmul.f32 %v3819, %v2293
        %v4725 = vmul.f32 %v3820, %v2295
        %v4726 = vmul.f32 %v3820, %v2297
        %v4727 = vmul.f32 %v3821, %v2299
        %v4728 = vmul.f32 %v3821, %v2301
        %v4729 = vmul.f32 %v3822, %v2303
        %v4730 = vmul.f32 %v3822, %v2305
        %v4731 = vmul.f32 %v3823, %v2307
        %v4732 = vmul.f32 %v3823, %v2309
        %v4733 = vmul.f32 %v3824, %v2311
        %v4734 = vmul.f32 %v3824, %v2313
        %v4735 = vmul.f32 %v3825, %v2315
        %v4736 = vmul.f32 %v3825, %v2317
        %v4737 = vmul.f32 %v3826, %v2319
        %v4738 = vmul.f32 %v3826, %v2321
        %v4739 = vmul.f32 %v3827, %v2323
        %v4740 = vmul.f32 %v3827, %v2325
        %v4741 = vmul.f32 %v3828, %v2327
        %v4742 = vmul.f32 %v3828, %v2329
        %v4743 = vmul.f32 %v3829, %v2331
        %v4744 = vmul.f32 %v3829, %v2333
        %v4745 = vmul.f32 %v3830, %v2335
        %v4746 = vmul.f32 %v3830, %v2337
        %4779 = vrot.lane.b32.xlu0 %v4715, 112
        %v4780 = vpop.permute.xlu0 %4779
        %4781 = vrot.lane.b32.xlu0 %v4716, 112
        %v4782 = vpop.permute.xlu0 %4781
        %4783 = vrot.lane.b32.xlu0 %v4717, 112
        %v4784 = vpop.permute.xlu0 %4783
        %4785 = vrot.lane.b32.xlu0 %v4718, 112
        %v4786 = vpop.permute.xlu0 %4785
        %4787 = vrot.lane.b32.xlu0 %v4719, 112
        %v4788 = vpop.permute.xlu0 %4787
        %4789 = vrot.lane.b32.xlu0 %v4720, 112
        %v4790 = vpop.permute.xlu0 %4789
        %4791 = vrot.lane.b32.xlu0 %v4721, 112
        %v4792 = vpop.permute.xlu0 %4791
        %4793 = vrot.lane.b32.xlu0 %v4722, 112
        %v4794 = vpop.permute.xlu0 %4793
        %4795 = vrot.lane.b32.xlu0 %v4723, 112
        %v4796 = vpop.permute.xlu0 %4795
        %4797 = vrot.lane.b32.xlu0 %v4724, 112
        %v4798 = vpop.permute.xlu0 %4797
        %4799 = vrot.lane.b32.xlu0 %v4725, 112
        %v4800 = vpop.permute.xlu0 %4799
        %4801 = vrot.lane.b32.xlu0 %v4726, 112
        %v4802 = vpop.permute.xlu0 %4801
        %4803 = vrot.lane.b32.xlu0 %v4727, 112
        %v4804 = vpop.permute.xlu0 %4803
        %4805 = vrot.lane.b32.xlu0 %v4728, 112
        %v4806 = vpop.permute.xlu0 %4805
        %4807 = vrot.lane.b32.xlu0 %v4729, 112
        %v4808 = vpop.permute.xlu0 %4807
        %4809 = vrot.lane.b32.xlu0 %v4730, 112
        %v4810 = vpop.permute.xlu0 %4809
        %4811 = vrot.lane.b32.xlu0 %v4731, 112
        %v4812 = vpop.permute.xlu0 %4811
        %4813 = vrot.lane.b32.xlu0 %v4732, 112
        %v4814 = vpop.permute.xlu0 %4813
        %4815 = vrot.lane.b32.xlu0 %v4733, 112
        %v4816 = vpop.permute.xlu0 %4815
        %4817 = vrot.lane.b32.xlu0 %v4734, 112
        %v4818 = vpop.permute.xlu0 %4817
        %4819 = vrot.lane.b32.xlu0 %v4735, 112
        %v4820 = vpop.permute.xlu0 %4819
        %4821 = vrot.lane.b32.xlu0 %v4736, 112
        %v4822 = vpop.permute.xlu0 %4821
        %4823 = vrot.lane.b32.xlu0 %v4737, 112
        %v4824 = vpop.permute.xlu0 %4823
        %4825 = vrot.lane.b32.xlu0 %v4738, 112
        %v4826 = vpop.permute.xlu0 %4825
        %4827 = vrot.lane.b32.xlu0 %v4739, 112
        %v4828 = vpop.permute.xlu0 %4827
        %4829 = vrot.lane.b32.xlu0 %v4740, 112
        %v4830 = vpop.permute.xlu0 %4829
        %4831 = vrot.lane.b32.xlu0 %v4741, 112
        %v4832 = vpop.permute.xlu0 %4831
        %4833 = vrot.lane.b32.xlu0 %v4742, 112
        %v4834 = vpop.permute.xlu0 %4833
        %4835 = vrot.lane.b32.xlu0 %v4743, 112
        %v4836 = vpop.permute.xlu0 %4835
        %4837 = vrot.lane.b32.xlu0 %v4744, 112
        %v4838 = vpop.permute.xlu0 %4837
        %4839 = vrot.lane.b32.xlu0 %v4745, 112
        %v4840 = vpop.permute.xlu0 %4839
        %4841 = vrot.lane.b32.xlu0 %v4746, 112
        %v4842 = vpop.permute.xlu0 %4841
        %v4875 = vsel %vm1297, %v4780, 0.0
        %4876 = vadd.xlane.f32.xlu0 %v4875
        %v4877 = vpop.xlane.xlu0 %4876
        %v4878 = vsel %vm1297, %v4782, 0.0
        %4879 = vadd.xlane.f32.xlu0 %v4878
        %v4880 = vpop.xlane.xlu0 %4879
        %v4881 = vsel %vm1297, %v4784, 0.0
        %4882 = vadd.xlane.f32.xlu0 %v4881
        %v4883 = vpop.xlane.xlu0 %4882
        %v4884 = vsel %vm1297, %v4786, 0.0
        %4885 = vadd.xlane.f32.xlu0 %v4884
        %v4886 = vpop.xlane.xlu0 %4885
        %v4887 = vsel %vm1297, %v4788, 0.0
        %4888 = vadd.xlane.f32.xlu0 %v4887
        %v4889 = vpop.xlane.xlu0 %4888
        %v4890 = vsel %vm1297, %v4790, 0.0
        %4891 = vadd.xlane.f32.xlu0 %v4890
        %v4892 = vpop.xlane.xlu0 %4891
        %v4893 = vsel %vm1297, %v4792, 0.0
        %4894 = vadd.xlane.f32.xlu0 %v4893
        %v4895 = vpop.xlane.xlu0 %4894
        %v4896 = vsel %vm1297, %v4794, 0.0
        %4897 = vadd.xlane.f32.xlu0 %v4896
        %v4898 = vpop.xlane.xlu0 %4897
        %v4899 = vsel %vm1297, %v4796, 0.0
        %4900 = vadd.xlane.f32.xlu0 %v4899
        %v4901 = vpop.xlane.xlu0 %4900
        %v4902 = vsel %vm1297, %v4798, 0.0
        %4903 = vadd.xlane.f32.xlu0 %v4902
        %v4904 = vpop.xlane.xlu0 %4903
        %v4905 = vsel %vm1297, %v4800, 0.0
        %4906 = vadd.xlane.f32.xlu0 %v4905
        %v4907 = vpop.xlane.xlu0 %4906
        %v4908 = vsel %vm1297, %v4802, 0.0
        %4909 = vadd.xlane.f32.xlu0 %v4908
        %v4910 = vpop.xlane.xlu0 %4909
        %v4911 = vsel %vm1297, %v4804, 0.0
        %4912 = vadd.xlane.f32.xlu0 %v4911
        %v4913 = vpop.xlane.xlu0 %4912
        %v4914 = vsel %vm1297, %v4806, 0.0
        %4915 = vadd.xlane.f32.xlu0 %v4914
        %v4916 = vpop.xlane.xlu0 %4915
        %v4917 = vsel %vm1297, %v4808, 0.0
        %4918 = vadd.xlane.f32.xlu0 %v4917
        %v4919 = vpop.xlane.xlu0 %4918
        %v4920 = vsel %vm1297, %v4810, 0.0
        %4921 = vadd.xlane.f32.xlu0 %v4920
        %v4922 = vpop.xlane.xlu0 %4921
        %v4923 = vsel %vm1297, %v4812, 0.0
        %4924 = vadd.xlane.f32.xlu0 %v4923
        %v4925 = vpop.xlane.xlu0 %4924
        %v4926 = vsel %vm1297, %v4814, 0.0
        %4927 = vadd.xlane.f32.xlu0 %v4926
        %v4928 = vpop.xlane.xlu0 %4927
        %v4929 = vsel %vm1297, %v4816, 0.0
        %4930 = vadd.xlane.f32.xlu0 %v4929
        %v4931 = vpop.xlane.xlu0 %4930
        %v4932 = vsel %vm1297, %v4818, 0.0
        %4933 = vadd.xlane.f32.xlu0 %v4932
        %v4934 = vpop.xlane.xlu0 %4933
        %v4935 = vsel %vm1297, %v4820, 0.0
        %4936 = vadd.xlane.f32.xlu0 %v4935
        %v4937 = vpop.xlane.xlu0 %4936
        %v4938 = vsel %vm1297, %v4822, 0.0
        %4939 = vadd.xlane.f32.xlu0 %v4938
        %v4940 = vpop.xlane.xlu0 %4939
        %v4941 = vsel %vm1297, %v4824, 0.0
        %4942 = vadd.xlane.f32.xlu0 %v4941
        %v4943 = vpop.xlane.xlu0 %4942
        %v4944 = vsel %vm1297, %v4826, 0.0
        %4945 = vadd.xlane.f32.xlu0 %v4944
        %v4946 = vpop.xlane.xlu0 %4945
        %v4947 = vsel %vm1297, %v4828, 0.0
        %4948 = vadd.xlane.f32.xlu0 %v4947
        %v4949 = vpop.xlane.xlu0 %4948
        %v4950 = vsel %vm1297, %v4830, 0.0
        %4951 = vadd.xlane.f32.xlu0 %v4950
        %v4952 = vpop.xlane.xlu0 %4951
        %v4953 = vsel %vm1297, %v4832, 0.0
        %4954 = vadd.xlane.f32.xlu0 %v4953
        %v4955 = vpop.xlane.xlu0 %4954
        %v4956 = vsel %vm1297, %v4834, 0.0
        %4957 = vadd.xlane.f32.xlu0 %v4956
        %v4958 = vpop.xlane.xlu0 %4957
        %v4959 = vsel %vm1297, %v4836, 0.0
        %4960 = vadd.xlane.f32.xlu0 %v4959
        %v4961 = vpop.xlane.xlu0 %4960
        %v4962 = vsel %vm1297, %v4838, 0.0
        %4963 = vadd.xlane.f32.xlu0 %v4962
        %v4964 = vpop.xlane.xlu0 %4963
        %v4965 = vsel %vm1297, %v4840, 0.0
        %4966 = vadd.xlane.f32.xlu0 %v4965
        %v4967 = vpop.xlane.xlu0 %4966
        %v4968 = vsel %vm1297, %v4842, 0.0
        %4969 = vadd.xlane.f32.xlu0 %v4968
        %v4970 = vpop.xlane.xlu0 %4969
        %4971 = vrot.lane.b32.xlu0 %v3792, 112
        %v4972 = vpop.permute.xlu0 %4971
        %4973 = vrot.lane.b32.xlu0 %v3793, 112
        %v4974 = vpop.permute.xlu0 %4973
        %4975 = vrot.lane.b32.xlu0 %v3754, 112
        %v4976 = vpop.permute.xlu0 %4975
        %4977 = vrot.lane.b32.xlu0 %v3757, 112
        %v4978 = vpop.permute.xlu0 %4977
        %v5011 = vperm.slane %v4877, %v1427
        %v5012 = vperm.slane %v4880, %v1429
        %v5013 = vsel %vm1431, %v5012, %v5011
        %v5014 = vperm.slane %v4883, %v1427
        %v5015 = vperm.slane %v4886, %v1429
        %v5016 = vsel %vm1431, %v5015, %v5014
        %v5017 = vperm.slane %v4889, %v1427
        %v5018 = vperm.slane %v4892, %v1429
        %v5019 = vsel %vm1431, %v5018, %v5017
        %v5020 = vperm.slane %v4895, %v1427
        %v5021 = vperm.slane %v4898, %v1429
        %v5022 = vsel %vm1431, %v5021, %v5020
        %v5023 = vperm.slane %v4901, %v1427
        %v5024 = vperm.slane %v4904, %v1429
        %v5025 = vsel %vm1431, %v5024, %v5023
        %v5026 = vperm.slane %v4907, %v1427
        %v5027 = vperm.slane %v4910, %v1429
        %v5028 = vsel %vm1431, %v5027, %v5026
        %v5029 = vperm.slane %v4913, %v1427
        %v5030 = vperm.slane %v4916, %v1429
        %v5031 = vsel %vm1431, %v5030, %v5029
        %v5032 = vperm.slane %v4919, %v1427
        %v5033 = vperm.slane %v4922, %v1429
        %v5034 = vsel %vm1431, %v5033, %v5032
        %v5035 = vperm.slane %v4925, %v1427
        %v5036 = vperm.slane %v4928, %v1429
        %v5037 = vsel %vm1431, %v5036, %v5035
        %v5038 = vperm.slane %v4931, %v1427
        %v5039 = vperm.slane %v4934, %v1429
        %v5040 = vsel %vm1431, %v5039, %v5038
        %v5041 = vperm.slane %v4937, %v1427
        %v5042 = vperm.slane %v4940, %v1429
        %v5043 = vsel %vm1431, %v5042, %v5041
        %v5044 = vperm.slane %v4943, %v1427
        %v5045 = vperm.slane %v4946, %v1429
        %v5046 = vsel %vm1431, %v5045, %v5044
        %v5047 = vperm.slane %v4949, %v1427
        %v5048 = vperm.slane %v4952, %v1429
        %v5049 = vsel %vm1431, %v5048, %v5047
        %v5050 = vperm.slane %v4955, %v1427
        %v5051 = vperm.slane %v4958, %v1429
        %v5052 = vsel %vm1431, %v5051, %v5050
        %v5053 = vperm.slane %v4961, %v1427
        %v5054 = vperm.slane %v4964, %v1429
        %v5055 = vsel %vm1431, %v5054, %v5053
        %v5056 = vperm.slane %v4967, %v1427
        %v5057 = vperm.slane %v4970, %v1429
        %v5058 = vsel %vm1431, %v5057, %v5056
        %v5059 = vsel %vm1478, %v5016, %v5013
        %v5060 = vsel %vm1480, %v5019, %v5059
        %v5061 = vsel %vm1482, %v5022, %v5060
        %v5062 = vsel %vm1484, %v5025, %v5061
        %v5063 = vsel %vm1486, %v5028, %v5062
        %v5064 = vsel %vm1488, %v5031, %v5063
        %v5065 = vsel %vm1490, %v5034, %v5064
        %v5066 = vsel %vm1478, %v5040, %v5037
        %v5067 = vsel %vm1480, %v5043, %v5066
        %v5068 = vsel %vm1482, %v5046, %v5067
        %v5069 = vsel %vm1484, %v5049, %v5068
        %v5070 = vsel %vm1486, %v5052, %v5069
        %v5071 = vsel %vm1488, %v5055, %v5070
        %v5072 = vsel %vm1490, %v5058, %v5071
        %v5075 = vsel %vm1297, %v4972, 0
        %v5077 = vsel %vm1297, %v4974, 0
        %v5079 = vsel %vm1297, %v4976, 0
        %v5081 = vsel %vm1297, %v4978, 0
        %5083 = vmatpush.xpose.msra.mxu0 0.0
        %5084 = vmatpush.xpose.msra.mxu0 0.0
        %5085 = vmatpush.xpose.msra.mxu0 0.0
        %5086 = vmatpush.xpose.msra.mxu0 0.0
        %5087 = vmatpush.xpose.msra.mxu0 0.0
        %5088 = vmatpush.xpose.msra.mxu0 0.0
        %5089 = vmatpush.xpose.msra.mxu0 0.0
        %5090 = vmatpush.xpose.msra.mxu0 0.0
        %5091 = vmatpush.xpose.msra.mxu0 0.0
        %5092 = vmatpush.xpose.msra.mxu0 0.0
        %5093 = vmatpush.xpose.msra.mxu0 0.0
        %5094 = vmatpush.xpose.msra.mxu0 0.0
        %5095 = vmatpush.xpose.msra.mxu0 0.0
        %5096 = vmatpush.xpose.msra.mxu0 0.0
        %5097 = vmatpush.xpose.msra.mxu0 %v5081
        %5098 = vmatpush.xpose.msra.mxu0 %v5079
        %5099 = vmatmul.f32.gmra.mxu0 %v5075
        %v5100 = vpop.f32.mrf.mxu0
        %v5101 = vadd.f32 %v5065, %v5100
        %5102 = vmatmul.f32.gmra.mxu0 %v5077
        %v5103 = vpop.f32.mrf.mxu0
        %v5104 = vadd.f32 %v5072, %v5103
        %5105 = vdwg.mxu0
        %v5106 = vsel %vm1534, %v5101, -inf
        %5107 = vmax.xlane.f32.xlu0 %v5106
        %v5108 = vpop.xlane.xlu0 %5107
        %v5109 = vsel %vm1534, %v5104, -inf
        %5110 = vmax.xlane.f32.xlu0 %v5109
        %v5111 = vpop.xlane.xlu0 %5110
        %v5112 = vsub.f32 %v5101, %v5108
        %v5113 = vsub.f32 %v5104, %v5111
        %v5114 = vmul.f32 %v5112, 1.442695
        %v5115 = vpow.pop %v5114
        %v5116 = vmul.f32 %v5113, 1.442695
        %v5117 = vpow.pop %v5116
        %v5118 = vsel %vm1534, %v5115, 0.0
        %5119 = vadd.xlane.f32.xlu0 %v5118
        %v5120 = vpop.xlane.xlu0 %5119
        %v5121 = vsel %vm1534, %v5117, 0.0
        %5122 = vadd.xlane.f32.xlu0 %v5121
        %v5123 = vpop.xlane.xlu0 %5122
        %v5124 = vrcp.pop %v5120
        %v5125 = vmul.f32 %v5120, %v5124
        %v5126 = vsub.f32 1.0, %v5125
        %v5127 = vmul.f32 %v5124, %v5126
        %v5128 = vadd.f32 %v5124, %v5127
        %vm5129 = vweird.f32 %v5120
        %vm5130 = vweird.f32 %v5124
        %vm5131 = vmor %vm5129, %vm5130
        %v5132 = vsel %vm5131, %v5124, %v5128
        %v5133 = vand.u32 2147483647, %v5120
        %vm5134 = vcmp.eq.f32.partialorder %v5133, 8.507059e+37
        %v5135 = vand.u32 %v5120, 2147483648
        %v5136 = vor.u32 1.1754944e-38, %v5135
        %v5137 = vsel %vm5134, %v5136, %v5132
        %v5138 = vmul.f32 %v5115, %v5137
        %v5139 = vrcp.pop %v5123
        %v5140 = vmul.f32 %v5123, %v5139
        %v5141 = vsub.f32 1.0, %v5140
        %v5142 = vmul.f32 %v5139, %v5141
        %v5143 = vadd.f32 %v5139, %v5142
        %vm5144 = vweird.f32 %v5123
        %vm5145 = vweird.f32 %v5139
        %vm5146 = vmor %vm5144, %vm5145
        %v5147 = vsel %vm5146, %v5139, %v5143
        %v5148 = vand.u32 2147483647, %v5123
        %vm5149 = vcmp.eq.f32.partialorder %v5148, 8.507059e+37
        %v5150 = vand.u32 %v5123, 2147483648
        %v5151 = vor.u32 1.1754944e-38, %v5150
        %v5152 = vsel %vm5149, %v5151, %v5147
        %v5153 = vmul.f32 %v5117, %v5152
        %5154 = vrot.lane.b32.xlu0 %v3787, 112
        %v5155 = vpop.permute.xlu0 %5154
        %5156 = vrot.lane.b32.xlu0 %v3790, 112
        %v5157 = vpop.permute.xlu0 %5156
        %v5161 = vsel %vm1534, %v5138, 0
        %v5164 = vsel %vm1534, %v5153, 0
        %5166 = vmatpush.msra.mxu0 0.0
        %5167 = vmatpush.msra.mxu0 0.0
        %5168 = vmatpush.msra.mxu0 0.0
        %5169 = vmatpush.msra.mxu0 0.0
        %5170 = vmatpush.msra.mxu0 0.0
        %5171 = vmatpush.msra.mxu0 0.0
        %5172 = vmatpush.msra.mxu0 0.0
        %5173 = vmatpush.msra.mxu0 0.0
        %5174 = vmatpush.msra.mxu0 0.0
        %5175 = vmatpush.msra.mxu0 0.0
        %5176 = vmatpush.msra.mxu0 0.0
        %5177 = vmatpush.msra.mxu0 0.0
        %5178 = vmatpush.msra.mxu0 0.0
        %5179 = vmatpush.msra.mxu0 0.0
        %5180 = vmatpush.msra.mxu0 %v5157
        %5181 = vmatpush.msra.mxu0 %v5155
        %5182 = vmatmul.f32.gmra.mxu0 %v5161
        %v5183 = vpop.f32.mrf.mxu0
        %v5184 = vadd.f32 0.0, %v5183
        %5185 = vmatmul.f32.gmra.mxu0 %v5164
        %v5186 = vpop.f32.mrf.mxu0
        %v5187 = vadd.f32 0.0, %v5186
        %5188 = vdwg.mxu0
        %v5190 = vsel %vm1297, %v5184, 0
        %v5193 = vsel %vm1297, %v5187, 0
        %5195 = vmatpush.msra.mxu0 0.0
        %5196 = vmatpush.msra.mxu0 0.0
        %5197 = vmatpush.msra.mxu0 0.0
        %5198 = vmatpush.msra.mxu0 0.0
        %5199 = vmatpush.msra.mxu0 0.0
        %5200 = vmatpush.msra.mxu0 0.0
        %5201 = vmatpush.msra.mxu0 0.0
        %5202 = vmatpush.msra.mxu0 0.0
        %5203 = vmatpush.msra.mxu0 0.0
        %5204 = vmatpush.msra.mxu0 0.0
        %5205 = vmatpush.msra.mxu0 0.0
        %5206 = vmatpush.msra.mxu0 0.0
        %5207 = vmatpush.msra.mxu0 0.0
        %5208 = vmatpush.msra.mxu0 0.0
        %5209 = vmatpush.msra.mxu0 0.0
        %5210 = vmatpush.msra.mxu0 %v3797
        %5211 = vmatmul.f32.gmra.mxu0 %v5190
        %v5212 = vpop.f32.mrf.mxu0
        %v5213 = vadd.f32 0.0, %v5212
        %5214 = vmatmul.f32.gmra.mxu0 %v5193
        %v5215 = vpop.f32.mrf.mxu0
        %v5216 = vadd.f32 0.0, %v5215
        %5217 = vdwg.mxu0
        %v5218 = vadd.f32 %v4710, %v5213
        %v5219 = vadd.f32 %v4713, %v5216
        %v5220 = vmul.f32 %v3815, %v2876
        %v5221 = vmul.f32 %v3815, %v2878
        %v5222 = vmul.f32 %v3816, %v2880
        %v5223 = vmul.f32 %v3816, %v2882
        %v5224 = vmul.f32 %v3817, %v2884
        %v5225 = vmul.f32 %v3817, %v2886
        %v5226 = vmul.f32 %v3818, %v2888
        %v5227 = vmul.f32 %v3818, %v2890
        %v5228 = vmul.f32 %v3819, %v2892
        %v5229 = vmul.f32 %v3819, %v2894
        %v5230 = vmul.f32 %v3820, %v2896
        %v5231 = vmul.f32 %v3820, %v2898
        %v5232 = vmul.f32 %v3821, %v2900
        %v5233 = vmul.f32 %v3821, %v2902
        %v5234 = vmul.f32 %v3822, %v2904
        %v5235 = vmul.f32 %v3822, %v2906
        %v5236 = vmul.f32 %v3823, %v2908
        %v5237 = vmul.f32 %v3823, %v2910
        %v5238 = vmul.f32 %v3824, %v2912
        %v5239 = vmul.f32 %v3824, %v2914
        %v5240 = vmul.f32 %v3825, %v2916
        %v5241 = vmul.f32 %v3825, %v2918
        %v5242 = vmul.f32 %v3826, %v2920
        %v5243 = vmul.f32 %v3826, %v2922
        %v5244 = vmul.f32 %v3827, %v2924
        %v5245 = vmul.f32 %v3827, %v2926
        %v5246 = vmul.f32 %v3828, %v2928
        %v5247 = vmul.f32 %v3828, %v2930
        %v5248 = vmul.f32 %v3829, %v2932
        %v5249 = vmul.f32 %v3829, %v2934
        %v5250 = vmul.f32 %v3830, %v2936
        %v5251 = vmul.f32 %v3830, %v2938
        %5284 = vrot.lane.b32.xlu0 %v5220, 104
        %v5285 = vpop.permute.xlu0 %5284
        %5286 = vrot.lane.b32.xlu0 %v5221, 104
        %v5287 = vpop.permute.xlu0 %5286
        %5288 = vrot.lane.b32.xlu0 %v5222, 104
        %v5289 = vpop.permute.xlu0 %5288
        %5290 = vrot.lane.b32.xlu0 %v5223, 104
        %v5291 = vpop.permute.xlu0 %5290
        %5292 = vrot.lane.b32.xlu0 %v5224, 104
        %v5293 = vpop.permute.xlu0 %5292
        %5294 = vrot.lane.b32.xlu0 %v5225, 104
        %v5295 = vpop.permute.xlu0 %5294
        %5296 = vrot.lane.b32.xlu0 %v5226, 104
        %v5297 = vpop.permute.xlu0 %5296
        %5298 = vrot.lane.b32.xlu0 %v5227, 104
        %v5299 = vpop.permute.xlu0 %5298
        %5300 = vrot.lane.b32.xlu0 %v5228, 104
        %v5301 = vpop.permute.xlu0 %5300
        %5302 = vrot.lane.b32.xlu0 %v5229, 104
        %v5303 = vpop.permute.xlu0 %5302
        %5304 = vrot.lane.b32.xlu0 %v5230, 104
        %v5305 = vpop.permute.xlu0 %5304
        %5306 = vrot.lane.b32.xlu0 %v5231, 104
        %v5307 = vpop.permute.xlu0 %5306
        %5308 = vrot.lane.b32.xlu0 %v5232, 104
        %v5309 = vpop.permute.xlu0 %5308
        %5310 = vrot.lane.b32.xlu0 %v5233, 104
        %v5311 = vpop.permute.xlu0 %5310
        %5312 = vrot.lane.b32.xlu0 %v5234, 104
        %v5313 = vpop.permute.xlu0 %5312
        %5314 = vrot.lane.b32.xlu0 %v5235, 104
        %v5315 = vpop.permute.xlu0 %5314
        %5316 = vrot.lane.b32.xlu0 %v5236, 104
        %v5317 = vpop.permute.xlu0 %5316
        %5318 = vrot.lane.b32.xlu0 %v5237, 104
        %v5319 = vpop.permute.xlu0 %5318
        %5320 = vrot.lane.b32.xlu0 %v5238, 104
        %v5321 = vpop.permute.xlu0 %5320
        %5322 = vrot.lane.b32.xlu0 %v5239, 104
        %v5323 = vpop.permute.xlu0 %5322
        %5324 = vrot.lane.b32.xlu0 %v5240, 104
        %v5325 = vpop.permute.xlu0 %5324
        %5326 = vrot.lane.b32.xlu0 %v5241, 104
        %v5327 = vpop.permute.xlu0 %5326
        %5328 = vrot.lane.b32.xlu0 %v5242, 104
        %v5329 = vpop.permute.xlu0 %5328
        %5330 = vrot.lane.b32.xlu0 %v5243, 104
        %v5331 = vpop.permute.xlu0 %5330
        %5332 = vrot.lane.b32.xlu0 %v5244, 104
        %v5333 = vpop.permute.xlu0 %5332
        %5334 = vrot.lane.b32.xlu0 %v5245, 104
        %v5335 = vpop.permute.xlu0 %5334
        %5336 = vrot.lane.b32.xlu0 %v5246, 104
        %v5337 = vpop.permute.xlu0 %5336
        %5338 = vrot.lane.b32.xlu0 %v5247, 104
        %v5339 = vpop.permute.xlu0 %5338
        %5340 = vrot.lane.b32.xlu0 %v5248, 104
        %v5341 = vpop.permute.xlu0 %5340
        %5342 = vrot.lane.b32.xlu0 %v5249, 104
        %v5343 = vpop.permute.xlu0 %5342
        %5344 = vrot.lane.b32.xlu0 %v5250, 104
        %v5345 = vpop.permute.xlu0 %5344
        %5346 = vrot.lane.b32.xlu0 %v5251, 104
        %v5347 = vpop.permute.xlu0 %5346
        %v5380 = vsel %vm1297, %v5285, 0.0
        %5381 = vadd.xlane.f32.xlu0 %v5380
        %v5382 = vpop.xlane.xlu0 %5381
        %v5383 = vsel %vm1297, %v5287, 0.0
        %5384 = vadd.xlane.f32.xlu0 %v5383
        %v5385 = vpop.xlane.xlu0 %5384
        %v5386 = vsel %vm1297, %v5289, 0.0
        %5387 = vadd.xlane.f32.xlu0 %v5386
        %v5388 = vpop.xlane.xlu0 %5387
        %v5389 = vsel %vm1297, %v5291, 0.0
        %5390 = vadd.xlane.f32.xlu0 %v5389
        %v5391 = vpop.xlane.xlu0 %5390
        %v5392 = vsel %vm1297, %v5293, 0.0
        %5393 = vadd.xlane.f32.xlu0 %v5392
        %v5394 = vpop.xlane.xlu0 %5393
        %v5395 = vsel %vm1297, %v5295, 0.0
        %5396 = vadd.xlane.f32.xlu0 %v5395
        %v5397 = vpop.xlane.xlu0 %5396
        %v5398 = vsel %vm1297, %v5297, 0.0
        %5399 = vadd.xlane.f32.xlu0 %v5398
        %v5400 = vpop.xlane.xlu0 %5399
        %v5401 = vsel %vm1297, %v5299, 0.0
        %5402 = vadd.xlane.f32.xlu0 %v5401
        %v5403 = vpop.xlane.xlu0 %5402
        %v5404 = vsel %vm1297, %v5301, 0.0
        %5405 = vadd.xlane.f32.xlu0 %v5404
        %v5406 = vpop.xlane.xlu0 %5405
        %v5407 = vsel %vm1297, %v5303, 0.0
        %5408 = vadd.xlane.f32.xlu0 %v5407
        %v5409 = vpop.xlane.xlu0 %5408
        %v5410 = vsel %vm1297, %v5305, 0.0
        %5411 = vadd.xlane.f32.xlu0 %v5410
        %v5412 = vpop.xlane.xlu0 %5411
        %v5413 = vsel %vm1297, %v5307, 0.0
        %5414 = vadd.xlane.f32.xlu0 %v5413
        %v5415 = vpop.xlane.xlu0 %5414
        %v5416 = vsel %vm1297, %v5309, 0.0
        %5417 = vadd.xlane.f32.xlu0 %v5416
        %v5418 = vpop.xlane.xlu0 %5417
        %v5419 = vsel %vm1297, %v5311, 0.0
        %5420 = vadd.xlane.f32.xlu0 %v5419
        %v5421 = vpop.xlane.xlu0 %5420
        %v5422 = vsel %vm1297, %v5313, 0.0
        %5423 = vadd.xlane.f32.xlu0 %v5422
        %v5424 = vpop.xlane.xlu0 %5423
        %v5425 = vsel %vm1297, %v5315, 0.0
        %5426 = vadd.xlane.f32.xlu0 %v5425
        %v5427 = vpop.xlane.xlu0 %5426
        %v5428 = vsel %vm1297, %v5317, 0.0
        %5429 = vadd.xlane.f32.xlu0 %v5428
        %v5430 = vpop.xlane.xlu0 %5429
        %v5431 = vsel %vm1297, %v5319, 0.0
        %5432 = vadd.xlane.f32.xlu0 %v5431
        %v5433 = vpop.xlane.xlu0 %5432
        %v5434 = vsel %vm1297, %v5321, 0.0
        %5435 = vadd.xlane.f32.xlu0 %v5434
        %v5436 = vpop.xlane.xlu0 %5435
        %v5437 = vsel %vm1297, %v5323, 0.0
        %5438 = vadd.xlane.f32.xlu0 %v5437
        %v5439 = vpop.xlane.xlu0 %5438
        %v5440 = vsel %vm1297, %v5325, 0.0
        %5441 = vadd.xlane.f32.xlu0 %v5440
        %v5442 = vpop.xlane.xlu0 %5441
        %v5443 = vsel %vm1297, %v5327, 0.0
        %5444 = vadd.xlane.f32.xlu0 %v5443
        %v5445 = vpop.xlane.xlu0 %5444
        %v5446 = vsel %vm1297, %v5329, 0.0
        %5447 = vadd.xlane.f32.xlu0 %v5446
        %v5448 = vpop.xlane.xlu0 %5447
        %v5449 = vsel %vm1297, %v5331, 0.0
        %5450 = vadd.xlane.f32.xlu0 %v5449
        %v5451 = vpop.xlane.xlu0 %5450
        %v5452 = vsel %vm1297, %v5333, 0.0
        %5453 = vadd.xlane.f32.xlu0 %v5452
        %v5454 = vpop.xlane.xlu0 %5453
        %v5455 = vsel %vm1297, %v5335, 0.0
        %5456 = vadd.xlane.f32.xlu0 %v5455
        %v5457 = vpop.xlane.xlu0 %5456
        %v5458 = vsel %vm1297, %v5337, 0.0
        %5459 = vadd.xlane.f32.xlu0 %v5458
        %v5460 = vpop.xlane.xlu0 %5459
        %v5461 = vsel %vm1297, %v5339, 0.0
        %5462 = vadd.xlane.f32.xlu0 %v5461
        %v5463 = vpop.xlane.xlu0 %5462
        %v5464 = vsel %vm1297, %v5341, 0.0
        %5465 = vadd.xlane.f32.xlu0 %v5464
        %v5466 = vpop.xlane.xlu0 %5465
        %v5467 = vsel %vm1297, %v5343, 0.0
        %5468 = vadd.xlane.f32.xlu0 %v5467
        %v5469 = vpop.xlane.xlu0 %5468
        %v5470 = vsel %vm1297, %v5345, 0.0
        %5471 = vadd.xlane.f32.xlu0 %v5470
        %v5472 = vpop.xlane.xlu0 %5471
        %v5473 = vsel %vm1297, %v5347, 0.0
        %5474 = vadd.xlane.f32.xlu0 %v5473
        %v5475 = vpop.xlane.xlu0 %5474
        %5476 = vrot.lane.b32.xlu0 %v3792, 104
        %v5477 = vpop.permute.xlu0 %5476
        %5478 = vrot.lane.b32.xlu0 %v3793, 104
        %v5479 = vpop.permute.xlu0 %5478
        %5480 = vrot.lane.b32.xlu0 %v3754, 104
        %v5481 = vpop.permute.xlu0 %5480
        %5482 = vrot.lane.b32.xlu0 %v3757, 104
        %v5483 = vpop.permute.xlu0 %5482
        %v5516 = vperm.slane %v5382, %v1427
        %v5517 = vperm.slane %v5385, %v1429
        %v5518 = vsel %vm1431, %v5517, %v5516
        %v5519 = vperm.slane %v5388, %v1427
        %v5520 = vperm.slane %v5391, %v1429
        %v5521 = vsel %vm1431, %v5520, %v5519
        %v5522 = vperm.slane %v5394, %v1427
        %v5523 = vperm.slane %v5397, %v1429
        %v5524 = vsel %vm1431, %v5523, %v5522
        %v5525 = vperm.slane %v5400, %v1427
        %v5526 = vperm.slane %v5403, %v1429
        %v5527 = vsel %vm1431, %v5526, %v5525
        %v5528 = vperm.slane %v5406, %v1427
        %v5529 = vperm.slane %v5409, %v1429
        %v5530 = vsel %vm1431, %v5529, %v5528
        %v5531 = vperm.slane %v5412, %v1427
        %v5532 = vperm.slane %v5415, %v1429
        %v5533 = vsel %vm1431, %v5532, %v5531
        %v5534 = vperm.slane %v5418, %v1427
        %v5535 = vperm.slane %v5421, %v1429
        %v5536 = vsel %vm1431, %v5535, %v5534
        %v5537 = vperm.slane %v5424, %v1427
        %v5538 = vperm.slane %v5427, %v1429
        %v5539 = vsel %vm1431, %v5538, %v5537
        %v5540 = vperm.slane %v5430, %v1427
        %v5541 = vperm.slane %v5433, %v1429
        %v5542 = vsel %vm1431, %v5541, %v5540
        %v5543 = vperm.slane %v5436, %v1427
        %v5544 = vperm.slane %v5439, %v1429
        %v5545 = vsel %vm1431, %v5544, %v5543
        %v5546 = vperm.slane %v5442, %v1427
        %v5547 = vperm.slane %v5445, %v1429
        %v5548 = vsel %vm1431, %v5547, %v5546
        %v5549 = vperm.slane %v5448, %v1427
        %v5550 = vperm.slane %v5451, %v1429
        %v5551 = vsel %vm1431, %v5550, %v5549
        %v5552 = vperm.slane %v5454, %v1427
        %v5553 = vperm.slane %v5457, %v1429
        %v5554 = vsel %vm1431, %v5553, %v5552
        %v5555 = vperm.slane %v5460, %v1427
        %v5556 = vperm.slane %v5463, %v1429
        %v5557 = vsel %vm1431, %v5556, %v5555
        %v5558 = vperm.slane %v5466, %v1427
        %v5559 = vperm.slane %v5469, %v1429
        %v5560 = vsel %vm1431, %v5559, %v5558
        %v5561 = vperm.slane %v5472, %v1427
        %v5562 = vperm.slane %v5475, %v1429
        %v5563 = vsel %vm1431, %v5562, %v5561
        %v5564 = vsel %vm1478, %v5521, %v5518
        %v5565 = vsel %vm1480, %v5524, %v5564
        %v5566 = vsel %vm1482, %v5527, %v5565
        %v5567 = vsel %vm1484, %v5530, %v5566
        %v5568 = vsel %vm1486, %v5533, %v5567
        %v5569 = vsel %vm1488, %v5536, %v5568
        %v5570 = vsel %vm1490, %v5539, %v5569
        %v5571 = vsel %vm1478, %v5545, %v5542
        %v5572 = vsel %vm1480, %v5548, %v5571
        %v5573 = vsel %vm1482, %v5551, %v5572
        %v5574 = vsel %vm1484, %v5554, %v5573
        %v5575 = vsel %vm1486, %v5557, %v5574
        %v5576 = vsel %vm1488, %v5560, %v5575
        %v5577 = vsel %vm1490, %v5563, %v5576
        %v5580 = vsel %vm1297, %v5477, 0
        %v5582 = vsel %vm1297, %v5479, 0
        %v5584 = vsel %vm1297, %v5481, 0
        %v5586 = vsel %vm1297, %v5483, 0
        %5588 = vmatpush.xpose.msra.mxu0 0.0
        %5589 = vmatpush.xpose.msra.mxu0 0.0
        %5590 = vmatpush.xpose.msra.mxu0 0.0
        %5591 = vmatpush.xpose.msra.mxu0 0.0
        %5592 = vmatpush.xpose.msra.mxu0 0.0
        %5593 = vmatpush.xpose.msra.mxu0 0.0
        %5594 = vmatpush.xpose.msra.mxu0 0.0
        %5595 = vmatpush.xpose.msra.mxu0 0.0
        %5596 = vmatpush.xpose.msra.mxu0 0.0
        %5597 = vmatpush.xpose.msra.mxu0 0.0
        %5598 = vmatpush.xpose.msra.mxu0 0.0
        %5599 = vmatpush.xpose.msra.mxu0 0.0
        %5600 = vmatpush.xpose.msra.mxu0 0.0
        %5601 = vmatpush.xpose.msra.mxu0 0.0
        %5602 = vmatpush.xpose.msra.mxu0 %v5586
        %5603 = vmatpush.xpose.msra.mxu0 %v5584
        %5604 = vmatmul.f32.gmra.mxu0 %v5580
        %v5605 = vpop.f32.mrf.mxu0
        %v5606 = vadd.f32 %v5570, %v5605
        %5607 = vmatmul.f32.gmra.mxu0 %v5582
        %v5608 = vpop.f32.mrf.mxu0
        %v5609 = vadd.f32 %v5577, %v5608
        %5610 = vdwg.mxu0
        %v5611 = vsel %vm1534, %v5606, -inf
        %5612 = vmax.xlane.f32.xlu0 %v5611
        %v5613 = vpop.xlane.xlu0 %5612
        %v5614 = vsel %vm1534, %v5609, -inf
        %5615 = vmax.xlane.f32.xlu0 %v5614
        %v5616 = vpop.xlane.xlu0 %5615
        %v5617 = vsub.f32 %v5606, %v5613
        %v5618 = vsub.f32 %v5609, %v5616
        %v5619 = vmul.f32 %v5617, 1.442695
        %v5620 = vpow.pop %v5619
        %v5621 = vmul.f32 %v5618, 1.442695
        %v5622 = vpow.pop %v5621
        %v5623 = vsel %vm1534, %v5620, 0.0
        %5624 = vadd.xlane.f32.xlu0 %v5623
        %v5625 = vpop.xlane.xlu0 %5624
        %v5626 = vsel %vm1534, %v5622, 0.0
        %5627 = vadd.xlane.f32.xlu0 %v5626
        %v5628 = vpop.xlane.xlu0 %5627
        %v5629 = vrcp.pop %v5625
        %v5630 = vmul.f32 %v5625, %v5629
        %v5631 = vsub.f32 1.0, %v5630
        %v5632 = vmul.f32 %v5629, %v5631
        %v5633 = vadd.f32 %v5629, %v5632
        %vm5634 = vweird.f32 %v5625
        %vm5635 = vweird.f32 %v5629
        %vm5636 = vmor %vm5634, %vm5635
        %v5637 = vsel %vm5636, %v5629, %v5633
        %v5638 = vand.u32 2147483647, %v5625
        %vm5639 = vcmp.eq.f32.partialorder %v5638, 8.507059e+37
        %v5640 = vand.u32 %v5625, 2147483648
        %v5641 = vor.u32 1.1754944e-38, %v5640
        %v5642 = vsel %vm5639, %v5641, %v5637
        %v5643 = vmul.f32 %v5620, %v5642
        %v5644 = vrcp.pop %v5628
        %v5645 = vmul.f32 %v5628, %v5644
        %v5646 = vsub.f32 1.0, %v5645
        %v5647 = vmul.f32 %v5644, %v5646
        %v5648 = vadd.f32 %v5644, %v5647
        %vm5649 = vweird.f32 %v5628
        %vm5650 = vweird.f32 %v5644
        %vm5651 = vmor %vm5649, %vm5650
        %v5652 = vsel %vm5651, %v5644, %v5648
        %v5653 = vand.u32 2147483647, %v5628
        %vm5654 = vcmp.eq.f32.partialorder %v5653, 8.507059e+37
        %v5655 = vand.u32 %v5628, 2147483648
        %v5656 = vor.u32 1.1754944e-38, %v5655
        %v5657 = vsel %vm5654, %v5656, %v5652
        %v5658 = vmul.f32 %v5622, %v5657
        %5659 = vrot.lane.b32.xlu0 %v3787, 104
        %v5660 = vpop.permute.xlu0 %5659
        %5661 = vrot.lane.b32.xlu0 %v3790, 104
        %v5662 = vpop.permute.xlu0 %5661
        %v5666 = vsel %vm1534, %v5643, 0
        %v5669 = vsel %vm1534, %v5658, 0
        %5671 = vmatpush.msra.mxu0 0.0
        %5672 = vmatpush.msra.mxu0 0.0
        %5673 = vmatpush.msra.mxu0 0.0
        %5674 = vmatpush.msra.mxu0 0.0
        %5675 = vmatpush.msra.mxu0 0.0
        %5676 = vmatpush.msra.mxu0 0.0
        %5677 = vmatpush.msra.mxu0 0.0
        %5678 = vmatpush.msra.mxu0 0.0
        %5679 = vmatpush.msra.mxu0 0.0
        %5680 = vmatpush.msra.mxu0 0.0
        %5681 = vmatpush.msra.mxu0 0.0
        %5682 = vmatpush.msra.mxu0 0.0
        %5683 = vmatpush.msra.mxu0 0.0
        %5684 = vmatpush.msra.mxu0 0.0
        %5685 = vmatpush.msra.mxu0 %v5662
        %5686 = vmatpush.msra.mxu0 %v5660
        %5687 = vmatmul.f32.gmra.mxu0 %v5666
        %v5688 = vpop.f32.mrf.mxu0
        %v5689 = vadd.f32 0.0, %v5688
        %5690 = vmatmul.f32.gmra.mxu0 %v5669
        %v5691 = vpop.f32.mrf.mxu0
        %v5692 = vadd.f32 0.0, %v5691
        %5693 = vdwg.mxu0
        %v5695 = vsel %vm1297, %v5689, 0
        %v5698 = vsel %vm1297, %v5692, 0
        %5700 = vmatpush.msra.mxu0 0.0
        %5701 = vmatpush.msra.mxu0 0.0
        %5702 = vmatpush.msra.mxu0 0.0
        %5703 = vmatpush.msra.mxu0 0.0
        %5704 = vmatpush.msra.mxu0 0.0
        %5705 = vmatpush.msra.mxu0 0.0
        %5706 = vmatpush.msra.mxu0 0.0
        %5707 = vmatpush.msra.mxu0 0.0
        %5708 = vmatpush.msra.mxu0 0.0
        %5709 = vmatpush.msra.mxu0 0.0
        %5710 = vmatpush.msra.mxu0 0.0
        %5711 = vmatpush.msra.mxu0 0.0
        %5712 = vmatpush.msra.mxu0 0.0
        %5713 = vmatpush.msra.mxu0 0.0
        %5714 = vmatpush.msra.mxu0 0.0
        %5715 = vmatpush.msra.mxu0 %v3798
        %5716 = vmatmul.f32.gmra.mxu0 %v5695
        %v5717 = vpop.f32.mrf.mxu0
        %v5718 = vadd.f32 0.0, %v5717
        %5719 = vmatmul.f32.gmra.mxu0 %v5698
        %v5720 = vpop.f32.mrf.mxu0
        %v5721 = vadd.f32 0.0, %v5720
        %5722 = vdwg.mxu0
        %v5723 = vadd.f32 %v5218, %v5718
        %v5724 = vadd.f32 %v5219, %v5721
        %s5725 = scalar_lea.vmem %s33, 1
        %v5726 = vld [vmem:[%s5725] sm:$0x1]
        %v5728 = vperm.slane %v5726, 0
        %v5730 = vadd.f32 %v5723, %v5728
        %v5731 = vadd.f32 %v5724, %v5728
        %v5732 = vadd.f32 %v5730, %v3627
        %v5733 = vadd.f32 %v5731, %v3628
        %s5734 = scalar_lea.vmem %s35, 1
        %v5735 = vld [vmem:[%s5734] sm:$0x1]
        %s5736 = scalar_lea.vmem %s37, 1
        %v5737 = vld [vmem:[%s5736] sm:$0x1]
        %v5738 = vsel %vm979, %v5732, 0.0
        %5739 = vadd.xlane.f32.xlu0 %v5738
        %v5740 = vpop.xlane.xlu0 %5739
        %v5741 = vsel %vm979, %v5733, 0.0
        %5742 = vadd.xlane.f32.xlu0 %v5741
        %v5743 = vpop.xlane.xlu0 %5742
        %v5744 = vmul.f32 %v5740, %v1063
        %v5745 = vmul.f32 %v5743, %v1063
        %v5746 = vsub.f32 %v5732, %v5744
        %v5747 = vsub.f32 %v5733, %v5745
        %v5748 = vmul.f32 %v5746, %v5746
        %v5749 = vmul.f32 %v5747, %v5747
        %v5750 = vsel %vm979, %v5748, 0.0
        %5751 = vadd.xlane.f32.xlu0 %v5750
        %v5752 = vpop.xlane.xlu0 %5751
        %v5753 = vsel %vm979, %v5749, 0.0
        %5754 = vadd.xlane.f32.xlu0 %v5753
        %v5755 = vpop.xlane.xlu0 %5754
        %v5756 = vmul.f32 %v5752, %v1063
        %v5757 = vmul.f32 %v5755, %v1063
        %v5758 = vadd.f32 %v5756, 1e-05
        %v5759 = vadd.f32 %v5757, 1e-05
        %v5760 = vrsqrt.pop %v5758
        %v5761 = vmul.f32 %v5760, %v5758
        %v5762 = vmul.f32 %v5761, %v5760
        %v5763 = vmul.f32 0.5, %v5762
        %v5764 = vsub.f32 1.5, %v5763
        %v5765 = vmul.f32 %v5760, %v5764
        %vm5766 = vweird.f32 %v5758
        %vm5767 = vweird.f32 %v5760
        %vm5768 = vmor %vm5766, %vm5767
        %v5769 = vsel %vm5768, %v5760, %v5765
        %v5770 = vrsqrt.pop %v5759
        %v5771 = vmul.f32 %v5770, %v5759
        %v5772 = vmul.f32 %v5771, %v5770
        %v5773 = vmul.f32 0.5, %v5772
        %v5774 = vsub.f32 1.5, %v5773
        %v5775 = vmul.f32 %v5770, %v5774
        %vm5776 = vweird.f32 %v5759
        %vm5777 = vweird.f32 %v5770
        %vm5778 = vmor %vm5776, %vm5777
        %v5779 = vsel %vm5778, %v5770, %v5775
        %v5780 = vmul.f32 %v5746, %v5769
        %v5781 = vmul.f32 %v5747, %v5779
        %v5783 = vperm.slane %v5735, 0
        %v5785 = vmul.f32 %v5780, %v5783
        %v5786 = vmul.f32 %v5781, %v5783
        %v5788 = vperm.slane %v5737, 0
        %v5790 = vadd.f32 %v5785, %v5788
        %v5791 = vadd.f32 %v5786, %v5788
        %s5792 = scalar_lea.vmem %s39, 32
        %v5793 = vld [vmem:[%s5792] sm:$0xff]
        %v5794 = vld [vmem:[%s5792 + $0x8] sm:$0xff]
        %v5795 = vld [vmem:[%s5792 + $0x10] sm:$0xff]
        %v5796 = vld [vmem:[%s5792 + $0x18] sm:$0xff]
        %s5797 = scalar_lea.vmem %s41, 1
        %v5798 = vld [vmem:[%s5797] sm:$0x1]
        %v5800 = vperm.slane %v5798, 0
        %v5803 = vsel %vm979, %v5790, 0
        %v5806 = vsel %vm979, %v5791, 0
        %5808 = vmatpush.msra.mxu0 0.0
        %5809 = vmatpush.msra.mxu0 0.0
        %5810 = vmatpush.msra.mxu0 0.0
        %5811 = vmatpush.msra.mxu0 0.0
        %5812 = vmatpush.msra.mxu0 0.0
        %5813 = vmatpush.msra.mxu0 0.0
        %5814 = vmatpush.msra.mxu0 0.0
        %5815 = vmatpush.msra.mxu0 0.0
        %5816 = vmatpush.msra.mxu0 0.0
        %5817 = vmatpush.msra.mxu0 0.0
        %5818 = vmatpush.msra.mxu0 0.0
        %5819 = vmatpush.msra.mxu0 0.0
        %5820 = vmatpush.msra.mxu0 %v5796
        %5821 = vmatpush.msra.mxu0 %v5795
        %5822 = vmatpush.msra.mxu0 %v5794
        %5823 = vmatpush.msra.mxu0 %v5793
        %5824 = vmatmul.f32.gmra.mxu0 %v5803
        %v5825 = vpop.f32.mrf.mxu0
        %v5826 = vadd.f32 %v5800, %v5825
        %5827 = vmatmul.f32.gmra.mxu0 %v5806
        %v5828 = vpop.f32.mrf.mxu0
        %v5829 = vadd.f32 %v5800, %v5828
        %5830 = vdwg.mxu0
        %s5831 = sld [smem:[#allocation2 + $0x5]]
        %vm5832 = vcmp.ge.f32.partialorder %v5826, 0.0
        %vm5833 = vcmp.ge.f32.partialorder %v5829, 0.0
        %v5834 = vstv %s5831
        %v5835 = vmul.f32 %v5834, %v5826
        %v5836 = vmul.f32 %v5834, %v5829
        %v5837 = vsel %vm5832, %v5826, %v5835
        %v5838 = vsel %vm5833, %v5829, %v5836
        %s5839 = scalar_lea.vmem %s43, 64
        %v5840 = vld [vmem:[%s5839] sm:$0xff]
        %v5841 = vld [vmem:[%s5839 + $0x8] sm:$0xff]
        %v5842 = vld [vmem:[%s5839 + $0x10] sm:$0xff]
        %v5843 = vld [vmem:[%s5839 + $0x18] sm:$0xff]
        %v5844 = vld [vmem:[%s5839 + $0x20] sm:$0xff]
        %v5845 = vld [vmem:[%s5839 + $0x28] sm:$0xff]
        %v5846 = vld [vmem:[%s5839 + $0x30] sm:$0xff]
        %v5847 = vld [vmem:[%s5839 + $0x38] sm:$0xff]
        %s5848 = scalar_lea.vmem %s45, 1
        %v5849 = vld [vmem:[%s5848] sm:$0x1]
        %v5851 = vperm.slane %v5849, 0
        %v5854 = vsel %vm3597, %v5837, 0
        %v5857 = vsel %vm3597, %v5838, 0
        %5859 = vmatpush.msra.mxu0 0.0
        %5860 = vmatpush.msra.mxu0 0.0
        %5861 = vmatpush.msra.mxu0 0.0
        %5862 = vmatpush.msra.mxu0 0.0
        %5863 = vmatpush.msra.mxu0 0.0
        %5864 = vmatpush.msra.mxu0 0.0
        %5865 = vmatpush.msra.mxu0 0.0
        %5866 = vmatpush.msra.mxu0 0.0
        %5867 = vmatpush.msra.mxu0 %v5847
        %5868 = vmatpush.msra.mxu0 %v5846
        %5869 = vmatpush.msra.mxu0 %v5845
        %5870 = vmatpush.msra.mxu0 %v5844
        %5871 = vmatpush.msra.mxu0 %v5843
        %5872 = vmatpush.msra.mxu0 %v5842
        %5873 = vmatpush.msra.mxu0 %v5841
        %5874 = vmatpush.msra.mxu0 %v5840
        %5875 = vmatmul.f32.gmra.mxu0 %v5854
        %v5876 = vpop.f32.mrf.mxu0
        %v5877 = vadd.f32 %v5851, %v5876
        %5878 = vmatmul.f32.gmra.mxu0 %v5857
        %v5879 = vpop.f32.mrf.mxu0
        %v5880 = vadd.f32 %v5851, %v5879
        %5881 = vdwg.mxu0
        %v5882 = vadd.f32 %v5877, %v5732
        %v5883 = vadd.f32 %v5880, %v5733
        %v5884 = vld [vmem:[%s47] sm:$0x1]
        %v5885 = vld [vmem:[%s49] sm:$0x1]
        %v5886 = vsel %vm979, %v5882, 0.0
        %5887 = vadd.xlane.f32.xlu0 %v5886
        %v5888 = vpop.xlane.xlu0 %5887
        %v5889 = vsel %vm979, %v5883, 0.0
        %5890 = vadd.xlane.f32.xlu0 %v5889
        %v5891 = vpop.xlane.xlu0 %5890
        %v5892 = vmul.f32 %v5888, %v1063
        %v5893 = vmul.f32 %v5891, %v1063
        %v5894 = vsub.f32 %v5882, %v5892
        %v5895 = vsub.f32 %v5883, %v5893
        %v5896 = vmul.f32 %v5894, %v5894
        %v5897 = vmul.f32 %v5895, %v5895
        %v5898 = vsel %vm979, %v5896, 0.0
        %5899 = vadd.xlane.f32.xlu0 %v5898
        %v5900 = vpop.xlane.xlu0 %5899
        %v5901 = vsel %vm979, %v5897, 0.0
        %5902 = vadd.xlane.f32.xlu0 %v5901
        %v5903 = vpop.xlane.xlu0 %5902
        %v5904 = vmul.f32 %v5900, %v1063
        %v5905 = vmul.f32 %v5903, %v1063
        %v5906 = vadd.f32 %v5904, 1e-05
        %v5907 = vadd.f32 %v5905, 1e-05
        %v5908 = vrsqrt.pop %v5906
        %v5909 = vmul.f32 %v5908, %v5906
        %v5910 = vmul.f32 %v5909, %v5908
        %v5911 = vmul.f32 0.5, %v5910
        %v5912 = vsub.f32 1.5, %v5911
        %v5913 = vmul.f32 %v5908, %v5912
        %vm5914 = vweird.f32 %v5906
        %vm5915 = vweird.f32 %v5908
        %vm5916 = vmor %vm5914, %vm5915
        %v5917 = vsel %vm5916, %v5908, %v5913
        %v5918 = vrsqrt.pop %v5907
        %v5919 = vmul.f32 %v5918, %v5907
        %v5920 = vmul.f32 %v5919, %v5918
        %v5921 = vmul.f32 0.5, %v5920
        %v5922 = vsub.f32 1.5, %v5921
        %v5923 = vmul.f32 %v5918, %v5922
        %vm5924 = vweird.f32 %v5907
        %vm5925 = vweird.f32 %v5918
        %vm5926 = vmor %vm5924, %vm5925
        %v5927 = vsel %vm5926, %v5918, %v5923
        %v5928 = vmul.f32 %v5894, %v5917
        %v5929 = vmul.f32 %v5895, %v5927
        %v5931 = vperm.slane %v5884, 0
        %v5933 = vmul.f32 %v5928, %v5931
        %v5934 = vmul.f32 %v5929, %v5931
        %v5936 = vperm.slane %v5885, 0
        %v5938 = vadd.f32 %v5933, %v5936
        %v5939 = vadd.f32 %v5934, %v5936
        %v5940 = vld [vmem:[%s51] sm:$0xff]
        %v5941 = vld [vmem:[%s51 + $0x8] sm:$0xff]
        %v5942 = vld [vmem:[%s51 + $0x10] sm:$0xff]
        %v5943 = vld [vmem:[%s51 + $0x18] sm:$0xff]
        %v5944 = vld [vmem:[%s53] sm:$0x1]
        %v5946 = vperm.slane %v5944, 0
        %v5949 = vsel %vm979, %v5938, 0
        %v5952 = vsel %vm979, %v5939, 0
        %5954 = vmatpush.msra.mxu0 0.0
        %5955 = vmatpush.msra.mxu0 0.0
        %5956 = vmatpush.msra.mxu0 0.0
        %5957 = vmatpush.msra.mxu0 0.0
        %5958 = vmatpush.msra.mxu0 0.0
        %5959 = vmatpush.msra.mxu0 0.0
        %5960 = vmatpush.msra.mxu0 0.0
        %5961 = vmatpush.msra.mxu0 0.0
        %5962 = vmatpush.msra.mxu0 0.0
        %5963 = vmatpush.msra.mxu0 0.0
        %5964 = vmatpush.msra.mxu0 0.0
        %5965 = vmatpush.msra.mxu0 0.0
        %5966 = vmatpush.msra.mxu0 %v5943
        %5967 = vmatpush.msra.mxu0 %v5942
        %5968 = vmatpush.msra.mxu0 %v5941
        %5969 = vmatpush.msra.mxu0 %v5940
        %5970 = vmatmul.f32.gmra.mxu0 %v5949
        %v5971 = vpop.f32.mrf.mxu0
        %v5972 = vadd.f32 %v5946, %v5971
        %5973 = vmatmul.f32.gmra.mxu0 %v5952
        %v5974 = vpop.f32.mrf.mxu0
        %v5975 = vadd.f32 %v5946, %v5974
        %5976 = vdwg.mxu0
        %s5977 = sld [smem:[#allocation2 + $0x3]]
        %vm5978 = vcmp.ge.f32.partialorder %v5972, 0.0
        %vm5979 = vcmp.ge.f32.partialorder %v5975, 0.0
        %v5980 = vstv %s5977
        %v5981 = vmul.f32 %v5980, %v5972
        %v5982 = vmul.f32 %v5980, %v5975
        %v5983 = vsel %vm5978, %v5972, %v5981
        %v5984 = vsel %vm5979, %v5975, %v5982
        %v5985 = vld [vmem:[%s55] sm:$0xff]
        %v5986 = vld [vmem:[%s55 + $0x8] sm:$0xff]
        %v5987 = vld [vmem:[%s55 + $0x10] sm:$0xff]
        %v5988 = vld [vmem:[%s55 + $0x18] sm:$0xff]
        %v5989 = vld [vmem:[%s57] sm:$0x1]
        %v5991 = vperm.slane %v5989, 0
        %v5994 = vsel %vm979, %v5983, 0
        %v5997 = vsel %vm979, %v5984, 0
        %5999 = vmatpush.msra.mxu0 0.0
        %6000 = vmatpush.msra.mxu0 0.0
        %6001 = vmatpush.msra.mxu0 0.0
        %6002 = vmatpush.msra.mxu0 0.0
        %6003 = vmatpush.msra.mxu0 0.0
        %6004 = vmatpush.msra.mxu0 0.0
        %6005 = vmatpush.msra.mxu0 0.0
        %6006 = vmatpush.msra.mxu0 0.0
        %6007 = vmatpush.msra.mxu0 0.0
        %6008 = vmatpush.msra.mxu0 0.0
        %6009 = vmatpush.msra.mxu0 0.0
        %6010 = vmatpush.msra.mxu0 0.0
        %6011 = vmatpush.msra.mxu0 %v5988
        %6012 = vmatpush.msra.mxu0 %v5987
        %6013 = vmatpush.msra.mxu0 %v5986
        %6014 = vmatpush.msra.mxu0 %v5985
        %6015 = vmatmul.f32.gmra.mxu0 %v5994
        %v6016 = vpop.f32.mrf.mxu0
        %v6017 = vadd.f32 %v5991, %v6016
        %6018 = vmatmul.f32.gmra.mxu0 %v5997
        %v6019 = vpop.f32.mrf.mxu0
        %v6020 = vadd.f32 %v5991, %v6019
        %6021 = vdwg.mxu0
        %vm6022 = vcmp.ge.s32.totalorder %v1427, 12
        %v6023 = vxor.u32 %v6017, 2147483648
        %v6024 = vxor.u32 %v6020, 2147483648
        %v6025 = vmul.f32 %v6023, 1.442695
        %v6026 = vpow.pop %v6025
        %v6027 = vmul.f32 %v6024, 1.442695
        %v6028 = vpow.pop %v6027
        %v6029 = vadd.f32 %v6026, 1.0
        %v6030 = vadd.f32 %v6028, 1.0
        %v6031 = vrcp.pop %v6029
        %v6032 = vmul.f32 %v6029, %v6031
        %v6033 = vsub.f32 1.0, %v6032
        %v6034 = vmul.f32 %v6031, %v6033
        %v6035 = vadd.f32 %v6031, %v6034
        %vm6036 = vweird.f32 %v6029
        %vm6037 = vweird.f32 %v6031
        %vm6038 = vmor %vm6036, %vm6037
        %v6039 = vsel %vm6038, %v6031, %v6035
        %v6040 = vand.u32 2147483647, %v6029
        %vm6041 = vcmp.eq.f32.partialorder %v6040, 8.507059e+37
        %v6042 = vand.u32 %v6029, 2147483648
        %v6043 = vor.u32 1.1754944e-38, %v6042
        %v6044 = vsel %vm6041, %v6043, %v6039
        %v6045 = vmul.f32 1.0, %v6044
        %v6046 = vrcp.pop %v6030
        %v6047 = vmul.f32 %v6030, %v6046
        %v6048 = vsub.f32 1.0, %v6047
        %v6049 = vmul.f32 %v6046, %v6048
        %v6050 = vadd.f32 %v6046, %v6049
        %vm6051 = vweird.f32 %v6030
        %vm6052 = vweird.f32 %v6046
        %vm6053 = vmor %vm6051, %vm6052
        %v6054 = vsel %vm6053, %v6046, %v6050
        %v6055 = vand.u32 2147483647, %v6030
        %vm6056 = vcmp.eq.f32.partialorder %v6055, 8.507059e+37
        %v6057 = vand.u32 %v6030, 2147483648
        %v6058 = vor.u32 1.1754944e-38, %v6057
        %v6059 = vsel %vm6056, %v6058, %v6054
        %v6060 = vmul.f32 1.0, %v6059
        %v6061 = vsel %vm6022, %v6045, %v6017
        %v6062 = vsel %vm6022, %v6060, %v6020
        %6063 = vst.msk [vmem:[%s918] sm:$0xff] %vm1534, %v6061
        %6064 = vst.msk [vmem:[%s918 + $0x8] sm:$0xff] %vm1534, %v6062
        %s6065 = smul.u32 2, %s71
        %p6066 = scmp.lt.s32.totalorder %s6065, 3
        %s6067 = scalar_select %p6066, %s6065, 3
        %s6068 = smul.addr %s6067, 8
        %s6069 = scalar_lea.vmem %s59, %s6068
        // Predicated region
        $region141: #{fwd.1} parent=135 // pred_check
          %p6070 = pneg %p703
        $region142: #{fwd.1} parent=135 // pred_check_branch
          %6072 = sbr.rel (%p6070) target = $region144
        $region143: #{fwd.1} parent=135 // pred_region
          %s6073 = smul.u32 2, %s71
        $region144: #{fwd.1} parent=135 // pred_fallthru
          _
      $region136: #{fwd.1} parent=5 // pred_fallthru
        _
      %p6074 = scmp.le.s32.totalorder 2, %s66
      // Predicated region
      $region145: #{fwd.1} parent=5 // pred_check
        %p6075 = pneg %p6074
      $region146: #{fwd.1} parent=5 // pred_check_branch
        %6077 = sbr.rel (%p6075) target = $region148
      $region147: #{fwd.1} parent=5 // pred_region
        %s6078 = ssub.s32 %s66, 2
        // Predicated region
        $region149: #{fwd.1} parent=147 // pred_check
          %p6079 = pneg %p709
        $region150: #{fwd.1} parent=147 // pred_check_branch
          %6081 = sbr.rel (%p6079) target = $region152
        $region151: #{fwd.1} parent=147 // pred_region
          %s6082 = smul.u32 2, %s72
          %p6083 = scmp.lt.s32.totalorder %s6082, 3
          %s6084 = scalar_select %p6083, %s6082, 3
          %s6085 = smul.addr %s6084, 8
          %s6086 = scalar_lea.vmem %s59, %s6085
        $region152: #{fwd.1} parent=147 // pred_fallthru
          _
      $region148: #{fwd.1} parent=5 // pred_fallthru
        _
    $region6: #{fwd.1} parent=1 // loop_footer
      %s70 = sadd.s32 1, %s66
    $region7: #{fwd.1} parent=1 // loop_footer_branch
      %65 = sbr.rel target = $region3
    $region8: #{fwd.1} parent=1 // loop_exit
      _
    %6087 = vsyncpa [#allocation3], 1
    %s6088 = scalar_lea.sflag [#allocation3], 1
    %6089 = vsyncpa %s6088, 1

</llo_original>
